<compile_context>
chip_gen: v7x
topology: tpu7x:2x2x1
jax: 0.10.0
libtpu: 0.0.40
codegen_flags: <defaults>
</compile_context>

<pallas_src>
import jax
import jax.numpy as jnp
import numpy as np
from jax.experimental import pallas as pl
from jax.experimental.pallas import tpu as pltpu

EPS = 1e-5


# ----------------------------------------------------------------------------
# Weight preparation: fold kw taps + W zero-padding into a banded matrix.
#   B[kd*3+kh, wi*Cin+ci, wo*Cout+co] = W[kd, kh, kw, ci, co]  with kw = wi - wo + 1
#   (entries with |wi - wo| > 1 are zero, which also implements the W-border padding).
# ----------------------------------------------------------------------------
def _banded_weight(w_full, W):
    # w_full: (3, 3, 3, Cin, Cout) in (kd, kh, kw, ci, co) order (DHWIO).
    Cin, Cout = w_full.shape[3], w_full.shape[4]
    wo = np.arange(W)[:, None]
    wi = np.arange(W)[None, :]
    sel = wi - wo + 1                                  # required kw for (wo, wi)
    mask = np.stack([(sel == kw) for kw in range(3)], 0).astype(np.float32)  # (3, W, W)
    # out[kd, kh, wi, ci, wo, co] = sum_kw mask[kw, wo, wi] * w[kd, kh, kw, ci, co]
    B = jnp.einsum("koi,dekcf->deicof", mask, w_full)
    return B.reshape(9, W * Cin, W * Cout)


# ----------------------------------------------------------------------------
# Conv3d (3x3x3, pad=1, no bias) kernel with optional fused input affine+ReLU
# (= previous layer's BatchNorm+ReLU) and fused BN-statistics outputs.
# ----------------------------------------------------------------------------
def _make_conv_kernel(D, H, WC_in, WC_out, apply_in_affine):
    def kernel(x_ref, w_ref, sc_ref, bi_ref, y_ref, st_ref):
        # x_ref : (1, D, H, WC_in)   whole batch element, resident across the d axis
        # w_ref : (9, WC_in, WC_out) banded weights (bf16), resident
        # sc/bi : (1, WC_in)         per-lane affine for fused input BN (ignored if unused)
        # y_ref : (1, 1, H, WC_out)  conv output slab for depth d (f32, lane dense)
        # st_ref: (1, 1, 8, WC_out)  row0 = per-lane sum, row1 = per-lane sum-of-squares
        d = pl.program_id(1)

        if apply_in_affine:
            s = sc_ref[...].reshape(1, WC_in)
            b = bi_ref[...].reshape(1, WC_in)

        zrow = jnp.zeros((1, WC_in), jnp.float32)

        def load_slab(kd):
            # depth slab x[:, d+kd-1, :, :] with zero outside [0, D)
            dz = d + kd - 1
            dd = jnp.clip(dz, 0, D - 1)
            S = x_ref[0, pl.ds(dd, 1), :, :].reshape(H, WC_in).astype(jnp.float32)
            if apply_in_affine:
                # fused BatchNorm(affine) + ReLU of the previous block, applied on load
                S = jnp.maximum(S * s + b, 0.0)
            valid = jnp.logical_and(dz >= 0, dz < D)
            return jnp.where(valid, S, 0.0)          # zero halo AFTER the affine

        def shift_rows(S, kh):
            # row h of the tap slab must be input row h + kh - 1, zero outside [0, H)
            if kh == 0:
                return jnp.concatenate([zrow, S[:H - 1, :]], axis=0)
            if kh == 2:
                return jnp.concatenate([S[1:, :], zrow], axis=0)
            return S

        acc = jnp.zeros((H, WC_out), jnp.float32)
        for kd in range(3):
            S = load_slab(kd)
            for kh in range(3):
                xs = shift_rows(S, kh).astype(jnp.bfloat16)
                acc = acc + jnp.dot(xs, w_ref[kd * 3 + kh],
                                    preferred_element_type=jnp.float32)

        y_ref[...] = acc.reshape(1, 1, H, WC_out)

        st = jnp.concatenate(
            [jnp.sum(acc, axis=0, keepdims=True),
             jnp.sum(acc * acc, axis=0, keepdims=True),
             jnp.zeros((6, WC_out), jnp.float32)],
            axis=0)
        st_ref[...] = st.reshape(1, 1, 8, WC_out)

    return kernel


def _conv_pallas(x, w_banded, in_scale, in_bias, *, apply_in_affine):
    """x: (N, D, H, W*Cin) f32 ; w_banded: (9, W*Cin, W*Cout) bf16."""
    N, D, H, WC_in = x.shape
    WC_out = w_banded.shape[-1]
    kernel = _make_conv_kernel(D, H, WC_in, WC_out, apply_in_affine)
    y, stats = pl.pallas_call(
        kernel,
        out_shape=(
            jax.ShapeDtypeStruct((N, D, H, WC_out), jnp.float32),
            jax.ShapeDtypeStruct((N, D, 8, WC_out), jnp.float32),
        ),
        grid=(N, D),
        in_specs=[
            pl.BlockSpec((1, D, H, WC_in), lambda n, d: (n, 0, 0, 0)),
            pl.BlockSpec((9, WC_in, WC_out), lambda n, d: (0, 0, 0)),
            pl.BlockSpec((1, WC_in), lambda n, d: (0, 0)),
            pl.BlockSpec((1, WC_in), lambda n, d: (0, 0)),
        ],
        out_specs=(
            pl.BlockSpec((1, 1, H, WC_out), lambda n, d: (n, d, 0, 0)),
            pl.BlockSpec((1, 1, 8, WC_out), lambda n, d: (n, d, 0, 0)),
        ),
        compiler_params=pltpu.CompilerParams(
            dimension_semantics=("parallel", "parallel")),
    )(x, w_banded, in_scale, in_bias)
    return y, stats


# ----------------------------------------------------------------------------
# Final fused BatchNorm(affine) + ReLU, lane-dense 2-D slabs.
# ----------------------------------------------------------------------------
def _bn_relu_kernel(y_ref, scale_ref, bias_ref, o_ref):
    s = scale_ref[...].reshape(1, 1, -1)
    b = bias_ref[...].reshape(1, 1, -1)
    o_ref[...] = jnp.maximum(y_ref[...] * s + b, 0.0)


def _bn_relu_pallas(y, scale, bias):
    """y: (N, M, L) with L a multiple of 128; scale/bias: (1, L)."""
    N, M, L = y.shape
    return pl.pallas_call(
        _bn_relu_kernel,
        out_shape=jax.ShapeDtypeStruct((N, M, L), jnp.float32),
        grid=(N,),
        in_specs=[
            pl.BlockSpec((1, M, L), lambda n: (n, 0, 0)),
            pl.BlockSpec((1, L), lambda n: (0, 0)),
            pl.BlockSpec((1, L), lambda n: (0, 0)),
        ],
        out_specs=pl.BlockSpec((1, M, L), lambda n: (n, 0, 0)),
        compiler_params=pltpu.CompilerParams(dimension_semantics=("parallel",)),
    )(y, scale, bias)


# ----------------------------------------------------------------------------
# BatchNorm folding from the fused per-lane statistics (single pass: sum & sumsq).
# ----------------------------------------------------------------------------
def _bn_fold(stats, gamma, beta, W, count):
    C = gamma.shape[0]
    s = jnp.sum(stats[:, :, 0, :], axis=(0, 1)).reshape(W, C).sum(axis=0)
    ss = jnp.sum(stats[:, :, 1, :], axis=(0, 1)).reshape(W, C).sum(axis=0)
    mean = s / count
    var = ss / count - mean * mean           # biased variance (training-mode BN), f32
    scale = gamma * jax.lax.rsqrt(var + EPS)
    bias = beta - mean * scale
    # tile per-channel params to the (w, c) lane layout: lane index = w*C + c
    scale_l = jnp.tile(scale, W).reshape(1, W * C)
    bias_l = jnp.tile(bias, W).reshape(1, W * C)
    return scale_l, bias_l


# ----------------------------------------------------------------------------
# Full decoder-block forward (NCDHW API boundary, like PyTorch).
# ----------------------------------------------------------------------------
def decoder_block_forward(x_ncdhw, skip_ncdhw, params):
    x = jnp.transpose(x_ncdhw, (0, 2, 3, 4, 1)).astype(jnp.float32)   # NDHWC
    # F.interpolate(scale_factor=(1,2,2), mode='nearest')
    x = jnp.repeat(jnp.repeat(x, 2, axis=2), 2, axis=3)
    if skip_ncdhw is not None:
        skip = jnp.transpose(skip_ncdhw, (0, 2, 3, 4, 1)).astype(jnp.float32)
        x = jnp.concatenate([x, skip], axis=-1)

    N, D, H, W, C1 = x.shape
    Cout = params["g1"].shape[0]
    count = N * D * H * W

    x2d = x.reshape(N, D, H, W * C1)                   # lane-dense (W*C) layout
    wb1 = _banded_weight(params["w1"], W).astype(jnp.bfloat16)
    wb2 = _banded_weight(params["w2"], W).astype(jnp.bfloat16)

    one = jnp.ones((1, W * C1), jnp.float32)
    zero = jnp.zeros((1, W * C1), jnp.float32)

    # conv1 (+ fused BN1 statistics)
    y1, st1 = _conv_pallas(x2d, wb1, one, zero, apply_in_affine=False)
    sc1, bi1 = _bn_fold(st1, params["g1"], params["b1"], W, count)
    # conv2 with BN1+ReLU fused into its input read (+ fused BN2 statistics)
    y2, st2 = _conv_pallas(y1, wb2, sc1, bi1, apply_in_affine=True)
    sc2, bi2 = _bn_fold(st2, params["g2"], params["b2"], W, count)
    # final BN2 + ReLU, lane-dense elementwise
    out = _bn_relu_pallas(y2.reshape(N, D * H, W * Cout), sc2, bi2)

    out = out.reshape(N, D, H, W, Cout)
    return jnp.transpose(out, (0, 4, 1, 2, 3))         # back to NCDHW


# ----------------------------------------------------------------------------
# Pure-JAX f32 reference (for correctness check).
# ----------------------------------------------------------------------------
def _reference(x_ncdhw, skip_ncdhw, params):
    x = jnp.transpose(x_ncdhw, (0, 2, 3, 4, 1)).astype(jnp.float32)
    x = jnp.repeat(jnp.repeat(x, 2, axis=2), 2, axis=3)
    skip = jnp.transpose(skip_ncdhw, (0, 2, 3, 4, 1)).astype(jnp.float32)
    x = jnp.concatenate([x, skip], axis=-1)

    def block(inp, w, g, b):
        y = jax.lax.conv_general_dilated(
            inp, w, window_strides=(1, 1, 1),
            padding=((1, 1), (1, 1), (1, 1)),
            dimension_numbers=("NDHWC", "DHWIO", "NDHWC"))
        m = jnp.mean(y, axis=(0, 1, 2, 3))
        v = jnp.mean(jnp.square(y - m), axis=(0, 1, 2, 3))
        return jnp.maximum((y - m) / jnp.sqrt(v + EPS) * g + b, 0.0)

    x = block(x, params["w1"], params["g1"], params["b1"])
    x = block(x, params["w2"], params["g2"], params["b2"])
    return jnp.transpose(x, (0, 4, 1, 2, 3))


# ----------------------------------------------------------------------------
if __name__ == "__main__":
    # Module config: in_channel=4, skip_channel=4, out_channel=8
    IN_C, SKIP_C, OUT_C = 4, 4, 8
    N, D, H0, W0 = 2, 4, 8, 8          # x is half-resolution in H, W relative to skip

    key = jax.random.PRNGKey(0)
    k_x, k_s, k_w1, k_w2, k_g1, k_b1, k_g2, k_b2 = jax.random.split(key, 8)

    x = jax.random.normal(k_x, (N, IN_C, D, H0, W0), jnp.float32)            # NCDHW
    skip = jax.random.normal(k_s, (N, SKIP_C, D, 2 * H0, 2 * W0), jnp.float32)

    c1_in = IN_C + SKIP_C
    # Conv weights in DHWIO layout (kd, kh, kw, ci, co).
    params = {
        "w1": 0.1 * jax.random.normal(k_w1, (3, 3, 3, c1_in, OUT_C), jnp.float32),
        "w2": 0.1 * jax.random.normal(k_w2, (3, 3, 3, OUT_C, OUT_C), jnp.float32),
        "g1": 1.0 + 0.1 * jax.random.normal(k_g1, (OUT_C,), jnp.float32),
        "b1": 0.1 * jax.random.normal(k_b1, (OUT_C,), jnp.float32),
        "g2": 1.0 + 0.1 * jax.random.normal(k_g2, (OUT_C,), jnp.float32),
        "b2": 0.1 * jax.random.normal(k_b2, (OUT_C,), jnp.float32),
    }

    fwd = jax.jit(decoder_block_forward)
    out = jax.block_until_ready(fwd(x, skip, params))

    ref = jax.block_until_ready(_reference(x, skip, params))
    # bf16 MXU path in the Pallas kernels -> loosened tolerance vs the f32 reference.
    np.testing.assert_allclose(np.asarray(out), np.asarray(ref), atol=1e-1, rtol=1e-1)
    assert out.shape == (N, OUT_C, D, 2 * H0, 2 * W0)

    print("KERNEL_OK")
</pallas_src>

<mosaic_0001>
module attributes {stable_mosaic.version = 11 : i64} {
  func.func @kernel(%arg0: i32, %arg1: i32, %arg2: memref<1x4x16x128xf32, #tpu.memory_space<vmem>>, %arg3: memref<9x128x128xbf16, #tpu.memory_space<vmem>>, %arg4: memref<1x128xf32, #tpu.memory_space<vmem>>, %arg5: memref<1x128xf32, #tpu.memory_space<vmem>>, %arg6: memref<1x1x16x128xf32, #tpu.memory_space<vmem>>, %arg7: memref<1x1x8x128xf32, #tpu.memory_space<vmem>>) attributes {dimension_semantics = [#tpu.dimension_semantics<parallel>, #tpu.dimension_semantics<parallel>], iteration_bounds = array<i64: 2, 4>, scalar_prefetch = 0 : i64, scratch_operands = 0 : i64, tpu.core_type = #tpu.core_type<tc>, window_params = [{transform_indices = @transform_0, window_bounds = array<i64: 1, 4, 16, 128>}, {pipeline_mode = #tpu.pipeline_mode<synchronous>, transform_indices = @transform_1, window_bounds = array<i64: 9, 128, 128>}, {pipeline_mode = #tpu.pipeline_mode<synchronous>, transform_indices = @transform_2, window_bounds = array<i64: 1, 128>}, {pipeline_mode = #tpu.pipeline_mode<synchronous>, transform_indices = @transform_3, window_bounds = array<i64: 1, 128>}, {transform_indices = @transform_4, window_bounds = array<i64: 1, 1, 16, 128>}, {transform_indices = @transform_5, window_bounds = array<i64: 1, 1, 8, 128>}]} {
    %cst = arith.constant 0.000000e+00 : f32
    %0 = vector.broadcast %cst : f32 to vector<1x128xf32>
    %cst_0 = arith.constant 0.000000e+00 : f32
    %1 = vector.broadcast %cst_0 : f32 to vector<16x128xf32>
    %c0_i32 = arith.constant 0 : i32
    %2 = arith.addi %arg1, %c0_i32 : i32
    %c1_i32 = arith.constant 1 : i32
    %3 = arith.subi %2, %c1_i32 : i32
    %c0_i32_1 = arith.constant 0 : i32
    %c3_i32 = arith.constant 3 : i32
    %4 = arith.maxsi %c0_i32_1, %3 : i32
    %5 = arith.minsi %c3_i32, %4 : i32
    %c0 = arith.constant 0 : index
    %6 = arith.index_cast %5 : i32 to index
    %c0_2 = arith.constant 0 : index
    %c0_3 = arith.constant 0 : index
    %7 = vector.load %arg2[%c0, %6, %c0_2, %c0_3] : memref<1x4x16x128xf32, #tpu.memory_space<vmem>>, vector<1x1x16x128xf32>
    %8 = vector.shape_cast %7 : vector<1x1x16x128xf32> to vector<1x16x128xf32>
    %9 = vector.shape_cast %8 : vector<1x16x128xf32> to vector<16x128xf32>
    %c0_i32_4 = arith.constant 0 : i32
    %10 = arith.cmpi sge, %3, %c0_i32_4 : i32
    %c4_i32 = arith.constant 4 : i32
    %11 = arith.cmpi slt, %3, %c4_i32 : i32
    %12 = arith.andi %10, %11 : i1
    %cst_5 = arith.constant 0.000000e+00 : f32
    %13 = vector.broadcast %cst_5 : f32 to vector<16x128xf32>
    %14 = arith.select %12, %9, %13 : vector<16x128xf32>
    %15 = vector.extract_strided_slice %14 {offsets = [0, 0], sizes = [15, 128], strides = [1, 1]} : vector<16x128xf32> to vector<15x128xf32>
    %16 = tpu.concatenate %0, %15 in 0 : vector<1x128xf32>, vector<15x128xf32> -> vector<16x128xf32>
    %17 = arith.truncf %16 : vector<16x128xf32> to vector<16x128xbf16>
    %c0_6 = arith.constant 0 : index
    %c0_7 = arith.constant 0 : index
    %c0_8 = arith.constant 0 : index
    %18 = vector.load %arg3[%c0_6, %c0_7, %c0_8] : memref<9x128x128xbf16, #tpu.memory_space<vmem>>, vector<1x128x128xbf16>
    %19 = vector.shape_cast %18 : vector<1x128x128xbf16> to vector<128x128xbf16>
    %cst_9 = arith.constant dense<0.000000e+00> : vector<16x128xf32>
    %20 = tpu.matmul %17, %19, %cst_9 {dimension_numbers = #tpu.dot_dimension_numbers<[1], [0], [0], [1], [0, 0, 1, 1], [], []>} : vector<16x128xbf16>, vector<128x128xbf16>, vector<16x128xf32> -> vector<16x128xf32>
    %21 = arith.addf %1, %20 : vector<16x128xf32>
    %22 = arith.truncf %14 : vector<16x128xf32> to vector<16x128xbf16>
    %c1 = arith.constant 1 : index
    %c0_10 = arith.constant 0 : index
    %c0_11 = arith.constant 0 : index
    %23 = vector.load %arg3[%c1, %c0_10, %c0_11] : memref<9x128x128xbf16, #tpu.memory_space<vmem>>, vector<1x128x128xbf16>
    %24 = vector.shape_cast %23 : vector<1x128x128xbf16> to vector<128x128xbf16>
    %cst_12 = arith.constant dense<0.000000e+00> : vector<16x128xf32>
    %25 = tpu.matmul %22, %24, %cst_12 {dimension_numbers = #tpu.dot_dimension_numbers<[1], [0], [0], [1], [0, 0, 1, 1], [], []>} : vector<16x128xbf16>, vector<128x128xbf16>, vector<16x128xf32> -> vector<16x128xf32>
    %26 = arith.addf %21, %25 : vector<16x128xf32>
    %27 = vector.extract_strided_slice %14 {offsets = [1, 0], sizes = [15, 128], strides = [1, 1]} : vector<16x128xf32> to vector<15x128xf32>
    %28 = tpu.concatenate %27, %0 in 0 : vector<15x128xf32>, vector<1x128xf32> -> vector<16x128xf32>
    %29 = arith.truncf %28 : vector<16x128xf32> to vector<16x128xbf16>
    %c2 = arith.constant 2 : index
    %c0_13 = arith.constant 0 : index
    %c0_14 = arith.constant 0 : index
    %30 = vector.load %arg3[%c2, %c0_13, %c0_14] : memref<9x128x128xbf16, #tpu.memory_space<vmem>>, vector<1x128x128xbf16>
    %31 = vector.shape_cast %30 : vector<1x128x128xbf16> to vector<128x128xbf16>
    %cst_15 = arith.constant dense<0.000000e+00> : vector<16x128xf32>
    %32 = tpu.matmul %29, %31, %cst_15 {dimension_numbers = #tpu.dot_dimension_numbers<[1], [0], [0], [1], [0, 0, 1, 1], [], []>} : vector<16x128xbf16>, vector<128x128xbf16>, vector<16x128xf32> -> vector<16x128xf32>
    %33 = arith.addf %26, %32 : vector<16x128xf32>
    %c1_i32_16 = arith.constant 1 : i32
    %34 = arith.addi %arg1, %c1_i32_16 : i32
    %c1_i32_17 = arith.constant 1 : i32
    %35 = arith.subi %34, %c1_i32_17 : i32
    %c0_i32_18 = arith.constant 0 : i32
    %c3_i32_19 = arith.constant 3 : i32
    %36 = arith.maxsi %c0_i32_18, %35 : i32
    %37 = arith.minsi %c3_i32_19, %36 : i32
    %c0_20 = arith.constant 0 : index
    %38 = arith.index_cast %37 : i32 to index
    %c0_21 = arith.constant 0 : index
    %c0_22 = arith.constant 0 : index
    %39 = vector.load %arg2[%c0_20, %38, %c0_21, %c0_22] : memref<1x4x16x128xf32, #tpu.memory_space<vmem>>, vector<1x1x16x128xf32>
    %40 = vector.shape_cast %39 : vector<1x1x16x128xf32> to vector<1x16x128xf32>
    %41 = vector.shape_cast %40 : vector<1x16x128xf32> to vector<16x128xf32>
    %c0_i32_23 = arith.constant 0 : i32
    %42 = arith.cmpi sge, %35, %c0_i32_23 : i32
    %c4_i32_24 = arith.constant 4 : i32
    %43 = arith.cmpi slt, %35, %c4_i32_24 : i32
    %44 = arith.andi %42, %43 : i1
    %cst_25 = arith.constant 0.000000e+00 : f32
    %45 = vector.broadcast %cst_25 : f32 to vector<16x128xf32>
    %46 = arith.select %44, %41, %45 : vector<16x128xf32>
    %47 = vector.extract_strided_slice %46 {offsets = [0, 0], sizes = [15, 128], strides = [1, 1]} : vector<16x128xf32> to vector<15x128xf32>
    %48 = tpu.concatenate %0, %47 in 0 : vector<1x128xf32>, vector<15x128xf32> -> vector<16x128xf32>
    %49 = arith.truncf %48 : vector<16x128xf32> to vector<16x128xbf16>
    %c3 = arith.constant 3 : index
    %c0_26 = arith.constant 0 : index
    %c0_27 = arith.constant 0 : index
    %50 = vector.load %arg3[%c3, %c0_26, %c0_27] : memref<9x128x128xbf16, #tpu.memory_space<vmem>>, vector<1x128x128xbf16>
    %51 = vector.shape_cast %50 : vector<1x128x128xbf16> to vector<128x128xbf16>
    %cst_28 = arith.constant dense<0.000000e+00> : vector<16x128xf32>
    %52 = tpu.matmul %49, %51, %cst_28 {dimension_numbers = #tpu.dot_dimension_numbers<[1], [0], [0], [1], [0, 0, 1, 1], [], []>} : vector<16x128xbf16>, vector<128x128xbf16>, vector<16x128xf32> -> vector<16x128xf32>
    %53 = arith.addf %33, %52 : vector<16x128xf32>
    %54 = arith.truncf %46 : vector<16x128xf32> to vector<16x128xbf16>
    %c4 = arith.constant 4 : index
    %c0_29 = arith.constant 0 : index
    %c0_30 = arith.constant 0 : index
    %55 = vector.load %arg3[%c4, %c0_29, %c0_30] : memref<9x128x128xbf16, #tpu.memory_space<vmem>>, vector<1x128x128xbf16>
    %56 = vector.shape_cast %55 : vector<1x128x128xbf16> to vector<128x128xbf16>
    %cst_31 = arith.constant dense<0.000000e+00> : vector<16x128xf32>
    %57 = tpu.matmul %54, %56, %cst_31 {dimension_numbers = #tpu.dot_dimension_numbers<[1], [0], [0], [1], [0, 0, 1, 1], [], []>} : vector<16x128xbf16>, vector<128x128xbf16>, vector<16x128xf32> -> vector<16x128xf32>
    %58 = arith.addf %53, %57 : vector<16x128xf32>
    %59 = vector.extract_strided_slice %46 {offsets = [1, 0], sizes = [15, 128], strides = [1, 1]} : vector<16x128xf32> to vector<15x128xf32>
    %60 = tpu.concatenate %59, %0 in 0 : vector<15x128xf32>, vector<1x128xf32> -> vector<16x128xf32>
    %61 = arith.truncf %60 : vector<16x128xf32> to vector<16x128xbf16>
    %c5 = arith.constant 5 : index
    %c0_32 = arith.constant 0 : index
    %c0_33 = arith.constant 0 : index
    %62 = vector.load %arg3[%c5, %c0_32, %c0_33] : memref<9x128x128xbf16, #tpu.memory_space<vmem>>, vector<1x128x128xbf16>
    %63 = vector.shape_cast %62 : vector<1x128x128xbf16> to vector<128x128xbf16>
    %cst_34 = arith.constant dense<0.000000e+00> : vector<16x128xf32>
    %64 = tpu.matmul %61, %63, %cst_34 {dimension_numbers = #tpu.dot_dimension_numbers<[1], [0], [0], [1], [0, 0, 1, 1], [], []>} : vector<16x128xbf16>, vector<128x128xbf16>, vector<16x128xf32> -> vector<16x128xf32>
    %65 = arith.addf %58, %64 : vector<16x128xf32>
    %c2_i32 = arith.constant 2 : i32
    %66 = arith.addi %arg1, %c2_i32 : i32
    %c1_i32_35 = arith.constant 1 : i32
    %67 = arith.subi %66, %c1_i32_35 : i32
    %c0_i32_36 = arith.constant 0 : i32
    %c3_i32_37 = arith.constant 3 : i32
    %68 = arith.maxsi %c0_i32_36, %67 : i32
    %69 = arith.minsi %c3_i32_37, %68 : i32
    %c0_38 = arith.constant 0 : index
    %70 = arith.index_cast %69 : i32 to index
    %c0_39 = arith.constant 0 : index
    %c0_40 = arith.constant 0 : index
    %71 = vector.load %arg2[%c0_38, %70, %c0_39, %c0_40] : memref<1x4x16x128xf32, #tpu.memory_space<vmem>>, vector<1x1x16x128xf32>
    %72 = vector.shape_cast %71 : vector<1x1x16x128xf32> to vector<1x16x128xf32>
    %73 = vector.shape_cast %72 : vector<1x16x128xf32> to vector<16x128xf32>
    %c0_i32_41 = arith.constant 0 : i32
    %74 = arith.cmpi sge, %67, %c0_i32_41 : i32
    %c4_i32_42 = arith.constant 4 : i32
    %75 = arith.cmpi slt, %67, %c4_i32_42 : i32
    %76 = arith.andi %74, %75 : i1
    %cst_43 = arith.constant 0.000000e+00 : f32
    %77 = vector.broadcast %cst_43 : f32 to vector<16x128xf32>
    %78 = arith.select %76, %73, %77 : vector<16x128xf32>
    %79 = vector.extract_strided_slice %78 {offsets = [0, 0], sizes = [15, 128], strides = [1, 1]} : vector<16x128xf32> to vector<15x128xf32>
    %80 = tpu.concatenate %0, %79 in 0 : vector<1x128xf32>, vector<15x128xf32> -> vector<16x128xf32>
    %81 = arith.truncf %80 : vector<16x128xf32> to vector<16x128xbf16>
    %c6 = arith.constant 6 : index
    %c0_44 = arith.constant 0 : index
    %c0_45 = arith.constant 0 : index
    %82 = vector.load %arg3[%c6, %c0_44, %c0_45] : memref<9x128x128xbf16, #tpu.memory_space<vmem>>, vector<1x128x128xbf16>
    %83 = vector.shape_cast %82 : vector<1x128x128xbf16> to vector<128x128xbf16>
    %cst_46 = arith.constant dense<0.000000e+00> : vector<16x128xf32>
    %84 = tpu.matmul %81, %83, %cst_46 {dimension_numbers = #tpu.dot_dimension_numbers<[1], [0], [0], [1], [0, 0, 1, 1], [], []>} : vector<16x128xbf16>, vector<128x128xbf16>, vector<16x128xf32> -> vector<16x128xf32>
    %85 = arith.addf %65, %84 : vector<16x128xf32>
    %86 = arith.truncf %78 : vector<16x128xf32> to vector<16x128xbf16>
    %c7 = arith.constant 7 : index
    %c0_47 = arith.constant 0 : index
    %c0_48 = arith.constant 0 : index
    %87 = vector.load %arg3[%c7, %c0_47, %c0_48] : memref<9x128x128xbf16, #tpu.memory_space<vmem>>, vector<1x128x128xbf16>
    %88 = vector.shape_cast %87 : vector<1x128x128xbf16> to vector<128x128xbf16>
    %cst_49 = arith.constant dense<0.000000e+00> : vector<16x128xf32>
    %89 = tpu.matmul %86, %88, %cst_49 {dimension_numbers = #tpu.dot_dimension_numbers<[1], [0], [0], [1], [0, 0, 1, 1], [], []>} : vector<16x128xbf16>, vector<128x128xbf16>, vector<16x128xf32> -> vector<16x128xf32>
    %90 = arith.addf %85, %89 : vector<16x128xf32>
    %91 = vector.extract_strided_slice %78 {offsets = [1, 0], sizes = [15, 128], strides = [1, 1]} : vector<16x128xf32> to vector<15x128xf32>
    %92 = tpu.concatenate %91, %0 in 0 : vector<15x128xf32>, vector<1x128xf32> -> vector<16x128xf32>
    %93 = arith.truncf %92 : vector<16x128xf32> to vector<16x128xbf16>
    %c8 = arith.constant 8 : index
    %c0_50 = arith.constant 0 : index
    %c0_51 = arith.constant 0 : index
    %94 = vector.load %arg3[%c8, %c0_50, %c0_51] : memref<9x128x128xbf16, #tpu.memory_space<vmem>>, vector<1x128x128xbf16>
    %95 = vector.shape_cast %94 : vector<1x128x128xbf16> to vector<128x128xbf16>
    %cst_52 = arith.constant dense<0.000000e+00> : vector<16x128xf32>
    %96 = tpu.matmul %93, %95, %cst_52 {dimension_numbers = #tpu.dot_dimension_numbers<[1], [0], [0], [1], [0, 0, 1, 1], [], []>} : vector<16x128xbf16>, vector<128x128xbf16>, vector<16x128xf32> -> vector<16x128xf32>
    %97 = arith.addf %90, %96 : vector<16x128xf32>
    %98 = vector.shape_cast %97 : vector<16x128xf32> to vector<1x1x16x128xf32>
    %c0_53 = arith.constant 0 : index
    %c0_54 = arith.constant 0 : index
    %c0_55 = arith.constant 0 : index
    %c0_56 = arith.constant 0 : index
    %99 = vector.load %arg6[%c0_53, %c0_54, %c0_55, %c0_56] : memref<1x1x16x128xf32, #tpu.memory_space<vmem>>, vector<1x1x16x128xf32>
    tpu.vector_store %arg6[%c0_53, %c0_54, %c0_55, %c0_56], %98 {strides = array<i32>} : memref<1x1x16x128xf32, #tpu.memory_space<vmem>>, vector<1x1x16x128xf32>,
    %cst_57 = arith.constant dense<0.000000e+00> : vector<128xf32>
    %100 = vector.multi_reduction <add>, %97, %cst_57 [0] : vector<16x128xf32> to vector<128xf32>
    %101 = vector.shape_cast %100 : vector<128xf32> to vector<1x128xf32>
    %102 = arith.mulf %97, %97 : vector<16x128xf32>
    %cst_58 = arith.constant dense<0.000000e+00> : vector<128xf32>
    %103 = vector.multi_reduction <add>, %102, %cst_58 [0] : vector<16x128xf32> to vector<128xf32>
    %104 = vector.shape_cast %103 : vector<128xf32> to vector<1x128xf32>
    %cst_59 = arith.constant 0.000000e+00 : f32
    %105 = vector.broadcast %cst_59 : f32 to vector<6x128xf32>
    %106 = tpu.concatenate %101, %104, %105 in 0 : vector<1x128xf32>, vector<1x128xf32>, vector<6x128xf32> -> vector<8x128xf32>
    %107 = vector.shape_cast %106 : vector<8x128xf32> to vector<1x1x8x128xf32>
    %c0_60 = arith.constant 0 : index
    %c0_61 = arith.constant 0 : index
    %c0_62 = arith.constant 0 : index
    %c0_63 = arith.constant 0 : index
    %108 = vector.load %arg7[%c0_60, %c0_61, %c0_62, %c0_63] : memref<1x1x8x128xf32, #tpu.memory_space<vmem>>, vector<1x1x8x128xf32>
    tpu.vector_store %arg7[%c0_60, %c0_61, %c0_62, %c0_63], %107 {strides = array<i32>} : memref<1x1x8x128xf32, #tpu.memory_space<vmem>>, vector<1x1x8x128xf32>,
    return
  }
  func.func @transform_0(%arg0: i32, %arg1: i32) -> (i32, i32, i32, i32) {
    %c0_i32 = arith.constant 0 : i32
    %c0_i32_0 = arith.constant 0 : i32
    %c0_i32_1 = arith.constant 0 : i32
    %c0_i32_2 = arith.constant 0 : i32
    return %arg0, %c0_i32, %c0_i32_0, %c0_i32_1 : i32, i32, i32, i32
  }
  func.func @transform_1(%arg0: i32, %arg1: i32) -> (i32, i32, i32) {
    %c0_i32 = arith.constant 0 : i32
    %c0_i32_0 = arith.constant 0 : i32
    %c0_i32_1 = arith.constant 0 : i32
    %c0_i32_2 = arith.constant 0 : i32
    return %c0_i32, %c0_i32_0, %c0_i32_1 : i32, i32, i32
  }
  func.func @transform_2(%arg0: i32, %arg1: i32) -> (i32, i32) {
    %c0_i32 = arith.constant 0 : i32
    %c0_i32_0 = arith.constant 0 : i32
    %c0_i32_1 = arith.constant 0 : i32
    return %c0_i32, %c0_i32_0 : i32, i32
  }
  func.func @transform_3(%arg0: i32, %arg1: i32) -> (i32, i32) {
    %c0_i32 = arith.constant 0 : i32
    %c0_i32_0 = arith.constant 0 : i32
    %c0_i32_1 = arith.constant 0 : i32
    return %c0_i32, %c0_i32_0 : i32, i32
  }
  func.func @transform_4(%arg0: i32, %arg1: i32) -> (i32, i32, i32, i32) {
    %c0_i32 = arith.constant 0 : i32
    %c0_i32_0 = arith.constant 0 : i32
    %c0_i32_1 = arith.constant 0 : i32
    return %arg0, %arg1, %c0_i32, %c0_i32_0 : i32, i32, i32, i32
  }
  func.func @transform_5(%arg0: i32, %arg1: i32) -> (i32, i32, i32, i32) {
    %c0_i32 = arith.constant 0 : i32
    %c0_i32_0 = arith.constant 0 : i32
    %c0_i32_1 = arith.constant 0 : i32
    return %arg0, %arg1, %c0_i32, %c0_i32_0 : i32, i32, i32, i32
  }
}

module attributes {stable_mosaic.version = 11 : i64} {
  func.func @kernel(%arg0: i32, %arg1: i32, %arg2: memref<1x4x16x128xf32, #tpu.memory_space<vmem>>, %arg3: memref<9x128x128xbf16, #tpu.memory_space<vmem>>, %arg4: memref<1x128xf32, #tpu.memory_space<vmem>>, %arg5: memref<1x128xf32, #tpu.memory_space<vmem>>, %arg6: memref<1x1x16x128xf32, #tpu.memory_space<vmem>>, %arg7: memref<1x1x8x128xf32, #tpu.memory_space<vmem>>) attributes {dimension_semantics = [#tpu.dimension_semantics<parallel>, #tpu.dimension_semantics<parallel>], iteration_bounds = array<i64: 2, 4>, scalar_prefetch = 0 : i64, scratch_operands = 0 : i64, tpu.core_type = #tpu.core_type<tc>, window_params = [{transform_indices = @transform_0, window_bounds = array<i64: 1, 4, 16, 128>}, {pipeline_mode = #tpu.pipeline_mode<synchronous>, transform_indices = @transform_1, window_bounds = array<i64: 9, 128, 128>}, {pipeline_mode = #tpu.pipeline_mode<synchronous>, transform_indices = @transform_2, window_bounds = array<i64: 1, 128>}, {pipeline_mode = #tpu.pipeline_mode<synchronous>, transform_indices = @transform_3, window_bounds = array<i64: 1, 128>}, {transform_indices = @transform_4, window_bounds = array<i64: 1, 1, 16, 128>}, {transform_indices = @transform_5, window_bounds = array<i64: 1, 1, 8, 128>}]} {
    %c0 = arith.constant 0 : index
    %c0_0 = arith.constant 0 : index
    %0 = vector.load %arg4[%c0, %c0_0] : memref<1x128xf32, #tpu.memory_space<vmem>>, vector<1x128xf32>
    %c0_1 = arith.constant 0 : index
    %c0_2 = arith.constant 0 : index
    %1 = vector.load %arg5[%c0_1, %c0_2] : memref<1x128xf32, #tpu.memory_space<vmem>>, vector<1x128xf32>
    %cst = arith.constant 0.000000e+00 : f32
    %2 = vector.broadcast %cst : f32 to vector<1x128xf32>
    %cst_3 = arith.constant 0.000000e+00 : f32
    %3 = vector.broadcast %cst_3 : f32 to vector<16x128xf32>
    %c0_i32 = arith.constant 0 : i32
    %4 = arith.addi %arg1, %c0_i32 : i32
    %c1_i32 = arith.constant 1 : i32
    %5 = arith.subi %4, %c1_i32 : i32
    %c0_i32_4 = arith.constant 0 : i32
    %c3_i32 = arith.constant 3 : i32
    %6 = arith.maxsi %c0_i32_4, %5 : i32
    %7 = arith.minsi %c3_i32, %6 : i32
    %c0_5 = arith.constant 0 : index
    %8 = arith.index_cast %7 : i32 to index
    %c0_6 = arith.constant 0 : index
    %c0_7 = arith.constant 0 : index
    %9 = vector.load %arg2[%c0_5, %8, %c0_6, %c0_7] : memref<1x4x16x128xf32, #tpu.memory_space<vmem>>, vector<1x1x16x128xf32>
    %10 = vector.shape_cast %9 : vector<1x1x16x128xf32> to vector<1x16x128xf32>
    %11 = vector.shape_cast %10 : vector<1x16x128xf32> to vector<16x128xf32>
    %12 = vector.broadcast %0 : vector<1x128xf32> to vector<16x128xf32>
    %13 = arith.mulf %11, %12 : vector<16x128xf32>
    %14 = vector.broadcast %1 : vector<1x128xf32> to vector<16x128xf32>
    %15 = arith.addf %13, %14 : vector<16x128xf32>
    %cst_8 = arith.constant 0.000000e+00 : f32
    %16 = vector.broadcast %cst_8 : f32 to vector<16x128xf32>
    %17 = arith.maximumf %15, %16 : vector<16x128xf32>
    %c0_i32_9 = arith.constant 0 : i32
    %18 = arith.cmpi sge, %5, %c0_i32_9 : i32
    %c4_i32 = arith.constant 4 : i32
    %19 = arith.cmpi slt, %5, %c4_i32 : i32
    %20 = arith.andi %18, %19 : i1
    %cst_10 = arith.constant 0.000000e+00 : f32
    %21 = vector.broadcast %cst_10 : f32 to vector<16x128xf32>
    %22 = arith.select %20, %17, %21 : vector<16x128xf32>
    %23 = vector.extract_strided_slice %22 {offsets = [0, 0], sizes = [15, 128], strides = [1, 1]} : vector<16x128xf32> to vector<15x128xf32>
    %24 = tpu.concatenate %2, %23 in 0 : vector<1x128xf32>, vector<15x128xf32> -> vector<16x128xf32>
    %25 = arith.truncf %24 : vector<16x128xf32> to vector<16x128xbf16>
    %c0_11 = arith.constant 0 : index
    %c0_12 = arith.constant 0 : index
    %c0_13 = arith.constant 0 : index
    %26 = vector.load %arg3[%c0_11, %c0_12, %c0_13] : memref<9x128x128xbf16, #tpu.memory_space<vmem>>, vector<1x128x128xbf16>
    %27 = vector.shape_cast %26 : vector<1x128x128xbf16> to vector<128x128xbf16>
    %cst_14 = arith.constant dense<0.000000e+00> : vector<16x128xf32>
    %28 = tpu.matmul %25, %27, %cst_14 {dimension_numbers = #tpu.dot_dimension_numbers<[1], [0], [0], [1], [0, 0, 1, 1], [], []>} : vector<16x128xbf16>, vector<128x128xbf16>, vector<16x128xf32> -> vector<16x128xf32>
    %29 = arith.addf %3, %28 : vector<16x128xf32>
    %30 = arith.truncf %22 : vector<16x128xf32> to vector<16x128xbf16>
    %c1 = arith.constant 1 : index
    %c0_15 = arith.constant 0 : index
    %c0_16 = arith.constant 0 : index
    %31 = vector.load %arg3[%c1, %c0_15, %c0_16] : memref<9x128x128xbf16, #tpu.memory_space<vmem>>, vector<1x128x128xbf16>
    %32 = vector.shape_cast %31 : vector<1x128x128xbf16> to vector<128x128xbf16>
    %cst_17 = arith.constant dense<0.000000e+00> : vector<16x128xf32>
    %33 = tpu.matmul %30, %32, %cst_17 {dimension_numbers = #tpu.dot_dimension_numbers<[1], [0], [0], [1], [0, 0, 1, 1], [], []>} : vector<16x128xbf16>, vector<128x128xbf16>, vector<16x128xf32> -> vector<16x128xf32>
    %34 = arith.addf %29, %33 : vector<16x128xf32>
    %35 = vector.extract_strided_slice %22 {offsets = [1, 0], sizes = [15, 128], strides = [1, 1]} : vector<16x128xf32> to vector<15x128xf32>
    %36 = tpu.concatenate %35, %2 in 0 : vector<15x128xf32>, vector<1x128xf32> -> vector<16x128xf32>
    %37 = arith.truncf %36 : vector<16x128xf32> to vector<16x128xbf16>
    %c2 = arith.constant 2 : index
    %c0_18 = arith.constant 0 : index
    %c0_19 = arith.constant 0 : index
    %38 = vector.load %arg3[%c2, %c0_18, %c0_19] : memref<9x128x128xbf16, #tpu.memory_space<vmem>>, vector<1x128x128xbf16>
    %39 = vector.shape_cast %38 : vector<1x128x128xbf16> to vector<128x128xbf16>
    %cst_20 = arith.constant dense<0.000000e+00> : vector<16x128xf32>
    %40 = tpu.matmul %37, %39, %cst_20 {dimension_numbers = #tpu.dot_dimension_numbers<[1], [0], [0], [1], [0, 0, 1, 1], [], []>} : vector<16x128xbf16>, vector<128x128xbf16>, vector<16x128xf32> -> vector<16x128xf32>
    %41 = arith.addf %34, %40 : vector<16x128xf32>
    %c1_i32_21 = arith.constant 1 : i32
    %42 = arith.addi %arg1, %c1_i32_21 : i32
    %c1_i32_22 = arith.constant 1 : i32
    %43 = arith.subi %42, %c1_i32_22 : i32
    %c0_i32_23 = arith.constant 0 : i32
    %c3_i32_24 = arith.constant 3 : i32
    %44 = arith.maxsi %c0_i32_23, %43 : i32
    %45 = arith.minsi %c3_i32_24, %44 : i32
    %c0_25 = arith.constant 0 : index
    %46 = arith.index_cast %45 : i32 to index
    %c0_26 = arith.constant 0 : index
    %c0_27 = arith.constant 0 : index
    %47 = vector.load %arg2[%c0_25, %46, %c0_26, %c0_27] : memref<1x4x16x128xf32, #tpu.memory_space<vmem>>, vector<1x1x16x128xf32>
    %48 = vector.shape_cast %47 : vector<1x1x16x128xf32> to vector<1x16x128xf32>
    %49 = vector.shape_cast %48 : vector<1x16x128xf32> to vector<16x128xf32>
    %50 = vector.broadcast %0 : vector<1x128xf32> to vector<16x128xf32>
    %51 = arith.mulf %49, %50 : vector<16x128xf32>
    %52 = vector.broadcast %1 : vector<1x128xf32> to vector<16x128xf32>
    %53 = arith.addf %51, %52 : vector<16x128xf32>
    %cst_28 = arith.constant 0.000000e+00 : f32
    %54 = vector.broadcast %cst_28 : f32 to vector<16x128xf32>
    %55 = arith.maximumf %53, %54 : vector<16x128xf32>
    %c0_i32_29 = arith.constant 0 : i32
    %56 = arith.cmpi sge, %43, %c0_i32_29 : i32
    %c4_i32_30 = arith.constant 4 : i32
    %57 = arith.cmpi slt, %43, %c4_i32_30 : i32
    %58 = arith.andi %56, %57 : i1
    %cst_31 = arith.constant 0.000000e+00 : f32
    %59 = vector.broadcast %cst_31 : f32 to vector<16x128xf32>
    %60 = arith.select %58, %55, %59 : vector<16x128xf32>
    %61 = vector.extract_strided_slice %60 {offsets = [0, 0], sizes = [15, 128], strides = [1, 1]} : vector<16x128xf32> to vector<15x128xf32>
    %62 = tpu.concatenate %2, %61 in 0 : vector<1x128xf32>, vector<15x128xf32> -> vector<16x128xf32>
    %63 = arith.truncf %62 : vector<16x128xf32> to vector<16x128xbf16>
    %c3 = arith.constant 3 : index
    %c0_32 = arith.constant 0 : index
    %c0_33 = arith.constant 0 : index
    %64 = vector.load %arg3[%c3, %c0_32, %c0_33] : memref<9x128x128xbf16, #tpu.memory_space<vmem>>, vector<1x128x128xbf16>
    %65 = vector.shape_cast %64 : vector<1x128x128xbf16> to vector<128x128xbf16>
    %cst_34 = arith.constant dense<0.000000e+00> : vector<16x128xf32>
    %66 = tpu.matmul %63, %65, %cst_34 {dimension_numbers = #tpu.dot_dimension_numbers<[1], [0], [0], [1], [0, 0, 1, 1], [], []>} : vector<16x128xbf16>, vector<128x128xbf16>, vector<16x128xf32> -> vector<16x128xf32>
    %67 = arith.addf %41, %66 : vector<16x128xf32>
    %68 = arith.truncf %60 : vector<16x128xf32> to vector<16x128xbf16>
    %c4 = arith.constant 4 : index
    %c0_35 = arith.constant 0 : index
    %c0_36 = arith.constant 0 : index
    %69 = vector.load %arg3[%c4, %c0_35, %c0_36] : memref<9x128x128xbf16, #tpu.memory_space<vmem>>, vector<1x128x128xbf16>
    %70 = vector.shape_cast %69 : vector<1x128x128xbf16> to vector<128x128xbf16>
    %cst_37 = arith.constant dense<0.000000e+00> : vector<16x128xf32>
    %71 = tpu.matmul %68, %70, %cst_37 {dimension_numbers = #tpu.dot_dimension_numbers<[1], [0], [0], [1], [0, 0, 1, 1], [], []>} : vector<16x128xbf16>, vector<128x128xbf16>, vector<16x128xf32> -> vector<16x128xf32>
    %72 = arith.addf %67, %71 : vector<16x128xf32>
    %73 = vector.extract_strided_slice %60 {offsets = [1, 0], sizes = [15, 128], strides = [1, 1]} : vector<16x128xf32> to vector<15x128xf32>
    %74 = tpu.concatenate %73, %2 in 0 : vector<15x128xf32>, vector<1x128xf32> -> vector<16x128xf32>
    %75 = arith.truncf %74 : vector<16x128xf32> to vector<16x128xbf16>
    %c5 = arith.constant 5 : index
    %c0_38 = arith.constant 0 : index
    %c0_39 = arith.constant 0 : index
    %76 = vector.load %arg3[%c5, %c0_38, %c0_39] : memref<9x128x128xbf16, #tpu.memory_space<vmem>>, vector<1x128x128xbf16>
    %77 = vector.shape_cast %76 : vector<1x128x128xbf16> to vector<128x128xbf16>
    %cst_40 = arith.constant dense<0.000000e+00> : vector<16x128xf32>
    %78 = tpu.matmul %75, %77, %cst_40 {dimension_numbers = #tpu.dot_dimension_numbers<[1], [0], [0], [1], [0, 0, 1, 1], [], []>} : vector<16x128xbf16>, vector<128x128xbf16>, vector<16x128xf32> -> vector<16x128xf32>
    %79 = arith.addf %72, %78 : vector<16x128xf32>
    %c2_i32 = arith.constant 2 : i32
    %80 = arith.addi %arg1, %c2_i32 : i32
    %c1_i32_41 = arith.constant 1 : i32
    %81 = arith.subi %80, %c1_i32_41 : i32
    %c0_i32_42 = arith.constant 0 : i32
    %c3_i32_43 = arith.constant 3 : i32
    %82 = arith.maxsi %c0_i32_42, %81 : i32
    %83 = arith.minsi %c3_i32_43, %82 : i32
    %c0_44 = arith.constant 0 : index
    %84 = arith.index_cast %83 : i32 to index
    %c0_45 = arith.constant 0 : index
    %c0_46 = arith.constant 0 : index
    %85 = vector.load %arg2[%c0_44, %84, %c0_45, %c0_46] : memref<1x4x16x128xf32, #tpu.memory_space<vmem>>, vector<1x1x16x128xf32>
    %86 = vector.shape_cast %85 : vector<1x1x16x128xf32> to vector<1x16x128xf32>
    %87 = vector.shape_cast %86 : vector<1x16x128xf32> to vector<16x128xf32>
    %88 = vector.broadcast %0 : vector<1x128xf32> to vector<16x128xf32>
    %89 = arith.mulf %87, %88 : vector<16x128xf32>
    %90 = vector.broadcast %1 : vector<1x128xf32> to vector<16x128xf32>
    %91 = arith.addf %89, %90 : vector<16x128xf32>
    %cst_47 = arith.constant 0.000000e+00 : f32
    %92 = vector.broadcast %cst_47 : f32 to vector<16x128xf32>
    %93 = arith.maximumf %91, %92 : vector<16x128xf32>
    %c0_i32_48 = arith.constant 0 : i32
    %94 = arith.cmpi sge, %81, %c0_i32_48 : i32
    %c4_i32_49 = arith.constant 4 : i32
    %95 = arith.cmpi slt, %81, %c4_i32_49 : i32
    %96 = arith.andi %94, %95 : i1
    %cst_50 = arith.constant 0.000000e+00 : f32
    %97 = vector.broadcast %cst_50 : f32 to vector<16x128xf32>
    %98 = arith.select %96, %93, %97 : vector<16x128xf32>
    %99 = vector.extract_strided_slice %98 {offsets = [0, 0], sizes = [15, 128], strides = [1, 1]} : vector<16x128xf32> to vector<15x128xf32>
    %100 = tpu.concatenate %2, %99 in 0 : vector<1x128xf32>, vector<15x128xf32> -> vector<16x128xf32>
    %101 = arith.truncf %100 : vector<16x128xf32> to vector<16x128xbf16>
    %c6 = arith.constant 6 : index
    %c0_51 = arith.constant 0 : index
    %c0_52 = arith.constant 0 : index
    %102 = vector.load %arg3[%c6, %c0_51, %c0_52] : memref<9x128x128xbf16, #tpu.memory_space<vmem>>, vector<1x128x128xbf16>
    %103 = vector.shape_cast %102 : vector<1x128x128xbf16> to vector<128x128xbf16>
    %cst_53 = arith.constant dense<0.000000e+00> : vector<16x128xf32>
    %104 = tpu.matmul %101, %103, %cst_53 {dimension_numbers = #tpu.dot_dimension_numbers<[1], [0], [0], [1], [0, 0, 1, 1], [], []>} : vector<16x128xbf16>, vector<128x128xbf16>, vector<16x128xf32> -> vector<16x128xf32>
    %105 = arith.addf %79, %104 : vector<16x128xf32>
    %106 = arith.truncf %98 : vector<16x128xf32> to vector<16x128xbf16>
    %c7 = arith.constant 7 : index
    %c0_54 = arith.constant 0 : index
    %c0_55 = arith.constant 0 : index
    %107 = vector.load %arg3[%c7, %c0_54, %c0_55] : memref<9x128x128xbf16, #tpu.memory_space<vmem>>, vector<1x128x128xbf16>
    %108 = vector.shape_cast %107 : vector<1x128x128xbf16> to vector<128x128xbf16>
    %cst_56 = arith.constant dense<0.000000e+00> : vector<16x128xf32>
    %109 = tpu.matmul %106, %108, %cst_56 {dimension_numbers = #tpu.dot_dimension_numbers<[1], [0], [0], [1], [0, 0, 1, 1], [], []>} : vector<16x128xbf16>, vector<128x128xbf16>, vector<16x128xf32> -> vector<16x128xf32>
    %110 = arith.addf %105, %109 : vector<16x128xf32>
    %111 = vector.extract_strided_slice %98 {offsets = [1, 0], sizes = [15, 128], strides = [1, 1]} : vector<16x128xf32> to vector<15x128xf32>
    %112 = tpu.concatenate %111, %2 in 0 : vector<15x128xf32>, vector<1x128xf32> -> vector<16x128xf32>
    %113 = arith.truncf %112 : vector<16x128xf32> to vector<16x128xbf16>
    %c8 = arith.constant 8 : index
    %c0_57 = arith.constant 0 : index
    %c0_58 = arith.constant 0 : index
    %114 = vector.load %arg3[%c8, %c0_57, %c0_58] : memref<9x128x128xbf16, #tpu.memory_space<vmem>>, vector<1x128x128xbf16>
    %115 = vector.shape_cast %114 : vector<1x128x128xbf16> to vector<128x128xbf16>
    %cst_59 = arith.constant dense<0.000000e+00> : vector<16x128xf32>
    %116 = tpu.matmul %113, %115, %cst_59 {dimension_numbers = #tpu.dot_dimension_numbers<[1], [0], [0], [1], [0, 0, 1, 1], [], []>} : vector<16x128xbf16>, vector<128x128xbf16>, vector<16x128xf32> -> vector<16x128xf32>
    %117 = arith.addf %110, %116 : vector<16x128xf32>
    %118 = vector.shape_cast %117 : vector<16x128xf32> to vector<1x1x16x128xf32>
    %c0_60 = arith.constant 0 : index
    %c0_61 = arith.constant 0 : index
    %c0_62 = arith.constant 0 : index
    %c0_63 = arith.constant 0 : index
    %119 = vector.load %arg6[%c0_60, %c0_61, %c0_62, %c0_63] : memref<1x1x16x128xf32, #tpu.memory_space<vmem>>, vector<1x1x16x128xf32>
    tpu.vector_store %arg6[%c0_60, %c0_61, %c0_62, %c0_63], %118 {strides = array<i32>} : memref<1x1x16x128xf32, #tpu.memory_space<vmem>>, vector<1x1x16x128xf32>,
    %cst_64 = arith.constant dense<0.000000e+00> : vector<128xf32>
    %120 = vector.multi_reduction <add>, %117, %cst_64 [0] : vector<16x128xf32> to vector<128xf32>
    %121 = vector.shape_cast %120 : vector<128xf32> to vector<1x128xf32>
    %122 = arith.mulf %117, %117 : vector<16x128xf32>
    %cst_65 = arith.constant dense<0.000000e+00> : vector<128xf32>
    %123 = vector.multi_reduction <add>, %122, %cst_65 [0] : vector<16x128xf32> to vector<128xf32>
    %124 = vector.shape_cast %123 : vector<128xf32> to vector<1x128xf32>
    %cst_66 = arith.constant 0.000000e+00 : f32
    %125 = vector.broadcast %cst_66 : f32 to vector<6x128xf32>
    %126 = tpu.concatenate %121, %124, %125 in 0 : vector<1x128xf32>, vector<1x128xf32>, vector<6x128xf32> -> vector<8x128xf32>
    %127 = vector.shape_cast %126 : vector<8x128xf32> to vector<1x1x8x128xf32>
    %c0_67 = arith.constant 0 : index
    %c0_68 = arith.constant 0 : index
    %c0_69 = arith.constant 0 : index
    %c0_70 = arith.constant 0 : index
    %128 = vector.load %arg7[%c0_67, %c0_68, %c0_69, %c0_70] : memref<1x1x8x128xf32, #tpu.memory_space<vmem>>, vector<1x1x8x128xf32>
    tpu.vector_store %arg7[%c0_67, %c0_68, %c0_69, %c0_70], %127 {strides = array<i32>} : memref<1x1x8x128xf32, #tpu.memory_space<vmem>>, vector<1x1x8x128xf32>,
    return
  }
  func.func @transform_0(%arg0: i32, %arg1: i32) -> (i32, i32, i32, i32) {
    %c0_i32 = arith.constant 0 : i32
    %c0_i32_0 = arith.constant 0 : i32
    %c0_i32_1 = arith.constant 0 : i32
    %c0_i32_2 = arith.constant 0 : i32
    return %arg0, %c0_i32, %c0_i32_0, %c0_i32_1 : i32, i32, i32, i32
  }
  func.func @transform_1(%arg0: i32, %arg1: i32) -> (i32, i32, i32) {
    %c0_i32 = arith.constant 0 : i32
    %c0_i32_0 = arith.constant 0 : i32
    %c0_i32_1 = arith.constant 0 : i32
    %c0_i32_2 = arith.constant 0 : i32
    return %c0_i32, %c0_i32_0, %c0_i32_1 : i32, i32, i32
  }
  func.func @transform_2(%arg0: i32, %arg1: i32) -> (i32, i32) {
    %c0_i32 = arith.constant 0 : i32
    %c0_i32_0 = arith.constant 0 : i32
    %c0_i32_1 = arith.constant 0 : i32
    return %c0_i32, %c0_i32_0 : i32, i32
  }
  func.func @transform_3(%arg0: i32, %arg1: i32) -> (i32, i32) {
    %c0_i32 = arith.constant 0 : i32
    %c0_i32_0 = arith.constant 0 : i32
    %c0_i32_1 = arith.constant 0 : i32
    return %c0_i32, %c0_i32_0 : i32, i32
  }
  func.func @transform_4(%arg0: i32, %arg1: i32) -> (i32, i32, i32, i32) {
    %c0_i32 = arith.constant 0 : i32
    %c0_i32_0 = arith.constant 0 : i32
    %c0_i32_1 = arith.constant 0 : i32
    return %arg0, %arg1, %c0_i32, %c0_i32_0 : i32, i32, i32, i32
  }
  func.func @transform_5(%arg0: i32, %arg1: i32) -> (i32, i32, i32, i32) {
    %c0_i32 = arith.constant 0 : i32
    %c0_i32_0 = arith.constant 0 : i32
    %c0_i32_1 = arith.constant 0 : i32
    return %arg0, %arg1, %c0_i32, %c0_i32_0 : i32, i32, i32, i32
  }
}

module attributes {stable_mosaic.version = 11 : i64} {
  func.func @_bn_relu_kernel(%arg0: i32, %arg1: memref<1x64x128xf32, #tpu.memory_space<vmem>>, %arg2: memref<1x128xf32, #tpu.memory_space<vmem>>, %arg3: memref<1x128xf32, #tpu.memory_space<vmem>>, %arg4: memref<1x64x128xf32, #tpu.memory_space<vmem>>) attributes {dimension_semantics = [#tpu.dimension_semantics<parallel>], iteration_bounds = array<i64: 2>, scalar_prefetch = 0 : i64, scratch_operands = 0 : i64, tpu.core_type = #tpu.core_type<tc>, window_params = [{transform_indices = @transform_0, window_bounds = array<i64: 1, 64, 128>}, {pipeline_mode = #tpu.pipeline_mode<synchronous>, transform_indices = @transform_1, window_bounds = array<i64: 1, 128>}, {pipeline_mode = #tpu.pipeline_mode<synchronous>, transform_indices = @transform_2, window_bounds = array<i64: 1, 128>}, {transform_indices = @transform_3, window_bounds = array<i64: 1, 64, 128>}]} {
    %c0 = arith.constant 0 : index
    %c0_0 = arith.constant 0 : index
    %0 = vector.load %arg2[%c0, %c0_0] : memref<1x128xf32, #tpu.memory_space<vmem>>, vector<1x128xf32>
    %1 = vector.shape_cast %0 : vector<1x128xf32> to vector<1x1x128xf32>
    %c0_1 = arith.constant 0 : index
    %c0_2 = arith.constant 0 : index
    %2 = vector.load %arg3[%c0_1, %c0_2] : memref<1x128xf32, #tpu.memory_space<vmem>>, vector<1x128xf32>
    %3 = vector.shape_cast %2 : vector<1x128xf32> to vector<1x1x128xf32>
    %c0_3 = arith.constant 0 : index
    %c0_4 = arith.constant 0 : index
    %c0_5 = arith.constant 0 : index
    %4 = vector.load %arg1[%c0_3, %c0_4, %c0_5] : memref<1x64x128xf32, #tpu.memory_space<vmem>>, vector<1x64x128xf32>
    %5 = vector.broadcast %1 : vector<1x1x128xf32> to vector<1x64x128xf32>
    %6 = arith.mulf %4, %5 : vector<1x64x128xf32>
    %7 = vector.broadcast %3 : vector<1x1x128xf32> to vector<1x64x128xf32>
    %8 = arith.addf %6, %7 : vector<1x64x128xf32>
    %cst = arith.constant 0.000000e+00 : f32
    %9 = vector.broadcast %cst : f32 to vector<1x64x128xf32>
    %10 = arith.maximumf %8, %9 : vector<1x64x128xf32>
    %c0_6 = arith.constant 0 : index
    %c0_7 = arith.constant 0 : index
    %c0_8 = arith.constant 0 : index
    %11 = vector.load %arg4[%c0_6, %c0_7, %c0_8] : memref<1x64x128xf32, #tpu.memory_space<vmem>>, vector<1x64x128xf32>
    tpu.vector_store %arg4[%c0_6, %c0_7, %c0_8], %10 {strides = array<i32>} : memref<1x64x128xf32, #tpu.memory_space<vmem>>, vector<1x64x128xf32>,
    return
  }
  func.func @transform_0(%arg0: i32) -> (i32, i32, i32) {
    %c0_i32 = arith.constant 0 : i32
    %c0_i32_0 = arith.constant 0 : i32
    %c0_i32_1 = arith.constant 0 : i32
    return %arg0, %c0_i32, %c0_i32_0 : i32, i32, i32
  }
  func.func @transform_1(%arg0: i32) -> (i32, i32) {
    %c0_i32 = arith.constant 0 : i32
    %c0_i32_0 = arith.constant 0 : i32
    %c0_i32_1 = arith.constant 0 : i32
    return %c0_i32, %c0_i32_0 : i32, i32
  }
  func.func @transform_2(%arg0: i32) -> (i32, i32) {
    %c0_i32 = arith.constant 0 : i32
    %c0_i32_0 = arith.constant 0 : i32
    %c0_i32_1 = arith.constant 0 : i32
    return %c0_i32, %c0_i32_0 : i32, i32
  }
  func.func @transform_3(%arg0: i32) -> (i32, i32, i32) {
    %c0_i32 = arith.constant 0 : i32
    %c0_i32_0 = arith.constant 0 : i32
    %c0_i32_1 = arith.constant 0 : i32
    return %arg0, %c0_i32, %c0_i32_0 : i32, i32, i32
  }
}

</mosaic_0001>

<llo_original>
// kernel: decoder_block_forward.3
$region0: #{decoder_block_forward.3}
  #allocation0 [shape = 'u32[]', space=smem, size = 0x4, offset = 0x4, fixed_abs, tag = 'smem constant byte address 0x4 - core index']
  #allocation1 [shape = 'u32[144,128]{1,0:T(1,128)}', space=vmem, size = 0x12000, scoped, tag = 'internal scratch']
  %s0 = inlined_call_operand.vmem [shape: f32[2,4,16,128], index: 0, kind: input, shape index: {}]
  %s1 = inlined_call_operand.vmem [shape: bf16[9,128,128], index: 1, kind: input, shape index: {}]
  %s2 = inlined_call_operand.vmem [shape: f32[1,128], index: 2, kind: input, shape index: {}]
  %s3 = inlined_call_operand.vmem [shape: f32[1,128], index: 3, kind: input, shape index: {}]
  %s4 = inlined_call_operand.vmem [shape: f32[2,4,16,128], index: 4, kind: output, shape index: {0}]
  %s5 = inlined_call_operand.vmem [shape: f32[2,4,8,128], index: 5, kind: output, shape index: {1}]
  %6 = xla_tuple %s4, %s5
  %s7 = sld [smem:[#allocation0]]
  $region57: #{decoder_block_forward.3} parent=0
    _
  %s9 = ssub.s32 1, %s7
  %s10 = scalar_select 0, %s9, %s7
  loop: start=0, step=1, limit=10
  $region2: #{decoder_block_forward.3} parent=0 // loop_pre_header
    _
  $region3: #{decoder_block_forward.3} parent=0 // loop_header
    %s12 = sphi 0, %s16
    %p13 = scmp.ge.s32.totalorder %s12, 10
    %s19 = sphi 0, %s31
    %s20 = sphi 0, %s27
    %s21 = sphi 0, %s19
    %s22 = sphi 0, %s20
    %s23 = sphi 0, %s21
    %s24 = sphi 0, %s22
    %s34 = sphi 0, %s36
    %s37 = sphi 0, %s34
    %s38 = sphi 0, %s37
    %s54 = sphi 0, %s38
    %s58 = sphi 0, %s58
    %s60 = sphi 0, %s58
    %s61 = sphi 0, %s60
    %s75 = sphi 0, %s61
    %s79 = sphi 0, %s79
    %s81 = sphi 0, %s79
    %s82 = sphi 0, %s81
    %s96 = sphi 0, %s82
    %s100 = sphi 0, %s100
    %s102 = sphi 0, %s100
    %s103 = sphi 0, %s102
    %s117 = sphi 0, %s103
    %s125 = sphi 0, %s127
    %s128 = sphi 0, %s125
    %s129 = sphi 0, %s128
    %s145 = sphi 0, %s129
    %s153 = sphi 0, %s155
    %s156 = sphi 0, %s153
    %s157 = sphi 0, %s156
    %s173 = sphi 0, %s157
  $region4: #{decoder_block_forward.3} parent=0 // loop_header_branch
    %15 = sbr.rel (%p13) target = $region8
  $region5: #{decoder_block_forward.3} parent=0 // loop_body
    %s17 = ssub.s32 %s12, 1
    %s18 = ssub.s32 %s12, 2
    %s25 = sadd.s32 1, %s20
    %p26 = scmp.ge.s32.totalorder %s25, 4
    %s27 = scalar_select %p26, 0, %s25
    %s28 = sadd.s32 1, %s19
    %s29 = scalar_select %p26, %s28, %s19
    %p30 = scmp.ge.s32.totalorder %s29, 2
    %s31 = scalar_select %p30, 0, %s29
    %s32 = ssub.s32 %s19, %s31
    %p33 = scmp.eq.s32.totalorder %s32, 0
    %s35 = sadd.s32 %s34, 1
    %s36 = scalar_select %p33, %s34, %s35
    %p39 = pneg %p33
    %p40 = scmp.eq.s32.totalorder %s12, 7
    %p41 = por %p39, %p40
    %p42 = scmp.ne.s32.totalorder %s34, %s37
    %p43 = scmp.eq.s32.totalorder %s12, 0
    %p44 = por %p42, %p43
    %p45 = scmp.ne.s32.totalorder %s34, %s37
    %p46 = scmp.eq.s32.totalorder %s17, 7
    %p47 = por %p45, %p46
    %p48 = scmp.ne.s32.totalorder %s37, %s38
    %p49 = scmp.eq.s32.totalorder %s17, 0
    %p50 = por %p48, %p49
    %p51 = scmp.ne.s32.totalorder %s37, %s38
    %p52 = scmp.eq.s32.totalorder %s18, 7
    %p53 = por %p51, %p52
    %p55 = scmp.ne.s32.totalorder %s38, %s54
    %p56 = scmp.eq.s32.totalorder %s18, 0
    %p57 = por %p55, %p56
    %s59 = sadd.s32 %s58, 1
    %p62 = scmp.eq.s32.totalorder %s12, 7
    %p63 = scmp.ne.s32.totalorder %s58, %s60
    %p64 = scmp.eq.s32.totalorder %s12, 0
    %p65 = por %p63, %p64
    %p66 = scmp.ne.s32.totalorder %s58, %s60
    %p67 = scmp.eq.s32.totalorder %s17, 7
    %p68 = por %p66, %p67
    %p69 = scmp.ne.s32.totalorder %s60, %s61
    %p70 = scmp.eq.s32.totalorder %s17, 0
    %p71 = por %p69, %p70
    %p72 = scmp.ne.s32.totalorder %s60, %s61
    %p73 = scmp.eq.s32.totalorder %s18, 7
    %p74 = por %p72, %p73
    %p76 = scmp.ne.s32.totalorder %s61, %s75
    %p77 = scmp.eq.s32.totalorder %s18, 0
    %p78 = por %p76, %p77
    %s80 = sadd.s32 %s79, 1
    %p83 = scmp.eq.s32.totalorder %s12, 7
    %p84 = scmp.ne.s32.totalorder %s79, %s81
    %p85 = scmp.eq.s32.totalorder %s12, 0
    %p86 = por %p84, %p85
    %p87 = scmp.ne.s32.totalorder %s79, %s81
    %p88 = scmp.eq.s32.totalorder %s17, 7
    %p89 = por %p87, %p88
    %p90 = scmp.ne.s32.totalorder %s81, %s82
    %p91 = scmp.eq.s32.totalorder %s17, 0
    %p92 = por %p90, %p91
    %p93 = scmp.ne.s32.totalorder %s81, %s82
    %p94 = scmp.eq.s32.totalorder %s18, 7
    %p95 = por %p93, %p94
    %p97 = scmp.ne.s32.totalorder %s82, %s96
    %p98 = scmp.eq.s32.totalorder %s18, 0
    %p99 = por %p97, %p98
    %s101 = sadd.s32 %s100, 1
    %p104 = scmp.eq.s32.totalorder %s12, 7
    %p105 = scmp.ne.s32.totalorder %s100, %s102
    %p106 = scmp.eq.s32.totalorder %s12, 0
    %p107 = por %p105, %p106
    %p108 = scmp.ne.s32.totalorder %s100, %s102
    %p109 = scmp.eq.s32.totalorder %s17, 7
    %p110 = por %p108, %p109
    %p111 = scmp.ne.s32.totalorder %s102, %s103
    %p112 = scmp.eq.s32.totalorder %s17, 0
    %p113 = por %p111, %p112
    %p114 = scmp.ne.s32.totalorder %s102, %s103
    %p115 = scmp.eq.s32.totalorder %s18, 7
    %p116 = por %p114, %p115
    %p118 = scmp.ne.s32.totalorder %s103, %s117
    %p119 = scmp.eq.s32.totalorder %s18, 0
    %p120 = por %p118, %p119
    %s121 = ssub.s32 %s19, %s31
    %s122 = ssub.s32 %s20, %s27
    %s123 = sor.u32 %s121, %s122
    %p124 = scmp.eq.s32.totalorder %s123, 0
    %s126 = sadd.s32 %s125, 1
    %s127 = scalar_select %p124, %s125, %s126
    %p130 = pneg %p124
    %p131 = scmp.eq.s32.totalorder %s12, 7
    %p132 = por %p130, %p131
    %p133 = scmp.ne.s32.totalorder %s125, %s128
    %p134 = scmp.eq.s32.totalorder %s12, 0
    %p135 = por %p133, %p134
    %p136 = scmp.ne.s32.totalorder %s125, %s128
    %p137 = scmp.eq.s32.totalorder %s17, 7
    %p138 = por %p136, %p137
    %p139 = scmp.ne.s32.totalorder %s128, %s129
    %p140 = scmp.eq.s32.totalorder %s17, 0
    %p141 = por %p139, %p140
    %p142 = scmp.ne.s32.totalorder %s128, %s129
    %p143 = scmp.eq.s32.totalorder %s18, 7
    %p144 = por %p142, %p143
    %p146 = scmp.ne.s32.totalorder %s129, %s145
    %p147 = scmp.eq.s32.totalorder %s18, 0
    %p148 = por %p146, %p147
    %s149 = ssub.s32 %s19, %s31
    %s150 = ssub.s32 %s20, %s27
    %s151 = sor.u32 %s149, %s150
    %p152 = scmp.eq.s32.totalorder %s151, 0
    %s154 = sadd.s32 %s153, 1
    %s155 = scalar_select %p152, %s153, %s154
    %p158 = pneg %p152
    %p159 = scmp.eq.s32.totalorder %s12, 7
    %p160 = por %p158, %p159
    %p161 = scmp.ne.s32.totalorder %s153, %s156
    %p162 = scmp.eq.s32.totalorder %s12, 0
    %p163 = por %p161, %p162
    %p164 = scmp.ne.s32.totalorder %s153, %s156
    %p165 = scmp.eq.s32.totalorder %s17, 7
    %p166 = por %p164, %p165
    %p167 = scmp.ne.s32.totalorder %s156, %s157
    %p168 = scmp.eq.s32.totalorder %s17, 0
    %p169 = por %p167, %p168
    %p170 = scmp.ne.s32.totalorder %s156, %s157
    %p171 = scmp.eq.s32.totalorder %s18, 7
    %p172 = por %p170, %p171
    %p174 = scmp.ne.s32.totalorder %s157, %s173
    %p175 = scmp.eq.s32.totalorder %s18, 0
    %p176 = por %p174, %p175
    %p177 = scmp.le.s32.totalorder 1, %s12
    %p178 = scmp.lt.s32.totalorder %s12, 9
    %p179 = pnand %p177, %p178
    %p180 = pneg %p179
    // Predicated region
    $region9: #{decoder_block_forward.3} parent=5 // pred_check
      _
    $region10: #{decoder_block_forward.3} parent=5 // pred_check_branch
      %182 = sbr.rel (%p179) target = $region12
    $region11: #{decoder_block_forward.3} parent=5 // pred_region
      %s183 = ssub.s32 %s12, 1
      // Predicated region
      $region13: #{decoder_block_forward.3} parent=11 // pred_check
        %p184 = pneg %p71
      $region14: #{decoder_block_forward.3} parent=11 // pred_check_branch
        %186 = sbr.rel (%p184) target = $region16
      $region15: #{decoder_block_forward.3} parent=11 // pred_region
        _
      $region16: #{decoder_block_forward.3} parent=11 // pred_fallthru
        _
      // Predicated region
      $region17: #{decoder_block_forward.3} parent=11 // pred_check
        %p187 = pneg %p92
      $region18: #{decoder_block_forward.3} parent=11 // pred_check_branch
        %189 = sbr.rel (%p187) target = $region20
      $region19: #{decoder_block_forward.3} parent=11 // pred_region
        _
      $region20: #{decoder_block_forward.3} parent=11 // pred_fallthru
        _
      // Predicated region
      $region21: #{decoder_block_forward.3} parent=11 // pred_check
        %p190 = pneg %p113
      $region22: #{decoder_block_forward.3} parent=11 // pred_check_branch
        %192 = sbr.rel (%p190) target = $region24
      $region23: #{decoder_block_forward.3} parent=11 // pred_region
        _
      $region24: #{decoder_block_forward.3} parent=11 // pred_fallthru
        _
    $region12: #{decoder_block_forward.3} parent=5 // pred_fallthru
      _
    %p193 = scmp.lt.s32.totalorder %s12, 8
    // Predicated region
    $region25: #{decoder_block_forward.3} parent=5 // pred_check
      %p194 = pneg %p193
    $region26: #{decoder_block_forward.3} parent=5 // pred_check_branch
      %196 = sbr.rel (%p194) target = $region28
    $region27: #{decoder_block_forward.3} parent=5 // pred_region
      // Predicated region
      $region29: #{decoder_block_forward.3} parent=27 // pred_check
        %p197 = pneg %p44
      $region30: #{decoder_block_forward.3} parent=27 // pred_check_branch
        %199 = sbr.rel (%p197) target = $region32
      $region31: #{decoder_block_forward.3} parent=27 // pred_region
        %p200 = scmp.lt.s32.totalorder %s19, 1
        %s201 = scalar_select %p200, %s19, 1
        %s202 = smul.addr %s201, 8
        %s203 = smul.addr %s202, 8
        %s204 = scalar_lea.vmem %s0, %s203
      $region32: #{decoder_block_forward.3} parent=27 // pred_fallthru
        _
    $region28: #{decoder_block_forward.3} parent=5 // pred_fallthru
      _
    %p205 = scmp.le.s32.totalorder 1, %s12
    %p206 = scmp.lt.s32.totalorder %s12, 9
    %p207 = pnand %p205, %p206
    %p208 = pneg %p207
    // Predicated region
    $region33: #{decoder_block_forward.3} parent=5 // pred_check
      _
    $region34: #{decoder_block_forward.3} parent=5 // pred_check_branch
      %210 = sbr.rel (%p207) target = $region36
    $region35: #{decoder_block_forward.3} parent=5 // pred_region
      %s211 = ssub.s32 %s12, 1
      %p212 = scmp.lt.s32.totalorder %s21, 1
      %s213 = scalar_select %p212, %s21, 1
      %s214 = smul.addr %s213, 8
      %s215 = smul.addr %s214, 8
      %s216 = scalar_lea.vmem %s0, %s215
      %p217 = pneg %p50
      %p218 = pneg %p47
      %p219 = pneg %p71
      %p220 = pneg %p68
      %p221 = pneg %p92
      %p222 = pneg %p89
      %p223 = pneg %p113
      %p224 = pneg %p110
      %p225 = pneg %p141
      %p226 = pneg %p138
      %p227 = scmp.lt.s32.totalorder %s21, 1
      %s228 = scalar_select %p227, %s21, 1
      %p229 = scmp.lt.s32.totalorder %s22, 3
      %s230 = scalar_select %p229, %s22, 3
      %s231 = smul.addr %s230, 2
      %s232 = smul.addr %s228, 8
      %s233 = sadd.s32 %s231, %s232
      %s234 = smul.addr %s233, 8
      %s235 = scalar_lea.vmem %s4, %s234
      %p236 = pneg %p169
      %p237 = pneg %p166
      %p238 = scmp.lt.s32.totalorder %s21, 1
      %s239 = scalar_select %p238, %s21, 1
      %p240 = scmp.lt.s32.totalorder %s22, 3
      %s241 = scalar_select %p240, %s22, 3
      %s242 = smul.addr %s239, 4
      %s243 = sadd.s32 %s241, %s242
      %s244 = smul.addr %s243, 8
      %s245 = scalar_lea.vmem %s5, %s244
      %p246 = scmp.lt.s32.totalorder %s21, 1
      %s247 = scalar_select %p246, %s21, 1
      %s248 = smul.addr %s247, 8
      %s249 = smul.addr %s248, 8
      %s250 = scalar_lea.vmem %s0, %s249
      %p251 = scmp.lt.s32.totalorder %s21, 1
      %s252 = scalar_select %p251, %s21, 1
      %p253 = scmp.lt.s32.totalorder %s22, 3
      %s254 = scalar_select %p253, %s22, 3
      %s255 = smul.addr %s254, 2
      %s256 = smul.addr %s252, 8
      %s257 = sadd.s32 %s255, %s256
      %s258 = smul.addr %s257, 8
      %s259 = scalar_lea.vmem %s4, %s258
      %p260 = scmp.lt.s32.totalorder %s21, 1
      %s261 = scalar_select %p260, %s21, 1
      %p262 = scmp.lt.s32.totalorder %s22, 3
      %s263 = scalar_select %p262, %s22, 3
      %s264 = smul.addr %s261, 4
      %s265 = sadd.s32 %s263, %s264
      %s266 = smul.addr %s265, 8
      %s267 = scalar_lea.vmem %s5, %s266
      %s269 = sadd.s32 %s22, 4294967295
      %p270 = scmp.gt.s32.totalorder %s269, 0
      %s271 = scalar_select %p270, %s269, 0
      %p272 = scmp.lt.s32.totalorder %s271, 3
      %s273 = scalar_select %p272, %s271, 3
      %s274 = smul.u32 %s273, 16
      %s275 = scalar_lea.vmem %s250, %s274
      %v276 = vld [vmem:[%s275] sm:$0xff]
      %v277 = vld [vmem:[%s275 + $0x8] sm:$0xff]
      %p278 = scmp.ge.s32.totalorder %s269, 0
      %p279 = scmp.lt.s32.totalorder %s269, 4
      %p280 = pnand %p278, %p279
      %p281 = pneg %p280
      %s282 = scalar_select %p281, 1, 0
      %v283 = vstv %s282
      %vm284 = vcmp.eq.s32.totalorder %v283, 1
      %v285 = vsel %vm284, %v276, 0.0
      %v286 = vsel %vm284, %v277, 0.0
      %vm289 = vcmask 1040384
      %v290 = vrot.slane %v285, 7
      %v291 = vrot.slane %v286, 7
      %v292 = vsel %vm289, %v290, %v291
      %v295 = vsel %vm289, 0.0, %v290
      %v296 = vpack.c.bf16 %v292, %v295
      %v297 = vld [vmem:[%s1] sm:$0xf]
      %v298 = vld [vmem:[%s1 + $0x4] sm:$0xf]
      %v299 = vld [vmem:[%s1 + $0x8] sm:$0xf]
      %v300 = vld [vmem:[%s1 + $0xc] sm:$0xf]
      %v301 = vld [vmem:[%s1 + $0x10] sm:$0xf]
      %v302 = vld [vmem:[%s1 + $0x14] sm:$0xf]
      %v303 = vld [vmem:[%s1 + $0x18] sm:$0xf]
      %v304 = vld [vmem:[%s1 + $0x1c] sm:$0xf]
      %v305 = vld [vmem:[%s1 + $0x20] sm:$0xf]
      %v306 = vld [vmem:[%s1 + $0x24] sm:$0xf]
      %v307 = vld [vmem:[%s1 + $0x28] sm:$0xf]
      %v308 = vld [vmem:[%s1 + $0x2c] sm:$0xf]
      %v309 = vld [vmem:[%s1 + $0x30] sm:$0xf]
      %v310 = vld [vmem:[%s1 + $0x34] sm:$0xf]
      %v311 = vld [vmem:[%s1 + $0x38] sm:$0xf]
      %v312 = vld [vmem:[%s1 + $0x3c] sm:$0xf]
      %v313 = vpack.c.bf16 %v286, %v285
      %s314 = scalar_lea.vmem %s1, 64
      %v315 = vld [vmem:[%s314] sm:$0xf]
      %v316 = vld [vmem:[%s314 + $0x4] sm:$0xf]
      %v317 = vld [vmem:[%s314 + $0x8] sm:$0xf]
      %v318 = vld [vmem:[%s314 + $0xc] sm:$0xf]
      %v319 = vld [vmem:[%s314 + $0x10] sm:$0xf]
      %v320 = vld [vmem:[%s314 + $0x14] sm:$0xf]
      %v321 = vld [vmem:[%s314 + $0x18] sm:$0xf]
      %v322 = vld [vmem:[%s314 + $0x1c] sm:$0xf]
      %v323 = vld [vmem:[%s314 + $0x20] sm:$0xf]
      %v324 = vld [vmem:[%s314 + $0x24] sm:$0xf]
      %v325 = vld [vmem:[%s314 + $0x28] sm:$0xf]
      %v326 = vld [vmem:[%s314 + $0x2c] sm:$0xf]
      %v327 = vld [vmem:[%s314 + $0x30] sm:$0xf]
      %v328 = vld [vmem:[%s314 + $0x34] sm:$0xf]
      %v329 = vld [vmem:[%s314 + $0x38] sm:$0xf]
      %v330 = vld [vmem:[%s314 + $0x3c] sm:$0xf]
      %v347 = vunpack.c.l.b16 %v315
      %v348 = vunpack.c.l.b16 %v316
      %v349 = vunpack.c.l.b16 %v317
      %v350 = vunpack.c.l.b16 %v318
      %v351 = vunpack.c.l.b16 %v319
      %v352 = vunpack.c.l.b16 %v320
      %v353 = vunpack.c.l.b16 %v321
      %v354 = vunpack.c.l.b16 %v322
      %v355 = vunpack.c.l.b16 %v323
      %v356 = vunpack.c.l.b16 %v324
      %v357 = vunpack.c.l.b16 %v325
      %v358 = vunpack.c.l.b16 %v326
      %v359 = vunpack.c.l.b16 %v327
      %v360 = vunpack.c.l.b16 %v328
      %v361 = vunpack.c.l.b16 %v329
      %v362 = vunpack.c.l.b16 %v330
      %v363 = vpack.c.b16 %v348, %v347
      %v364 = vpack.c.b16 %v350, %v349
      %v365 = vpack.c.b16 %v352, %v351
      %v366 = vpack.c.b16 %v354, %v353
      %v367 = vpack.c.b16 %v356, %v355
      %v368 = vpack.c.b16 %v358, %v357
      %v369 = vpack.c.b16 %v360, %v359
      %v370 = vpack.c.b16 %v362, %v361
      %379 = vmatprep.subr.bf16.mxu0 0
      %380 = vmatpush1.bf16.msra.mxu0 %v363
      %381 = vmatprep.subr.bf16.mxu0 0
      %382 = vmatpush1.bf16.msra.mxu0 %v364
      %383 = vmatprep.subr.bf16.mxu0 0
      %384 = vmatpush1.bf16.msra.mxu0 %v365
      %385 = vmatprep.subr.bf16.mxu0 0
      %386 = vmatpush1.bf16.msra.mxu0 %v366
      %387 = vmatprep.subr.bf16.mxu0 0
      %388 = vmatpush1.bf16.msra.mxu0 %v367
      %389 = vmatprep.subr.bf16.mxu0 0
      %390 = vmatpush1.bf16.msra.mxu0 %v368
      %391 = vmatprep.subr.bf16.mxu0 0
      %392 = vmatpush1.bf16.msra.mxu0 %v369
      %393 = vmatprep.subr.bf16.mxu0 0
      %394 = vmatpush1.bf16.msra.mxu0 %v370
      %395 = vmatprep.subr.bf16.mxu0 0
      %396 = vmatpush1.bf16.msra.mxu0 0
      %397 = vmatprep.subr.bf16.mxu0 0
      %398 = vmatpush1.bf16.msra.mxu0 0
      %399 = vmatprep.subr.bf16.mxu0 0
      %400 = vmatpush1.bf16.msra.mxu0 0
      %401 = vmatprep.subr.bf16.mxu0 0
      %402 = vmatpush1.bf16.msra.mxu0 0
      %403 = vmatprep.subr.bf16.mxu0 0
      %404 = vmatpush1.bf16.msra.mxu0 0
      %405 = vmatprep.subr.bf16.mxu0 0
      %406 = vmatpush1.bf16.msra.mxu0 0
      %407 = vmatprep.subr.bf16.mxu0 0
      %408 = vmatpush1.bf16.msra.mxu0 0
      %409 = vmatprep.subr.bf16.mxu0 0
      %410 = vmatpush1.bf16.msra.mxu0 0
      %411 = vmatprep.mubr.bf16.mxu0 0
      %412 = vmatmul.mubr.bf16.gmra.mrb[0].mxu0 %v313
      %v413 = vpop.f32.mrb[0].mxu0
      %v414 = vadd.f32 0.0, %v413
      %v415 = vpop.f32.mrb[0].mxu0
      %v416 = vpop.f32.mrb[0].mxu0
      %v417 = vadd.f32 0.0, %v416
      %v418 = vpop.f32.mrb[0].mxu0
      %419 = vdwg.mxu0
      %v436 = vunpack.c.l.b16 %v297
      %v437 = vunpack.c.l.b16 %v298
      %v438 = vunpack.c.l.b16 %v299
      %v439 = vunpack.c.l.b16 %v300
      %v440 = vunpack.c.l.b16 %v301
      %v441 = vunpack.c.l.b16 %v302
      %v442 = vunpack.c.l.b16 %v303
      %v443 = vunpack.c.l.b16 %v304
      %v444 = vunpack.c.l.b16 %v305
      %v445 = vunpack.c.l.b16 %v306
      %v446 = vunpack.c.l.b16 %v307
      %v447 = vunpack.c.l.b16 %v308
      %v448 = vunpack.c.l.b16 %v309
      %v449 = vunpack.c.l.b16 %v310
      %v450 = vunpack.c.l.b16 %v311
      %v451 = vunpack.c.l.b16 %v312
      %v452 = vpack.c.b16 %v437, %v436
      %v453 = vpack.c.b16 %v439, %v438
      %v454 = vpack.c.b16 %v441, %v440
      %v455 = vpack.c.b16 %v443, %v442
      %v456 = vpack.c.b16 %v445, %v444
      %v457 = vpack.c.b16 %v447, %v446
      %v458 = vpack.c.b16 %v449, %v448
      %v459 = vpack.c.b16 %v451, %v450
      %468 = vmatprep.subr.bf16.mxu0 0
      %469 = vmatpush1.bf16.msra.mxu0 %v452
      %470 = vmatprep.subr.bf16.mxu0 0
      %471 = vmatpush1.bf16.msra.mxu0 %v453
      %472 = vmatprep.subr.bf16.mxu0 0
      %473 = vmatpush1.bf16.msra.mxu0 %v454
      %474 = vmatprep.subr.bf16.mxu0 0
      %475 = vmatpush1.bf16.msra.mxu0 %v455
      %476 = vmatprep.subr.bf16.mxu0 0
      %477 = vmatpush1.bf16.msra.mxu0 %v456
      %478 = vmatprep.subr.bf16.mxu0 0
      %479 = vmatpush1.bf16.msra.mxu0 %v457
      %480 = vmatprep.subr.bf16.mxu0 0
      %481 = vmatpush1.bf16.msra.mxu0 %v458
      %482 = vmatprep.subr.bf16.mxu0 0
      %483 = vmatpush1.bf16.msra.mxu0 %v459
      %484 = vmatprep.subr.bf16.mxu0 0
      %485 = vmatpush1.bf16.msra.mxu0 0
      %486 = vmatprep.subr.bf16.mxu0 0
      %487 = vmatpush1.bf16.msra.mxu0 0
      %488 = vmatprep.subr.bf16.mxu0 0
      %489 = vmatpush1.bf16.msra.mxu0 0
      %490 = vmatprep.subr.bf16.mxu0 0
      %491 = vmatpush1.bf16.msra.mxu0 0
      %492 = vmatprep.subr.bf16.mxu0 0
      %493 = vmatpush1.bf16.msra.mxu0 0
      %494 = vmatprep.subr.bf16.mxu0 0
      %495 = vmatpush1.bf16.msra.mxu0 0
      %496 = vmatprep.subr.bf16.mxu0 0
      %497 = vmatpush1.bf16.msra.mxu0 0
      %498 = vmatprep.subr.bf16.mxu0 0
      %499 = vmatpush1.bf16.msra.mxu0 0
      %500 = vmatprep.mubr.bf16.mxu0 0
      %501 = vmatmul.mubr.bf16.gmra.mrb[0].mxu0 %v296
      %v502 = vpop.f32.mrb[0].mxu0
      %v503 = vadd.f32 %v414, %v502
      %v504 = vpop.f32.mrb[0].mxu0
      %v505 = vpop.f32.mrb[0].mxu0
      %v506 = vadd.f32 %v417, %v505
      %v507 = vpop.f32.mrb[0].mxu0
      %508 = vdwg.mxu0
      %vm509 = vcmask 1046528
      %v510 = vrot.slane %v285, 1
      %v511 = vrot.slane %v286, 1
      %v512 = vsel %vm509, %v510, %v511
      %v515 = vsel %vm509, %v511, 0.0
      %v516 = vpack.c.bf16 %v515, %v512
      %s517 = scalar_lea.vmem %s1, 128
      %v518 = vld [vmem:[%s517] sm:$0xf]
      %v519 = vld [vmem:[%s517 + $0x4] sm:$0xf]
      %v520 = vld [vmem:[%s517 + $0x8] sm:$0xf]
      %v521 = vld [vmem:[%s517 + $0xc] sm:$0xf]
      %v522 = vld [vmem:[%s517 + $0x10] sm:$0xf]
      %v523 = vld [vmem:[%s517 + $0x14] sm:$0xf]
      %v524 = vld [vmem:[%s517 + $0x18] sm:$0xf]
      %v525 = vld [vmem:[%s517 + $0x1c] sm:$0xf]
      %v526 = vld [vmem:[%s517 + $0x20] sm:$0xf]
      %v527 = vld [vmem:[%s517 + $0x24] sm:$0xf]
      %v528 = vld [vmem:[%s517 + $0x28] sm:$0xf]
      %v529 = vld [vmem:[%s517 + $0x2c] sm:$0xf]
      %v530 = vld [vmem:[%s517 + $0x30] sm:$0xf]
      %v531 = vld [vmem:[%s517 + $0x34] sm:$0xf]
      %v532 = vld [vmem:[%s517 + $0x38] sm:$0xf]
      %v533 = vld [vmem:[%s517 + $0x3c] sm:$0xf]
      %v550 = vunpack.c.l.b16 %v518
      %v551 = vunpack.c.l.b16 %v519
      %v552 = vunpack.c.l.b16 %v520
      %v553 = vunpack.c.l.b16 %v521
      %v554 = vunpack.c.l.b16 %v522
      %v555 = vunpack.c.l.b16 %v523
      %v556 = vunpack.c.l.b16 %v524
      %v557 = vunpack.c.l.b16 %v525
      %v558 = vunpack.c.l.b16 %v526
      %v559 = vunpack.c.l.b16 %v527
      %v560 = vunpack.c.l.b16 %v528
      %v561 = vunpack.c.l.b16 %v529
      %v562 = vunpack.c.l.b16 %v530
      %v563 = vunpack.c.l.b16 %v531
      %v564 = vunpack.c.l.b16 %v532
      %v565 = vunpack.c.l.b16 %v533
      %v566 = vpack.c.b16 %v551, %v550
      %v567 = vpack.c.b16 %v553, %v552
      %v568 = vpack.c.b16 %v555, %v554
      %v569 = vpack.c.b16 %v557, %v556
      %v570 = vpack.c.b16 %v559, %v558
      %v571 = vpack.c.b16 %v561, %v560
      %v572 = vpack.c.b16 %v563, %v562
      %v573 = vpack.c.b16 %v565, %v564
      %582 = vmatprep.subr.bf16.mxu0 0
      %583 = vmatpush1.bf16.msra.mxu0 %v566
      %584 = vmatprep.subr.bf16.mxu0 0
      %585 = vmatpush1.bf16.msra.mxu0 %v567
      %586 = vmatprep.subr.bf16.mxu0 0
      %587 = vmatpush1.bf16.msra.mxu0 %v568
      %588 = vmatprep.subr.bf16.mxu0 0
      %589 = vmatpush1.bf16.msra.mxu0 %v569
      %590 = vmatprep.subr.bf16.mxu0 0
      %591 = vmatpush1.bf16.msra.mxu0 %v570
      %592 = vmatprep.subr.bf16.mxu0 0
      %593 = vmatpush1.bf16.msra.mxu0 %v571
      %594 = vmatprep.subr.bf16.mxu0 0
      %595 = vmatpush1.bf16.msra.mxu0 %v572
      %596 = vmatprep.subr.bf16.mxu0 0
      %597 = vmatpush1.bf16.msra.mxu0 %v573
      %598 = vmatprep.subr.bf16.mxu0 0
      %599 = vmatpush1.bf16.msra.mxu0 0
      %600 = vmatprep.subr.bf16.mxu0 0
      %601 = vmatpush1.bf16.msra.mxu0 0
      %602 = vmatprep.subr.bf16.mxu0 0
      %603 = vmatpush1.bf16.msra.mxu0 0
      %604 = vmatprep.subr.bf16.mxu0 0
      %605 = vmatpush1.bf16.msra.mxu0 0
      %606 = vmatprep.subr.bf16.mxu0 0
      %607 = vmatpush1.bf16.msra.mxu0 0
      %608 = vmatprep.subr.bf16.mxu0 0
      %609 = vmatpush1.bf16.msra.mxu0 0
      %610 = vmatprep.subr.bf16.mxu0 0
      %611 = vmatpush1.bf16.msra.mxu0 0
      %612 = vmatprep.subr.bf16.mxu0 0
      %613 = vmatpush1.bf16.msra.mxu0 0
      %614 = vmatprep.mubr.bf16.mxu0 0
      %615 = vmatmul.mubr.bf16.gmra.mrb[0].mxu0 %v516
      %v616 = vpop.f32.mrb[0].mxu0
      %v617 = vadd.f32 0.0, %v616
      %v618 = vpop.f32.mrb[0].mxu0
      %v619 = vpop.f32.mrb[0].mxu0
      %v620 = vadd.f32 0.0, %v619
      %v621 = vpop.f32.mrb[0].mxu0
      %622 = vdwg.mxu0
      %v623 = vadd.f32 %v503, %v617
      %v624 = vadd.f32 %v506, %v620
      %p625 = scmp.gt.s32.totalorder %s22, 0
      %s626 = scalar_select %p625, %s22, 0
      %p627 = scmp.lt.s32.totalorder %s626, 3
      %s628 = scalar_select %p627, %s626, 3
      %s629 = smul.u32 %s628, 16
      %s630 = scalar_lea.vmem %s250, %s629
      %v631 = vld [vmem:[%s630] sm:$0xff]
      %v632 = vld [vmem:[%s630 + $0x8] sm:$0xff]
      %p633 = scmp.ge.s32.totalorder %s22, 0
      %p634 = scmp.lt.s32.totalorder %s22, 4
      %p635 = pnand %p633, %p634
      %p636 = pneg %p635
      %s637 = scalar_select %p636, 1, 0
      %v638 = vstv %s637
      %vm639 = vcmp.eq.s32.totalorder %v638, 1
      %v640 = vsel %vm639, %v631, 0.0
      %v641 = vsel %vm639, %v632, 0.0
      %v644 = vrot.slane %v640, 7
      %v645 = vrot.slane %v641, 7
      %v646 = vsel %vm289, %v644, %v645
      %v649 = vsel %vm289, 0.0, %v644
      %v650 = vpack.c.bf16 %v646, %v649
      %s651 = scalar_lea.vmem %s1, 192
      %v652 = vld [vmem:[%s651] sm:$0xf]
      %v653 = vld [vmem:[%s651 + $0x4] sm:$0xf]
      %v654 = vld [vmem:[%s651 + $0x8] sm:$0xf]
      %v655 = vld [vmem:[%s651 + $0xc] sm:$0xf]
      %v656 = vld [vmem:[%s651 + $0x10] sm:$0xf]
      %v657 = vld [vmem:[%s651 + $0x14] sm:$0xf]
      %v658 = vld [vmem:[%s651 + $0x18] sm:$0xf]
      %v659 = vld [vmem:[%s651 + $0x1c] sm:$0xf]
      %v660 = vld [vmem:[%s651 + $0x20] sm:$0xf]
      %v661 = vld [vmem:[%s651 + $0x24] sm:$0xf]
      %v662 = vld [vmem:[%s651 + $0x28] sm:$0xf]
      %v663 = vld [vmem:[%s651 + $0x2c] sm:$0xf]
      %v664 = vld [vmem:[%s651 + $0x30] sm:$0xf]
      %v665 = vld [vmem:[%s651 + $0x34] sm:$0xf]
      %v666 = vld [vmem:[%s651 + $0x38] sm:$0xf]
      %v667 = vld [vmem:[%s651 + $0x3c] sm:$0xf]
      %v684 = vunpack.c.l.b16 %v652
      %v685 = vunpack.c.l.b16 %v653
      %v686 = vunpack.c.l.b16 %v654
      %v687 = vunpack.c.l.b16 %v655
      %v688 = vunpack.c.l.b16 %v656
      %v689 = vunpack.c.l.b16 %v657
      %v690 = vunpack.c.l.b16 %v658
      %v691 = vunpack.c.l.b16 %v659
      %v692 = vunpack.c.l.b16 %v660
      %v693 = vunpack.c.l.b16 %v661
      %v694 = vunpack.c.l.b16 %v662
      %v695 = vunpack.c.l.b16 %v663
      %v696 = vunpack.c.l.b16 %v664
      %v697 = vunpack.c.l.b16 %v665
      %v698 = vunpack.c.l.b16 %v666
      %v699 = vunpack.c.l.b16 %v667
      %v700 = vpack.c.b16 %v685, %v684
      %v701 = vpack.c.b16 %v687, %v686
      %v702 = vpack.c.b16 %v689, %v688
      %v703 = vpack.c.b16 %v691, %v690
      %v704 = vpack.c.b16 %v693, %v692
      %v705 = vpack.c.b16 %v695, %v694
      %v706 = vpack.c.b16 %v697, %v696
      %v707 = vpack.c.b16 %v699, %v698
      %716 = vmatprep.subr.bf16.mxu0 0
      %717 = vmatpush1.bf16.msra.mxu0 %v700
      %718 = vmatprep.subr.bf16.mxu0 0
      %719 = vmatpush1.bf16.msra.mxu0 %v701
      %720 = vmatprep.subr.bf16.mxu0 0
      %721 = vmatpush1.bf16.msra.mxu0 %v702
      %722 = vmatprep.subr.bf16.mxu0 0
      %723 = vmatpush1.bf16.msra.mxu0 %v703
      %724 = vmatprep.subr.bf16.mxu0 0
      %725 = vmatpush1.bf16.msra.mxu0 %v704
      %726 = vmatprep.subr.bf16.mxu0 0
      %727 = vmatpush1.bf16.msra.mxu0 %v705
      %728 = vmatprep.subr.bf16.mxu0 0
      %729 = vmatpush1.bf16.msra.mxu0 %v706
      %730 = vmatprep.subr.bf16.mxu0 0
      %731 = vmatpush1.bf16.msra.mxu0 %v707
      %732 = vmatprep.subr.bf16.mxu0 0
      %733 = vmatpush1.bf16.msra.mxu0 0
      %734 = vmatprep.subr.bf16.mxu0 0
      %735 = vmatpush1.bf16.msra.mxu0 0
      %736 = vmatprep.subr.bf16.mxu0 0
      %737 = vmatpush1.bf16.msra.mxu0 0
      %738 = vmatprep.subr.bf16.mxu0 0
      %739 = vmatpush1.bf16.msra.mxu0 0
      %740 = vmatprep.subr.bf16.mxu0 0
      %741 = vmatpush1.bf16.msra.mxu0 0
      %742 = vmatprep.subr.bf16.mxu0 0
      %743 = vmatpush1.bf16.msra.mxu0 0
      %744 = vmatprep.subr.bf16.mxu0 0
      %745 = vmatpush1.bf16.msra.mxu0 0
      %746 = vmatprep.subr.bf16.mxu0 0
      %747 = vmatpush1.bf16.msra.mxu0 0
      %748 = vmatprep.mubr.bf16.mxu0 0
      %749 = vmatmul.mubr.bf16.gmra.mrb[0].mxu0 %v650
      %v750 = vpop.f32.mrb[0].mxu0
      %v751 = vadd.f32 0.0, %v750
      %v752 = vpop.f32.mrb[0].mxu0
      %v753 = vpop.f32.mrb[0].mxu0
      %v754 = vadd.f32 0.0, %v753
      %v755 = vpop.f32.mrb[0].mxu0
      %756 = vdwg.mxu0
      %v757 = vadd.f32 %v623, %v751
      %v758 = vadd.f32 %v624, %v754
      %v759 = vpack.c.bf16 %v641, %v640
      %s760 = scalar_lea.vmem %s1, 256
      %v761 = vld [vmem:[%s760] sm:$0xf]
      %v762 = vld [vmem:[%s760 + $0x4] sm:$0xf]
      %v763 = vld [vmem:[%s760 + $0x8] sm:$0xf]
      %v764 = vld [vmem:[%s760 + $0xc] sm:$0xf]
      %v765 = vld [vmem:[%s760 + $0x10] sm:$0xf]
      %v766 = vld [vmem:[%s760 + $0x14] sm:$0xf]
      %v767 = vld [vmem:[%s760 + $0x18] sm:$0xf]
      %v768 = vld [vmem:[%s760 + $0x1c] sm:$0xf]
      %v769 = vld [vmem:[%s760 + $0x20] sm:$0xf]
      %v770 = vld [vmem:[%s760 + $0x24] sm:$0xf]
      %v771 = vld [vmem:[%s760 + $0x28] sm:$0xf]
      %v772 = vld [vmem:[%s760 + $0x2c] sm:$0xf]
      %v773 = vld [vmem:[%s760 + $0x30] sm:$0xf]
      %v774 = vld [vmem:[%s760 + $0x34] sm:$0xf]
      %v775 = vld [vmem:[%s760 + $0x38] sm:$0xf]
      %v776 = vld [vmem:[%s760 + $0x3c] sm:$0xf]
      %v793 = vunpack.c.l.b16 %v761
      %v794 = vunpack.c.l.b16 %v762
      %v795 = vunpack.c.l.b16 %v763
      %v796 = vunpack.c.l.b16 %v764
      %v797 = vunpack.c.l.b16 %v765
      %v798 = vunpack.c.l.b16 %v766
      %v799 = vunpack.c.l.b16 %v767
      %v800 = vunpack.c.l.b16 %v768
      %v801 = vunpack.c.l.b16 %v769
      %v802 = vunpack.c.l.b16 %v770
      %v803 = vunpack.c.l.b16 %v771
      %v804 = vunpack.c.l.b16 %v772
      %v805 = vunpack.c.l.b16 %v773
      %v806 = vunpack.c.l.b16 %v774
      %v807 = vunpack.c.l.b16 %v775
      %v808 = vunpack.c.l.b16 %v776
      %v809 = vpack.c.b16 %v794, %v793
      %v810 = vpack.c.b16 %v796, %v795
      %v811 = vpack.c.b16 %v798, %v797
      %v812 = vpack.c.b16 %v800, %v799
      %v813 = vpack.c.b16 %v802, %v801
      %v814 = vpack.c.b16 %v804, %v803
      %v815 = vpack.c.b16 %v806, %v805
      %v816 = vpack.c.b16 %v808, %v807
      %825 = vmatprep.subr.bf16.mxu0 0
      %826 = vmatpush1.bf16.msra.mxu0 %v809
      %827 = vmatprep.subr.bf16.mxu0 0
      %828 = vmatpush1.bf16.msra.mxu0 %v810
      %829 = vmatprep.subr.bf16.mxu0 0
      %830 = vmatpush1.bf16.msra.mxu0 %v811
      %831 = vmatprep.subr.bf16.mxu0 0
      %832 = vmatpush1.bf16.msra.mxu0 %v812
      %833 = vmatprep.subr.bf16.mxu0 0
      %834 = vmatpush1.bf16.msra.mxu0 %v813
      %835 = vmatprep.subr.bf16.mxu0 0
      %836 = vmatpush1.bf16.msra.mxu0 %v814
      %837 = vmatprep.subr.bf16.mxu0 0
      %838 = vmatpush1.bf16.msra.mxu0 %v815
      %839 = vmatprep.subr.bf16.mxu0 0
      %840 = vmatpush1.bf16.msra.mxu0 %v816
      %841 = vmatprep.subr.bf16.mxu0 0
      %842 = vmatpush1.bf16.msra.mxu0 0
      %843 = vmatprep.subr.bf16.mxu0 0
      %844 = vmatpush1.bf16.msra.mxu0 0
      %845 = vmatprep.subr.bf16.mxu0 0
      %846 = vmatpush1.bf16.msra.mxu0 0
      %847 = vmatprep.subr.bf16.mxu0 0
      %848 = vmatpush1.bf16.msra.mxu0 0
      %849 = vmatprep.subr.bf16.mxu0 0
      %850 = vmatpush1.bf16.msra.mxu0 0
      %851 = vmatprep.subr.bf16.mxu0 0
      %852 = vmatpush1.bf16.msra.mxu0 0
      %853 = vmatprep.subr.bf16.mxu0 0
      %854 = vmatpush1.bf16.msra.mxu0 0
      %855 = vmatprep.subr.bf16.mxu0 0
      %856 = vmatpush1.bf16.msra.mxu0 0
      %857 = vmatprep.mubr.bf16.mxu0 0
      %858 = vmatmul.mubr.bf16.gmra.mrb[0].mxu0 %v759
      %v859 = vpop.f32.mrb[0].mxu0
      %v860 = vadd.f32 0.0, %v859
      %v861 = vpop.f32.mrb[0].mxu0
      %v862 = vpop.f32.mrb[0].mxu0
      %v863 = vadd.f32 0.0, %v862
      %v864 = vpop.f32.mrb[0].mxu0
      %865 = vdwg.mxu0
      %v866 = vadd.f32 %v757, %v860
      %v867 = vadd.f32 %v758, %v863
      %v868 = vrot.slane %v640, 1
      %v869 = vrot.slane %v641, 1
      %v870 = vsel %vm509, %v868, %v869
      %v873 = vsel %vm509, %v869, 0.0
      %v874 = vpack.c.bf16 %v873, %v870
      %s875 = scalar_lea.vmem %s1, 320
      %v876 = vld [vmem:[%s875] sm:$0xf]
      %v877 = vld [vmem:[%s875 + $0x4] sm:$0xf]
      %v878 = vld [vmem:[%s875 + $0x8] sm:$0xf]
      %v879 = vld [vmem:[%s875 + $0xc] sm:$0xf]
      %v880 = vld [vmem:[%s875 + $0x10] sm:$0xf]
      %v881 = vld [vmem:[%s875 + $0x14] sm:$0xf]
      %v882 = vld [vmem:[%s875 + $0x18] sm:$0xf]
      %v883 = vld [vmem:[%s875 + $0x1c] sm:$0xf]
      %v884 = vld [vmem:[%s875 + $0x20] sm:$0xf]
      %v885 = vld [vmem:[%s875 + $0x24] sm:$0xf]
      %v886 = vld [vmem:[%s875 + $0x28] sm:$0xf]
      %v887 = vld [vmem:[%s875 + $0x2c] sm:$0xf]
      %v888 = vld [vmem:[%s875 + $0x30] sm:$0xf]
      %v889 = vld [vmem:[%s875 + $0x34] sm:$0xf]
      %v890 = vld [vmem:[%s875 + $0x38] sm:$0xf]
      %v891 = vld [vmem:[%s875 + $0x3c] sm:$0xf]
      %v908 = vunpack.c.l.b16 %v876
      %v909 = vunpack.c.l.b16 %v877
      %v910 = vunpack.c.l.b16 %v878
      %v911 = vunpack.c.l.b16 %v879
      %v912 = vunpack.c.l.b16 %v880
      %v913 = vunpack.c.l.b16 %v881
      %v914 = vunpack.c.l.b16 %v882
      %v915 = vunpack.c.l.b16 %v883
      %v916 = vunpack.c.l.b16 %v884
      %v917 = vunpack.c.l.b16 %v885
      %v918 = vunpack.c.l.b16 %v886
      %v919 = vunpack.c.l.b16 %v887
      %v920 = vunpack.c.l.b16 %v888
      %v921 = vunpack.c.l.b16 %v889
      %v922 = vunpack.c.l.b16 %v890
      %v923 = vunpack.c.l.b16 %v891
      %v924 = vpack.c.b16 %v909, %v908
      %v925 = vpack.c.b16 %v911, %v910
      %v926 = vpack.c.b16 %v913, %v912
      %v927 = vpack.c.b16 %v915, %v914
      %v928 = vpack.c.b16 %v917, %v916
      %v929 = vpack.c.b16 %v919, %v918
      %v930 = vpack.c.b16 %v921, %v920
      %v931 = vpack.c.b16 %v923, %v922
      %940 = vmatprep.subr.bf16.mxu0 0
      %941 = vmatpush1.bf16.msra.mxu0 %v924
      %942 = vmatprep.subr.bf16.mxu0 0
      %943 = vmatpush1.bf16.msra.mxu0 %v925
      %944 = vmatprep.subr.bf16.mxu0 0
      %945 = vmatpush1.bf16.msra.mxu0 %v926
      %946 = vmatprep.subr.bf16.mxu0 0
      %947 = vmatpush1.bf16.msra.mxu0 %v927
      %948 = vmatprep.subr.bf16.mxu0 0
      %949 = vmatpush1.bf16.msra.mxu0 %v928
      %950 = vmatprep.subr.bf16.mxu0 0
      %951 = vmatpush1.bf16.msra.mxu0 %v929
      %952 = vmatprep.subr.bf16.mxu0 0
      %953 = vmatpush1.bf16.msra.mxu0 %v930
      %954 = vmatprep.subr.bf16.mxu0 0
      %955 = vmatpush1.bf16.msra.mxu0 %v931
      %956 = vmatprep.subr.bf16.mxu0 0
      %957 = vmatpush1.bf16.msra.mxu0 0
      %958 = vmatprep.subr.bf16.mxu0 0
      %959 = vmatpush1.bf16.msra.mxu0 0
      %960 = vmatprep.subr.bf16.mxu0 0
      %961 = vmatpush1.bf16.msra.mxu0 0
      %962 = vmatprep.subr.bf16.mxu0 0
      %963 = vmatpush1.bf16.msra.mxu0 0
      %964 = vmatprep.subr.bf16.mxu0 0
      %965 = vmatpush1.bf16.msra.mxu0 0
      %966 = vmatprep.subr.bf16.mxu0 0
      %967 = vmatpush1.bf16.msra.mxu0 0
      %968 = vmatprep.subr.bf16.mxu0 0
      %969 = vmatpush1.bf16.msra.mxu0 0
      %970 = vmatprep.subr.bf16.mxu0 0
      %971 = vmatpush1.bf16.msra.mxu0 0
      %972 = vmatprep.mubr.bf16.mxu0 0
      %973 = vmatmul.mubr.bf16.gmra.mrb[0].mxu0 %v874
      %v974 = vpop.f32.mrb[0].mxu0
      %v975 = vadd.f32 0.0, %v974
      %v976 = vpop.f32.mrb[0].mxu0
      %v977 = vpop.f32.mrb[0].mxu0
      %v978 = vadd.f32 0.0, %v977
      %v979 = vpop.f32.mrb[0].mxu0
      %980 = vdwg.mxu0
      %v981 = vadd.f32 %v866, %v975
      %v982 = vadd.f32 %v867, %v978
      %s983 = sadd.s32 %s22, 1
      %p984 = scmp.gt.s32.totalorder %s983, 0
      %s985 = scalar_select %p984, %s983, 0
      %p986 = scmp.lt.s32.totalorder %s985, 3
      %s987 = scalar_select %p986, %s985, 3
      %s988 = smul.u32 %s987, 16
      %s989 = scalar_lea.vmem %s250, %s988
      %v990 = vld [vmem:[%s989] sm:$0xff]
      %v991 = vld [vmem:[%s989 + $0x8] sm:$0xff]
      %p992 = scmp.ge.s32.totalorder %s983, 0
      %p993 = scmp.lt.s32.totalorder %s983, 4
      %p994 = pnand %p992, %p993
      %p995 = pneg %p994
      %s996 = scalar_select %p995, 1, 0
      %v997 = vstv %s996
      %vm998 = vcmp.eq.s32.totalorder %v997, 1
      %v999 = vsel %vm998, %v990, 0.0
      %v1000 = vsel %vm998, %v991, 0.0
      %v1003 = vrot.slane %v999, 7
      %v1004 = vrot.slane %v1000, 7
      %v1005 = vsel %vm289, %v1003, %v1004
      %v1008 = vsel %vm289, 0.0, %v1003
      %v1009 = vpack.c.bf16 %v1005, %v1008
      %s1010 = scalar_lea.vmem %s1, 384
      %v1011 = vld [vmem:[%s1010] sm:$0xf]
      %v1012 = vld [vmem:[%s1010 + $0x4] sm:$0xf]
      %v1013 = vld [vmem:[%s1010 + $0x8] sm:$0xf]
      %v1014 = vld [vmem:[%s1010 + $0xc] sm:$0xf]
      %v1015 = vld [vmem:[%s1010 + $0x10] sm:$0xf]
      %v1016 = vld [vmem:[%s1010 + $0x14] sm:$0xf]
      %v1017 = vld [vmem:[%s1010 + $0x18] sm:$0xf]
      %v1018 = vld [vmem:[%s1010 + $0x1c] sm:$0xf]
      %v1019 = vld [vmem:[%s1010 + $0x20] sm:$0xf]
      %v1020 = vld [vmem:[%s1010 + $0x24] sm:$0xf]
      %v1021 = vld [vmem:[%s1010 + $0x28] sm:$0xf]
      %v1022 = vld [vmem:[%s1010 + $0x2c] sm:$0xf]
      %v1023 = vld [vmem:[%s1010 + $0x30] sm:$0xf]
      %v1024 = vld [vmem:[%s1010 + $0x34] sm:$0xf]
      %v1025 = vld [vmem:[%s1010 + $0x38] sm:$0xf]
      %v1026 = vld [vmem:[%s1010 + $0x3c] sm:$0xf]
      %v1043 = vunpack.c.l.b16 %v1011
      %v1044 = vunpack.c.l.b16 %v1012
      %v1045 = vunpack.c.l.b16 %v1013
      %v1046 = vunpack.c.l.b16 %v1014
      %v1047 = vunpack.c.l.b16 %v1015
      %v1048 = vunpack.c.l.b16 %v1016
      %v1049 = vunpack.c.l.b16 %v1017
      %v1050 = vunpack.c.l.b16 %v1018
      %v1051 = vunpack.c.l.b16 %v1019
      %v1052 = vunpack.c.l.b16 %v1020
      %v1053 = vunpack.c.l.b16 %v1021
      %v1054 = vunpack.c.l.b16 %v1022
      %v1055 = vunpack.c.l.b16 %v1023
      %v1056 = vunpack.c.l.b16 %v1024
      %v1057 = vunpack.c.l.b16 %v1025
      %v1058 = vunpack.c.l.b16 %v1026
      %v1059 = vpack.c.b16 %v1044, %v1043
      %v1060 = vpack.c.b16 %v1046, %v1045
      %v1061 = vpack.c.b16 %v1048, %v1047
      %v1062 = vpack.c.b16 %v1050, %v1049
      %v1063 = vpack.c.b16 %v1052, %v1051
      %v1064 = vpack.c.b16 %v1054, %v1053
      %v1065 = vpack.c.b16 %v1056, %v1055
      %v1066 = vpack.c.b16 %v1058, %v1057
      %1075 = vmatprep.subr.bf16.mxu0 0
      %1076 = vmatpush1.bf16.msra.mxu0 %v1059
      %1077 = vmatprep.subr.bf16.mxu0 0
      %1078 = vmatpush1.bf16.msra.mxu0 %v1060
      %1079 = vmatprep.subr.bf16.mxu0 0
      %1080 = vmatpush1.bf16.msra.mxu0 %v1061
      %1081 = vmatprep.subr.bf16.mxu0 0
      %1082 = vmatpush1.bf16.msra.mxu0 %v1062
      %1083 = vmatprep.subr.bf16.mxu0 0
      %1084 = vmatpush1.bf16.msra.mxu0 %v1063
      %1085 = vmatprep.subr.bf16.mxu0 0
      %1086 = vmatpush1.bf16.msra.mxu0 %v1064
      %1087 = vmatprep.subr.bf16.mxu0 0
      %1088 = vmatpush1.bf16.msra.mxu0 %v1065
      %1089 = vmatprep.subr.bf16.mxu0 0
      %1090 = vmatpush1.bf16.msra.mxu0 %v1066
      %1091 = vmatprep.subr.bf16.mxu0 0
      %1092 = vmatpush1.bf16.msra.mxu0 0
      %1093 = vmatprep.subr.bf16.mxu0 0
      %1094 = vmatpush1.bf16.msra.mxu0 0
      %1095 = vmatprep.subr.bf16.mxu0 0
      %1096 = vmatpush1.bf16.msra.mxu0 0
      %1097 = vmatprep.subr.bf16.mxu0 0
      %1098 = vmatpush1.bf16.msra.mxu0 0
      %1099 = vmatprep.subr.bf16.mxu0 0
      %1100 = vmatpush1.bf16.msra.mxu0 0
      %1101 = vmatprep.subr.bf16.mxu0 0
      %1102 = vmatpush1.bf16.msra.mxu0 0
      %1103 = vmatprep.subr.bf16.mxu0 0
      %1104 = vmatpush1.bf16.msra.mxu0 0
      %1105 = vmatprep.subr.bf16.mxu0 0
      %1106 = vmatpush1.bf16.msra.mxu0 0
      %1107 = vmatprep.mubr.bf16.mxu0 0
      %1108 = vmatmul.mubr.bf16.gmra.mrb[0].mxu0 %v1009
      %v1109 = vpop.f32.mrb[0].mxu0
      %v1110 = vadd.f32 0.0, %v1109
      %v1111 = vpop.f32.mrb[0].mxu0
      %v1112 = vpop.f32.mrb[0].mxu0
      %v1113 = vadd.f32 0.0, %v1112
      %v1114 = vpop.f32.mrb[0].mxu0
      %1115 = vdwg.mxu0
      %v1116 = vadd.f32 %v981, %v1110
      %v1117 = vadd.f32 %v982, %v1113
      %v1118 = vpack.c.bf16 %v1000, %v999
      %s1119 = scalar_lea.vmem %s1, 448
      %v1120 = vld [vmem:[%s1119] sm:$0xf]
      %v1121 = vld [vmem:[%s1119 + $0x4] sm:$0xf]
      %v1122 = vld [vmem:[%s1119 + $0x8] sm:$0xf]
      %v1123 = vld [vmem:[%s1119 + $0xc] sm:$0xf]
      %v1124 = vld [vmem:[%s1119 + $0x10] sm:$0xf]
      %v1125 = vld [vmem:[%s1119 + $0x14] sm:$0xf]
      %v1126 = vld [vmem:[%s1119 + $0x18] sm:$0xf]
      %v1127 = vld [vmem:[%s1119 + $0x1c] sm:$0xf]
      %v1128 = vld [vmem:[%s1119 + $0x20] sm:$0xf]
      %v1129 = vld [vmem:[%s1119 + $0x24] sm:$0xf]
      %v1130 = vld [vmem:[%s1119 + $0x28] sm:$0xf]
      %v1131 = vld [vmem:[%s1119 + $0x2c] sm:$0xf]
      %v1132 = vld [vmem:[%s1119 + $0x30] sm:$0xf]
      %v1133 = vld [vmem:[%s1119 + $0x34] sm:$0xf]
      %v1134 = vld [vmem:[%s1119 + $0x38] sm:$0xf]
      %v1135 = vld [vmem:[%s1119 + $0x3c] sm:$0xf]
      %v1152 = vunpack.c.l.b16 %v1120
      %v1153 = vunpack.c.l.b16 %v1121
      %v1154 = vunpack.c.l.b16 %v1122
      %v1155 = vunpack.c.l.b16 %v1123
      %v1156 = vunpack.c.l.b16 %v1124
      %v1157 = vunpack.c.l.b16 %v1125
      %v1158 = vunpack.c.l.b16 %v1126
      %v1159 = vunpack.c.l.b16 %v1127
      %v1160 = vunpack.c.l.b16 %v1128
      %v1161 = vunpack.c.l.b16 %v1129
      %v1162 = vunpack.c.l.b16 %v1130
      %v1163 = vunpack.c.l.b16 %v1131
      %v1164 = vunpack.c.l.b16 %v1132
      %v1165 = vunpack.c.l.b16 %v1133
      %v1166 = vunpack.c.l.b16 %v1134
      %v1167 = vunpack.c.l.b16 %v1135
      %v1168 = vpack.c.b16 %v1153, %v1152
      %v1169 = vpack.c.b16 %v1155, %v1154
      %v1170 = vpack.c.b16 %v1157, %v1156
      %v1171 = vpack.c.b16 %v1159, %v1158
      %v1172 = vpack.c.b16 %v1161, %v1160
      %v1173 = vpack.c.b16 %v1163, %v1162
      %v1174 = vpack.c.b16 %v1165, %v1164
      %v1175 = vpack.c.b16 %v1167, %v1166
      %1184 = vmatprep.subr.bf16.mxu0 0
      %1185 = vmatpush1.bf16.msra.mxu0 %v1168
      %1186 = vmatprep.subr.bf16.mxu0 0
      %1187 = vmatpush1.bf16.msra.mxu0 %v1169
      %1188 = vmatprep.subr.bf16.mxu0 0
      %1189 = vmatpush1.bf16.msra.mxu0 %v1170
      %1190 = vmatprep.subr.bf16.mxu0 0
      %1191 = vmatpush1.bf16.msra.mxu0 %v1171
      %1192 = vmatprep.subr.bf16.mxu0 0
      %1193 = vmatpush1.bf16.msra.mxu0 %v1172
      %1194 = vmatprep.subr.bf16.mxu0 0
      %1195 = vmatpush1.bf16.msra.mxu0 %v1173
      %1196 = vmatprep.subr.bf16.mxu0 0
      %1197 = vmatpush1.bf16.msra.mxu0 %v1174
      %1198 = vmatprep.subr.bf16.mxu0 0
      %1199 = vmatpush1.bf16.msra.mxu0 %v1175
      %1200 = vmatprep.subr.bf16.mxu0 0
      %1201 = vmatpush1.bf16.msra.mxu0 0
      %1202 = vmatprep.subr.bf16.mxu0 0
      %1203 = vmatpush1.bf16.msra.mxu0 0
      %1204 = vmatprep.subr.bf16.mxu0 0
      %1205 = vmatpush1.bf16.msra.mxu0 0
      %1206 = vmatprep.subr.bf16.mxu0 0
      %1207 = vmatpush1.bf16.msra.mxu0 0
      %1208 = vmatprep.subr.bf16.mxu0 0
      %1209 = vmatpush1.bf16.msra.mxu0 0
      %1210 = vmatprep.subr.bf16.mxu0 0
      %1211 = vmatpush1.bf16.msra.mxu0 0
      %1212 = vmatprep.subr.bf16.mxu0 0
      %1213 = vmatpush1.bf16.msra.mxu0 0
      %1214 = vmatprep.subr.bf16.mxu0 0
      %1215 = vmatpush1.bf16.msra.mxu0 0
      %1216 = vmatprep.mubr.bf16.mxu0 0
      %1217 = vmatmul.mubr.bf16.gmra.mrb[0].mxu0 %v1118
      %v1218 = vpop.f32.mrb[0].mxu0
      %v1219 = vadd.f32 0.0, %v1218
      %v1220 = vpop.f32.mrb[0].mxu0
      %v1221 = vpop.f32.mrb[0].mxu0
      %v1222 = vadd.f32 0.0, %v1221
      %v1223 = vpop.f32.mrb[0].mxu0
      %1224 = vdwg.mxu0
      %v1225 = vadd.f32 %v1116, %v1219
      %v1226 = vadd.f32 %v1117, %v1222
      %v1227 = vrot.slane %v999, 1
      %v1228 = vrot.slane %v1000, 1
      %v1229 = vsel %vm509, %v1227, %v1228
      %v1232 = vsel %vm509, %v1228, 0.0
      %v1233 = vpack.c.bf16 %v1232, %v1229
      %s1234 = scalar_lea.vmem %s1, 512
      %v1235 = vld [vmem:[%s1234] sm:$0xf]
      %v1236 = vld [vmem:[%s1234 + $0x4] sm:$0xf]
      %v1237 = vld [vmem:[%s1234 + $0x8] sm:$0xf]
      %v1238 = vld [vmem:[%s1234 + $0xc] sm:$0xf]
      %v1239 = vld [vmem:[%s1234 + $0x10] sm:$0xf]
      %v1240 = vld [vmem:[%s1234 + $0x14] sm:$0xf]
      %v1241 = vld [vmem:[%s1234 + $0x18] sm:$0xf]
      %v1242 = vld [vmem:[%s1234 + $0x1c] sm:$0xf]
      %v1243 = vld [vmem:[%s1234 + $0x20] sm:$0xf]
      %v1244 = vld [vmem:[%s1234 + $0x24] sm:$0xf]
      %v1245 = vld [vmem:[%s1234 + $0x28] sm:$0xf]
      %v1246 = vld [vmem:[%s1234 + $0x2c] sm:$0xf]
      %v1247 = vld [vmem:[%s1234 + $0x30] sm:$0xf]
      %v1248 = vld [vmem:[%s1234 + $0x34] sm:$0xf]
      %v1249 = vld [vmem:[%s1234 + $0x38] sm:$0xf]
      %v1250 = vld [vmem:[%s1234 + $0x3c] sm:$0xf]
      %v1267 = vunpack.c.l.b16 %v1235
      %v1268 = vunpack.c.l.b16 %v1236
      %v1269 = vunpack.c.l.b16 %v1237
      %v1270 = vunpack.c.l.b16 %v1238
      %v1271 = vunpack.c.l.b16 %v1239
      %v1272 = vunpack.c.l.b16 %v1240
      %v1273 = vunpack.c.l.b16 %v1241
      %v1274 = vunpack.c.l.b16 %v1242
      %v1275 = vunpack.c.l.b16 %v1243
      %v1276 = vunpack.c.l.b16 %v1244
      %v1277 = vunpack.c.l.b16 %v1245
      %v1278 = vunpack.c.l.b16 %v1246
      %v1279 = vunpack.c.l.b16 %v1247
      %v1280 = vunpack.c.l.b16 %v1248
      %v1281 = vunpack.c.l.b16 %v1249
      %v1282 = vunpack.c.l.b16 %v1250
      %v1283 = vpack.c.b16 %v1268, %v1267
      %v1284 = vpack.c.b16 %v1270, %v1269
      %v1285 = vpack.c.b16 %v1272, %v1271
      %v1286 = vpack.c.b16 %v1274, %v1273
      %v1287 = vpack.c.b16 %v1276, %v1275
      %v1288 = vpack.c.b16 %v1278, %v1277
      %v1289 = vpack.c.b16 %v1280, %v1279
      %v1290 = vpack.c.b16 %v1282, %v1281
      %1299 = vmatprep.subr.bf16.mxu0 0
      %1300 = vmatpush1.bf16.msra.mxu0 %v1283
      %1301 = vmatprep.subr.bf16.mxu0 0
      %1302 = vmatpush1.bf16.msra.mxu0 %v1284
      %1303 = vmatprep.subr.bf16.mxu0 0
      %1304 = vmatpush1.bf16.msra.mxu0 %v1285
      %1305 = vmatprep.subr.bf16.mxu0 0
      %1306 = vmatpush1.bf16.msra.mxu0 %v1286
      %1307 = vmatprep.subr.bf16.mxu0 0
      %1308 = vmatpush1.bf16.msra.mxu0 %v1287
      %1309 = vmatprep.subr.bf16.mxu0 0
      %1310 = vmatpush1.bf16.msra.mxu0 %v1288
      %1311 = vmatprep.subr.bf16.mxu0 0
      %1312 = vmatpush1.bf16.msra.mxu0 %v1289
      %1313 = vmatprep.subr.bf16.mxu0 0
      %1314 = vmatpush1.bf16.msra.mxu0 %v1290
      %1315 = vmatprep.subr.bf16.mxu0 0
      %1316 = vmatpush1.bf16.msra.mxu0 0
      %1317 = vmatprep.subr.bf16.mxu0 0
      %1318 = vmatpush1.bf16.msra.mxu0 0
      %1319 = vmatprep.subr.bf16.mxu0 0
      %1320 = vmatpush1.bf16.msra.mxu0 0
      %1321 = vmatprep.subr.bf16.mxu0 0
      %1322 = vmatpush1.bf16.msra.mxu0 0
      %1323 = vmatprep.subr.bf16.mxu0 0
      %1324 = vmatpush1.bf16.msra.mxu0 0
      %1325 = vmatprep.subr.bf16.mxu0 0
      %1326 = vmatpush1.bf16.msra.mxu0 0
      %1327 = vmatprep.subr.bf16.mxu0 0
      %1328 = vmatpush1.bf16.msra.mxu0 0
      %1329 = vmatprep.subr.bf16.mxu0 0
      %1330 = vmatpush1.bf16.msra.mxu0 0
      %1331 = vmatprep.mubr.bf16.mxu0 0
      %1332 = vmatmul.mubr.bf16.gmra.mrb[0].mxu0 %v1233
      %v1333 = vpop.f32.mrb[0].mxu0
      %v1334 = vadd.f32 0.0, %v1333
      %v1335 = vpop.f32.mrb[0].mxu0
      %v1336 = vpop.f32.mrb[0].mxu0
      %v1337 = vadd.f32 0.0, %v1336
      %v1338 = vpop.f32.mrb[0].mxu0
      %1339 = vdwg.mxu0
      %v1340 = vadd.f32 %v1225, %v1334
      %v1341 = vadd.f32 %v1226, %v1337
      %1342 = vst [vmem:[%s259] sm:$0xff] %v1340
      %1343 = vst [vmem:[%s259 + $0x8] sm:$0xff] %v1341
      %v1344 = vadd.f32 %v1340, %v1341
      %v1345 = vrot.slane %v1344, 4
      %v1346 = vadd.f32 %v1344, %v1345
      %v1347 = vrot.slane %v1346, 2
      %v1348 = vadd.f32 %v1346, %v1347
      %v1349 = vrot.slane %v1348, 1
      %v1350 = vadd.f32 %v1348, %v1349
      %v1351 = vmul.f32 %v1340, %v1340
      %v1352 = vmul.f32 %v1341, %v1341
      %v1353 = vadd.f32 %v1351, %v1352
      %v1354 = vrot.slane %v1353, 4
      %v1355 = vadd.f32 %v1353, %v1354
      %v1356 = vrot.slane %v1355, 2
      %v1357 = vadd.f32 %v1355, %v1356
      %v1358 = vrot.slane %v1357, 1
      %v1359 = vadd.f32 %v1357, %v1358
      %v1360 = vsel %vm289, %v1350, %v1359
      %vm1361 = vcmask 1041408
      %v1362 = vsel %vm1361, %v1360, 0.0
      %1363 = vst [vmem:[%s267] sm:$0xff] %v1362
      %p1364 = scmp.lt.s32.totalorder %s21, 1
      %s1365 = scalar_select %p1364, %s21, 1
      %p1366 = scmp.lt.s32.totalorder %s22, 3
      %s1367 = scalar_select %p1366, %s22, 3
      %s1368 = smul.addr %s1367, 2
      %s1369 = smul.addr %s1365, 8
      %s1370 = sadd.s32 %s1368, %s1369
      %s1371 = smul.addr %s1370, 8
      %s1372 = scalar_lea.vmem %s4, %s1371
      %p1373 = scmp.lt.s32.totalorder %s21, 1
      %s1374 = scalar_select %p1373, %s21, 1
      %p1375 = scmp.lt.s32.totalorder %s22, 3
      %s1376 = scalar_select %p1375, %s22, 3
      %s1377 = smul.addr %s1374, 4
      %s1378 = sadd.s32 %s1376, %s1377
      %s1379 = smul.addr %s1378, 8
      %s1380 = scalar_lea.vmem %s5, %s1379
      // Predicated region
      $region37: #{decoder_block_forward.3} parent=35 // pred_check
        %p1381 = pneg %p138
      $region38: #{decoder_block_forward.3} parent=35 // pred_check_branch
        %1383 = sbr.rel (%p1381) target = $region40
      $region39: #{decoder_block_forward.3} parent=35 // pred_region
        _
      $region40: #{decoder_block_forward.3} parent=35 // pred_fallthru
        _
      // Predicated region
      $region41: #{decoder_block_forward.3} parent=35 // pred_check
        %p1384 = pneg %p166
      $region42: #{decoder_block_forward.3} parent=35 // pred_check_branch
        %1386 = sbr.rel (%p1384) target = $region44
      $region43: #{decoder_block_forward.3} parent=35 // pred_region
        _
      $region44: #{decoder_block_forward.3} parent=35 // pred_fallthru
        _
    $region36: #{decoder_block_forward.3} parent=5 // pred_fallthru
      _
    %p1387 = scmp.le.s32.totalorder 2, %s12
    // Predicated region
    $region45: #{decoder_block_forward.3} parent=5 // pred_check
      %p1388 = pneg %p1387
    $region46: #{decoder_block_forward.3} parent=5 // pred_check_branch
      %1390 = sbr.rel (%p1388) target = $region48
    $region47: #{decoder_block_forward.3} parent=5 // pred_region
      %s1391 = ssub.s32 %s12, 2
      // Predicated region
      $region49: #{decoder_block_forward.3} parent=47 // pred_check
        %p1392 = pneg %p144
      $region50: #{decoder_block_forward.3} parent=47 // pred_check_branch
        %1394 = sbr.rel (%p1392) target = $region52
      $region51: #{decoder_block_forward.3} parent=47 // pred_region
        %p1395 = scmp.lt.s32.totalorder %s23, 1
        %s1396 = scalar_select %p1395, %s23, 1
        %p1397 = scmp.lt.s32.totalorder %s24, 3
        %s1398 = scalar_select %p1397, %s24, 3
        %s1399 = smul.addr %s1398, 2
        %s1400 = smul.addr %s1396, 8
        %s1401 = sadd.s32 %s1399, %s1400
        %s1402 = smul.addr %s1401, 8
        %s1403 = scalar_lea.vmem %s4, %s1402
      $region52: #{decoder_block_forward.3} parent=47 // pred_fallthru
        _
      // Predicated region
      $region53: #{decoder_block_forward.3} parent=47 // pred_check
        %p1404 = pneg %p172
      $region54: #{decoder_block_forward.3} parent=47 // pred_check_branch
        %1406 = sbr.rel (%p1404) target = $region56
      $region55: #{decoder_block_forward.3} parent=47 // pred_region
        %p1407 = scmp.lt.s32.totalorder %s23, 1
        %s1408 = scalar_select %p1407, %s23, 1
        %p1409 = scmp.lt.s32.totalorder %s24, 3
        %s1410 = scalar_select %p1409, %s24, 3
        %s1411 = smul.addr %s1408, 4
        %s1412 = sadd.s32 %s1410, %s1411
        %s1413 = smul.addr %s1412, 8
        %s1414 = scalar_lea.vmem %s5, %s1413
      $region56: #{decoder_block_forward.3} parent=47 // pred_fallthru
        _
    $region48: #{decoder_block_forward.3} parent=5 // pred_fallthru
      _
  $region6: #{decoder_block_forward.3} parent=0 // loop_footer
    %s16 = sadd.s32 1, %s12
  $region7: #{decoder_block_forward.3} parent=0 // loop_footer_branch
    %11 = sbr.rel target = $region3
  $region8: #{decoder_block_forward.3} parent=0 // loop_exit
    _

// kernel: tile.28
$region0: #{tile.28}
  #allocation0 [shape = 's32[1]{0}', space=sflag, size = 0x4, scoped, tag = 'scoped memory for tile.28']
  %s0 = inlined_call_operand.vmem [shape: f32[8], index: 0, kind: input, shape index: {}]
  %s1 = inlined_call_operand.vmem [shape: f32[16,8], index: 1, kind: output, shape index: {}]
  // Predicated region
  $region2: #{tile.28} parent=0 // pred_check
    _
  $region3: #{tile.28} parent=0 // pred_check_branch
    %3 = sbr.rel (0) target = $region5
  $region4: #{tile.28} parent=0 // pred_region
    _
  $region5: #{tile.28} parent=0 // pred_fallthru
    _
  %v4 = vld [vmem:[%s0] ss:$0 sm:$0xff]
  %5 = vst [vmem:[%s1] sm:$0xff] %v4
  %s6 = scalar_lea.vmem %s1, 8
  %7 = vst [vmem:[%s6] sm:$0xff] %v4

// kernel: tile.29
$region0: #{tile.29}
  %s0 = inlined_call_operand.vmem [shape: f32[16,8], index: 0, kind: input, shape index: {}]
  %s1 = inlined_call_operand.vmem [shape: f32[1,128], index: 1, kind: output, shape index: {}]
  $region1: #{tile.29} parent=0
    #allocation0 [shape = 'u8[4096]{0}', space=vmem, size = 0x1000, scoped, tag = 'scoped mem for output reshape']
    %v2 = vld [vmem:[%s0] sm:$0x1]
    %vm3 = vcmask 64512
    %4 = vst.msk [vmem:[#allocation0] sm:$0x1] %vm3, %v2
    %s5 = scalar_lea.vmem %s0, 15
    %v6 = vld [vmem:[%s5] sm:$0x1]
    %7 = vrot.lane.b32.xlu0 %v6, 120
    %v8 = vpop.permute.xlu0 %7
    %vm9 = vcmask 1048512
    %10 = vst.msk [vmem:[#allocation0] sm:$0x1] %vm9, %v8
    %s11 = scalar_lea.vmem %s0, 14
    %v12 = vld [vmem:[%s11] sm:$0x1]
    %13 = vrot.lane.b32.xlu0 %v12, 112
    %v14 = vpop.permute.xlu0 %13
    %vm15 = vcmask 982912
    %16 = vst.msk [vmem:[#allocation0] sm:$0x1] %vm15, %v14
    %s17 = scalar_lea.vmem %s0, 13
    %v18 = vld [vmem:[%s17] sm:$0x1]
    %19 = vrot.lane.b32.xlu0 %v18, 104
    %v20 = vpop.permute.xlu0 %19
    %vm21 = vcmask 917312
    %22 = vst.msk [vmem:[#allocation0] sm:$0x1] %vm21, %v20
    %s23 = scalar_lea.vmem %s0, 12
    %v24 = vld [vmem:[%s23] sm:$0x1]
    %25 = vrot.lane.b32.xlu0 %v24, 96
    %v26 = vpop.permute.xlu0 %25
    %vm27 = vcmask 851712
    %28 = vst.msk [vmem:[#allocation0] sm:$0x1] %vm27, %v26
    %s29 = scalar_lea.vmem %s0, 11
    %v30 = vld [vmem:[%s29] sm:$0x1]
    %31 = vrot.lane.b32.xlu0 %v30, 88
    %v32 = vpop.permute.xlu0 %31
    %vm33 = vcmask 786112
    %34 = vst.msk [vmem:[#allocation0] sm:$0x1] %vm33, %v32
    %s35 = scalar_lea.vmem %s0, 10
    %v36 = vld [vmem:[%s35] sm:$0x1]
    %37 = vrot.lane.b32.xlu0 %v36, 80
    %v38 = vpop.permute.xlu0 %37
    %vm39 = vcmask 720512
    %40 = vst.msk [vmem:[#allocation0] sm:$0x1] %vm39, %v38
    %s41 = scalar_lea.vmem %s0, 9
    %v42 = vld [vmem:[%s41] sm:$0x1]
    %43 = vrot.lane.b32.xlu0 %v42, 72
    %v44 = vpop.permute.xlu0 %43
    %vm45 = vcmask 654912
    %46 = vst.msk [vmem:[#allocation0] sm:$0x1] %vm45, %v44
    %s47 = scalar_lea.vmem %s0, 8
    %v48 = vld [vmem:[%s47] sm:$0x1]
    %49 = vrot.lane.b32.xlu0 %v48, 64
    %v50 = vpop.permute.xlu0 %49
    %vm51 = vcmask 589312
    %52 = vst.msk [vmem:[#allocation0] sm:$0x1] %vm51, %v50
    %s53 = scalar_lea.vmem %s0, 7
    %v54 = vld [vmem:[%s53] sm:$0x1]
    %55 = vrot.lane.b32.xlu0 %v54, 56
    %v56 = vpop.permute.xlu0 %55
    %vm57 = vcmask 523712
    %58 = vst.msk [vmem:[#allocation0] sm:$0x1] %vm57, %v56
    %s59 = scalar_lea.vmem %s0, 6
    %v60 = vld [vmem:[%s59] sm:$0x1]
    %61 = vrot.lane.b32.xlu0 %v60, 48
    %v62 = vpop.permute.xlu0 %61
    %vm63 = vcmask 458112
    %64 = vst.msk [vmem:[#allocation0] sm:$0x1] %vm63, %v62
    %s65 = scalar_lea.vmem %s0, 5
    %v66 = vld [vmem:[%s65] sm:$0x1]
    %67 = vrot.lane.b32.xlu0 %v66, 40
    %v68 = vpop.permute.xlu0 %67
    %vm69 = vcmask 392512
    %70 = vst.msk [vmem:[#allocation0] sm:$0x1] %vm69, %v68
    %s71 = scalar_lea.vmem %s0, 4
    %v72 = vld [vmem:[%s71] sm:$0x1]
    %73 = vrot.lane.b32.xlu0 %v72, 32
    %v74 = vpop.permute.xlu0 %73
    %vm75 = vcmask 326912
    %76 = vst.msk [vmem:[#allocation0] sm:$0x1] %vm75, %v74
    %s77 = scalar_lea.vmem %s0, 3
    %v78 = vld [vmem:[%s77] sm:$0x1]
    %79 = vrot.lane.b32.xlu0 %v78, 24
    %v80 = vpop.permute.xlu0 %79
    %vm81 = vcmask 261312
    %82 = vst.msk [vmem:[#allocation0] sm:$0x1] %vm81, %v80
    %s83 = scalar_lea.vmem %s0, 2
    %v84 = vld [vmem:[%s83] sm:$0x1]
    %85 = vrot.lane.b32.xlu0 %v84, 16
    %v86 = vpop.permute.xlu0 %85
    %vm87 = vcmask 195712
    %88 = vst.msk [vmem:[#allocation0] sm:$0x1] %vm87, %v86
    %s89 = scalar_lea.vmem %s0, 1
    %v90 = vld [vmem:[%s89] sm:$0x1]
    %91 = vrot.lane.b32.xlu0 %v90, 8
    %v92 = vpop.permute.xlu0 %91
    %vm93 = vcmask 130112
    %94 = vst.msk [vmem:[#allocation0] sm:$0x1] %vm93, %v92
    %s96 = sshllo.u32 0, 1
    %v98 = vld [vmem:[#allocation0] sm:%s96]
    %s99 = sshllo.u32 0, 1
    %100 = vst [vmem:[%s1] sm:%s99] %v98

// kernel: decoder_block_forward.4
$region0: #{decoder_block_forward.4}
  #allocation0 [shape = 'u32[]', space=smem, size = 0x4, offset = 0x4, fixed_abs, tag = 'smem constant byte address 0x4 - core index']
  #allocation1 [shape = 'u32[144,128]{1,0:T(1,128)}', space=vmem, size = 0x12000, scoped, tag = 'internal scratch']
  %s0 = inlined_call_operand.vmem [shape: f32[2,4,16,128], index: 0, kind: input, shape index: {}]
  %s1 = inlined_call_operand.vmem [shape: bf16[9,128,128], index: 1, kind: input, shape index: {}]
  %s2 = inlined_call_operand.vmem [shape: f32[1,128], index: 2, kind: input, shape index: {}]
  %s3 = inlined_call_operand.vmem [shape: f32[1,128], index: 3, kind: input, shape index: {}]
  %s4 = inlined_call_operand.vmem [shape: f32[2,4,16,128], index: 4, kind: output, shape index: {0}]
  %s5 = inlined_call_operand.vmem [shape: f32[2,4,8,128], index: 5, kind: output, shape index: {1}]
  %6 = xla_tuple %s4, %s5
  %s7 = sld [smem:[#allocation0]]
  $region57: #{decoder_block_forward.4} parent=0
    _
  %s9 = ssub.s32 1, %s7
  %s10 = scalar_select 0, %s9, %s7
  loop: start=0, step=1, limit=10
  $region2: #{decoder_block_forward.4} parent=0 // loop_pre_header
    _
  $region3: #{decoder_block_forward.4} parent=0 // loop_header
    %s12 = sphi 0, %s16
    %p13 = scmp.ge.s32.totalorder %s12, 10
    %s19 = sphi 0, %s31
    %s20 = sphi 0, %s27
    %s21 = sphi 0, %s19
    %s22 = sphi 0, %s20
    %s23 = sphi 0, %s21
    %s24 = sphi 0, %s22
    %s34 = sphi 0, %s36
    %s37 = sphi 0, %s34
    %s38 = sphi 0, %s37
    %s54 = sphi 0, %s38
    %s58 = sphi 0, %s58
    %s60 = sphi 0, %s58
    %s61 = sphi 0, %s60
    %s75 = sphi 0, %s61
    %s79 = sphi 0, %s79
    %s81 = sphi 0, %s79
    %s82 = sphi 0, %s81
    %s96 = sphi 0, %s82
    %s100 = sphi 0, %s100
    %s102 = sphi 0, %s100
    %s103 = sphi 0, %s102
    %s117 = sphi 0, %s103
    %s125 = sphi 0, %s127
    %s128 = sphi 0, %s125
    %s129 = sphi 0, %s128
    %s145 = sphi 0, %s129
    %s153 = sphi 0, %s155
    %s156 = sphi 0, %s153
    %s157 = sphi 0, %s156
    %s173 = sphi 0, %s157
  $region4: #{decoder_block_forward.4} parent=0 // loop_header_branch
    %15 = sbr.rel (%p13) target = $region8
  $region5: #{decoder_block_forward.4} parent=0 // loop_body
    %s17 = ssub.s32 %s12, 1
    %s18 = ssub.s32 %s12, 2
    %s25 = sadd.s32 1, %s20
    %p26 = scmp.ge.s32.totalorder %s25, 4
    %s27 = scalar_select %p26, 0, %s25
    %s28 = sadd.s32 1, %s19
    %s29 = scalar_select %p26, %s28, %s19
    %p30 = scmp.ge.s32.totalorder %s29, 2
    %s31 = scalar_select %p30, 0, %s29
    %s32 = ssub.s32 %s19, %s31
    %p33 = scmp.eq.s32.totalorder %s32, 0
    %s35 = sadd.s32 %s34, 1
    %s36 = scalar_select %p33, %s34, %s35
    %p39 = pneg %p33
    %p40 = scmp.eq.s32.totalorder %s12, 7
    %p41 = por %p39, %p40
    %p42 = scmp.ne.s32.totalorder %s34, %s37
    %p43 = scmp.eq.s32.totalorder %s12, 0
    %p44 = por %p42, %p43
    %p45 = scmp.ne.s32.totalorder %s34, %s37
    %p46 = scmp.eq.s32.totalorder %s17, 7
    %p47 = por %p45, %p46
    %p48 = scmp.ne.s32.totalorder %s37, %s38
    %p49 = scmp.eq.s32.totalorder %s17, 0
    %p50 = por %p48, %p49
    %p51 = scmp.ne.s32.totalorder %s37, %s38
    %p52 = scmp.eq.s32.totalorder %s18, 7
    %p53 = por %p51, %p52
    %p55 = scmp.ne.s32.totalorder %s38, %s54
    %p56 = scmp.eq.s32.totalorder %s18, 0
    %p57 = por %p55, %p56
    %s59 = sadd.s32 %s58, 1
    %p62 = scmp.eq.s32.totalorder %s12, 7
    %p63 = scmp.ne.s32.totalorder %s58, %s60
    %p64 = scmp.eq.s32.totalorder %s12, 0
    %p65 = por %p63, %p64
    %p66 = scmp.ne.s32.totalorder %s58, %s60
    %p67 = scmp.eq.s32.totalorder %s17, 7
    %p68 = por %p66, %p67
    %p69 = scmp.ne.s32.totalorder %s60, %s61
    %p70 = scmp.eq.s32.totalorder %s17, 0
    %p71 = por %p69, %p70
    %p72 = scmp.ne.s32.totalorder %s60, %s61
    %p73 = scmp.eq.s32.totalorder %s18, 7
    %p74 = por %p72, %p73
    %p76 = scmp.ne.s32.totalorder %s61, %s75
    %p77 = scmp.eq.s32.totalorder %s18, 0
    %p78 = por %p76, %p77
    %s80 = sadd.s32 %s79, 1
    %p83 = scmp.eq.s32.totalorder %s12, 7
    %p84 = scmp.ne.s32.totalorder %s79, %s81
    %p85 = scmp.eq.s32.totalorder %s12, 0
    %p86 = por %p84, %p85
    %p87 = scmp.ne.s32.totalorder %s79, %s81
    %p88 = scmp.eq.s32.totalorder %s17, 7
    %p89 = por %p87, %p88
    %p90 = scmp.ne.s32.totalorder %s81, %s82
    %p91 = scmp.eq.s32.totalorder %s17, 0
    %p92 = por %p90, %p91
    %p93 = scmp.ne.s32.totalorder %s81, %s82
    %p94 = scmp.eq.s32.totalorder %s18, 7
    %p95 = por %p93, %p94
    %p97 = scmp.ne.s32.totalorder %s82, %s96
    %p98 = scmp.eq.s32.totalorder %s18, 0
    %p99 = por %p97, %p98
    %s101 = sadd.s32 %s100, 1
    %p104 = scmp.eq.s32.totalorder %s12, 7
    %p105 = scmp.ne.s32.totalorder %s100, %s102
    %p106 = scmp.eq.s32.totalorder %s12, 0
    %p107 = por %p105, %p106
    %p108 = scmp.ne.s32.totalorder %s100, %s102
    %p109 = scmp.eq.s32.totalorder %s17, 7
    %p110 = por %p108, %p109
    %p111 = scmp.ne.s32.totalorder %s102, %s103
    %p112 = scmp.eq.s32.totalorder %s17, 0
    %p113 = por %p111, %p112
    %p114 = scmp.ne.s32.totalorder %s102, %s103
    %p115 = scmp.eq.s32.totalorder %s18, 7
    %p116 = por %p114, %p115
    %p118 = scmp.ne.s32.totalorder %s103, %s117
    %p119 = scmp.eq.s32.totalorder %s18, 0
    %p120 = por %p118, %p119
    %s121 = ssub.s32 %s19, %s31
    %s122 = ssub.s32 %s20, %s27
    %s123 = sor.u32 %s121, %s122
    %p124 = scmp.eq.s32.totalorder %s123, 0
    %s126 = sadd.s32 %s125, 1
    %s127 = scalar_select %p124, %s125, %s126
    %p130 = pneg %p124
    %p131 = scmp.eq.s32.totalorder %s12, 7
    %p132 = por %p130, %p131
    %p133 = scmp.ne.s32.totalorder %s125, %s128
    %p134 = scmp.eq.s32.totalorder %s12, 0
    %p135 = por %p133, %p134
    %p136 = scmp.ne.s32.totalorder %s125, %s128
    %p137 = scmp.eq.s32.totalorder %s17, 7
    %p138 = por %p136, %p137
    %p139 = scmp.ne.s32.totalorder %s128, %s129
    %p140 = scmp.eq.s32.totalorder %s17, 0
    %p141 = por %p139, %p140
    %p142 = scmp.ne.s32.totalorder %s128, %s129
    %p143 = scmp.eq.s32.totalorder %s18, 7
    %p144 = por %p142, %p143
    %p146 = scmp.ne.s32.totalorder %s129, %s145
    %p147 = scmp.eq.s32.totalorder %s18, 0
    %p148 = por %p146, %p147
    %s149 = ssub.s32 %s19, %s31
    %s150 = ssub.s32 %s20, %s27
    %s151 = sor.u32 %s149, %s150
    %p152 = scmp.eq.s32.totalorder %s151, 0
    %s154 = sadd.s32 %s153, 1
    %s155 = scalar_select %p152, %s153, %s154
    %p158 = pneg %p152
    %p159 = scmp.eq.s32.totalorder %s12, 7
    %p160 = por %p158, %p159
    %p161 = scmp.ne.s32.totalorder %s153, %s156
    %p162 = scmp.eq.s32.totalorder %s12, 0
    %p163 = por %p161, %p162
    %p164 = scmp.ne.s32.totalorder %s153, %s156
    %p165 = scmp.eq.s32.totalorder %s17, 7
    %p166 = por %p164, %p165
    %p167 = scmp.ne.s32.totalorder %s156, %s157
    %p168 = scmp.eq.s32.totalorder %s17, 0
    %p169 = por %p167, %p168
    %p170 = scmp.ne.s32.totalorder %s156, %s157
    %p171 = scmp.eq.s32.totalorder %s18, 7
    %p172 = por %p170, %p171
    %p174 = scmp.ne.s32.totalorder %s157, %s173
    %p175 = scmp.eq.s32.totalorder %s18, 0
    %p176 = por %p174, %p175
    %p177 = scmp.le.s32.totalorder 1, %s12
    %p178 = scmp.lt.s32.totalorder %s12, 9
    %p179 = pnand %p177, %p178
    %p180 = pneg %p179
    // Predicated region
    $region9: #{decoder_block_forward.4} parent=5 // pred_check
      _
    $region10: #{decoder_block_forward.4} parent=5 // pred_check_branch
      %182 = sbr.rel (%p179) target = $region12
    $region11: #{decoder_block_forward.4} parent=5 // pred_region
      %s183 = ssub.s32 %s12, 1
      // Predicated region
      $region13: #{decoder_block_forward.4} parent=11 // pred_check
        %p184 = pneg %p71
      $region14: #{decoder_block_forward.4} parent=11 // pred_check_branch
        %186 = sbr.rel (%p184) target = $region16
      $region15: #{decoder_block_forward.4} parent=11 // pred_region
        _
      $region16: #{decoder_block_forward.4} parent=11 // pred_fallthru
        _
      // Predicated region
      $region17: #{decoder_block_forward.4} parent=11 // pred_check
        %p187 = pneg %p92
      $region18: #{decoder_block_forward.4} parent=11 // pred_check_branch
        %189 = sbr.rel (%p187) target = $region20
      $region19: #{decoder_block_forward.4} parent=11 // pred_region
        _
      $region20: #{decoder_block_forward.4} parent=11 // pred_fallthru
        _
      // Predicated region
      $region21: #{decoder_block_forward.4} parent=11 // pred_check
        %p190 = pneg %p113
      $region22: #{decoder_block_forward.4} parent=11 // pred_check_branch
        %192 = sbr.rel (%p190) target = $region24
      $region23: #{decoder_block_forward.4} parent=11 // pred_region
        _
      $region24: #{decoder_block_forward.4} parent=11 // pred_fallthru
        _
    $region12: #{decoder_block_forward.4} parent=5 // pred_fallthru
      _
    %p193 = scmp.lt.s32.totalorder %s12, 8
    // Predicated region
    $region25: #{decoder_block_forward.4} parent=5 // pred_check
      %p194 = pneg %p193
    $region26: #{decoder_block_forward.4} parent=5 // pred_check_branch
      %196 = sbr.rel (%p194) target = $region28
    $region27: #{decoder_block_forward.4} parent=5 // pred_region
      // Predicated region
      $region29: #{decoder_block_forward.4} parent=27 // pred_check
        %p197 = pneg %p44
      $region30: #{decoder_block_forward.4} parent=27 // pred_check_branch
        %199 = sbr.rel (%p197) target = $region32
      $region31: #{decoder_block_forward.4} parent=27 // pred_region
        %p200 = scmp.lt.s32.totalorder %s19, 1
        %s201 = scalar_select %p200, %s19, 1
        %s202 = smul.addr %s201, 8
        %s203 = smul.addr %s202, 8
        %s204 = scalar_lea.vmem %s0, %s203
      $region32: #{decoder_block_forward.4} parent=27 // pred_fallthru
        _
    $region28: #{decoder_block_forward.4} parent=5 // pred_fallthru
      _
    %p205 = scmp.le.s32.totalorder 1, %s12
    %p206 = scmp.lt.s32.totalorder %s12, 9
    %p207 = pnand %p205, %p206
    %p208 = pneg %p207
    // Predicated region
    $region33: #{decoder_block_forward.4} parent=5 // pred_check
      _
    $region34: #{decoder_block_forward.4} parent=5 // pred_check_branch
      %210 = sbr.rel (%p207) target = $region36
    $region35: #{decoder_block_forward.4} parent=5 // pred_region
      %s211 = ssub.s32 %s12, 1
      %p212 = scmp.lt.s32.totalorder %s21, 1
      %s213 = scalar_select %p212, %s21, 1
      %s214 = smul.addr %s213, 8
      %s215 = smul.addr %s214, 8
      %s216 = scalar_lea.vmem %s0, %s215
      %p217 = pneg %p50
      %p218 = pneg %p47
      %p219 = pneg %p71
      %p220 = pneg %p68
      %p221 = pneg %p92
      %p222 = pneg %p89
      %p223 = pneg %p113
      %p224 = pneg %p110
      %p225 = pneg %p141
      %p226 = pneg %p138
      %p227 = scmp.lt.s32.totalorder %s21, 1
      %s228 = scalar_select %p227, %s21, 1
      %p229 = scmp.lt.s32.totalorder %s22, 3
      %s230 = scalar_select %p229, %s22, 3
      %s231 = smul.addr %s230, 2
      %s232 = smul.addr %s228, 8
      %s233 = sadd.s32 %s231, %s232
      %s234 = smul.addr %s233, 8
      %s235 = scalar_lea.vmem %s4, %s234
      %p236 = pneg %p169
      %p237 = pneg %p166
      %p238 = scmp.lt.s32.totalorder %s21, 1
      %s239 = scalar_select %p238, %s21, 1
      %p240 = scmp.lt.s32.totalorder %s22, 3
      %s241 = scalar_select %p240, %s22, 3
      %s242 = smul.addr %s239, 4
      %s243 = sadd.s32 %s241, %s242
      %s244 = smul.addr %s243, 8
      %s245 = scalar_lea.vmem %s5, %s244
      %p246 = scmp.lt.s32.totalorder %s21, 1
      %s247 = scalar_select %p246, %s21, 1
      %s248 = smul.addr %s247, 8
      %s249 = smul.addr %s248, 8
      %s250 = scalar_lea.vmem %s0, %s249
      %p251 = scmp.lt.s32.totalorder %s21, 1
      %s252 = scalar_select %p251, %s21, 1
      %p253 = scmp.lt.s32.totalorder %s22, 3
      %s254 = scalar_select %p253, %s22, 3
      %s255 = smul.addr %s254, 2
      %s256 = smul.addr %s252, 8
      %s257 = sadd.s32 %s255, %s256
      %s258 = smul.addr %s257, 8
      %s259 = scalar_lea.vmem %s4, %s258
      %p260 = scmp.lt.s32.totalorder %s21, 1
      %s261 = scalar_select %p260, %s21, 1
      %p262 = scmp.lt.s32.totalorder %s22, 3
      %s263 = scalar_select %p262, %s22, 3
      %s264 = smul.addr %s261, 4
      %s265 = sadd.s32 %s263, %s264
      %s266 = smul.addr %s265, 8
      %s267 = scalar_lea.vmem %s5, %s266
      %v269 = vld [vmem:[%s2] sm:$0x1]
      %v270 = vld [vmem:[%s3] sm:$0x1]
      %s271 = sadd.s32 %s22, 4294967295
      %p272 = scmp.gt.s32.totalorder %s271, 0
      %s273 = scalar_select %p272, %s271, 0
      %p274 = scmp.lt.s32.totalorder %s273, 3
      %s275 = scalar_select %p274, %s273, 3
      %s276 = smul.u32 %s275, 16
      %s277 = scalar_lea.vmem %s250, %s276
      %v278 = vld [vmem:[%s277] sm:$0xff]
      %v279 = vld [vmem:[%s277 + $0x8] sm:$0xff]
      %v281 = vlaneseq
      %v282 = vshrl.u32 %v281, 7
      %v283 = vsub.s32 0, %v282
      %v284 = vrot.slane %v269, %v283
      %v286 = vmul.f32 %v278, %v284
      %v287 = vmul.f32 %v279, %v284
      %v289 = vlaneseq
      %v290 = vshrl.u32 %v289, 7
      %v291 = vsub.s32 0, %v290
      %v292 = vrot.slane %v270, %v291
      %v294 = vadd.f32 %v286, %v292
      %v295 = vadd.f32 %v287, %v292
      %v296 = vmax.f32 %v294, 0.0
      %v297 = vmax.f32 %v295, 0.0
      %p298 = scmp.ge.s32.totalorder %s271, 0
      %p299 = scmp.lt.s32.totalorder %s271, 4
      %p300 = pnand %p298, %p299
      %p301 = pneg %p300
      %s302 = scalar_select %p301, 1, 0
      %v303 = vstv %s302
      %vm304 = vcmp.eq.s32.totalorder %v303, 1
      %v305 = vsel %vm304, %v296, 0.0
      %v306 = vsel %vm304, %v297, 0.0
      %vm309 = vcmask 1040384
      %v310 = vrot.slane %v305, 7
      %v311 = vrot.slane %v306, 7
      %v312 = vsel %vm309, %v310, %v311
      %v315 = vsel %vm309, 0.0, %v310
      %v316 = vpack.c.bf16 %v312, %v315
      %v317 = vld [vmem:[%s1] sm:$0xf]
      %v318 = vld [vmem:[%s1 + $0x4] sm:$0xf]
      %v319 = vld [vmem:[%s1 + $0x8] sm:$0xf]
      %v320 = vld [vmem:[%s1 + $0xc] sm:$0xf]
      %v321 = vld [vmem:[%s1 + $0x10] sm:$0xf]
      %v322 = vld [vmem:[%s1 + $0x14] sm:$0xf]
      %v323 = vld [vmem:[%s1 + $0x18] sm:$0xf]
      %v324 = vld [vmem:[%s1 + $0x1c] sm:$0xf]
      %v325 = vld [vmem:[%s1 + $0x20] sm:$0xf]
      %v326 = vld [vmem:[%s1 + $0x24] sm:$0xf]
      %v327 = vld [vmem:[%s1 + $0x28] sm:$0xf]
      %v328 = vld [vmem:[%s1 + $0x2c] sm:$0xf]
      %v329 = vld [vmem:[%s1 + $0x30] sm:$0xf]
      %v330 = vld [vmem:[%s1 + $0x34] sm:$0xf]
      %v331 = vld [vmem:[%s1 + $0x38] sm:$0xf]
      %v332 = vld [vmem:[%s1 + $0x3c] sm:$0xf]
      %v333 = vpack.c.bf16 %v306, %v305
      %s334 = scalar_lea.vmem %s1, 64
      %v335 = vld [vmem:[%s334] sm:$0xf]
      %v336 = vld [vmem:[%s334 + $0x4] sm:$0xf]
      %v337 = vld [vmem:[%s334 + $0x8] sm:$0xf]
      %v338 = vld [vmem:[%s334 + $0xc] sm:$0xf]
      %v339 = vld [vmem:[%s334 + $0x10] sm:$0xf]
      %v340 = vld [vmem:[%s334 + $0x14] sm:$0xf]
      %v341 = vld [vmem:[%s334 + $0x18] sm:$0xf]
      %v342 = vld [vmem:[%s334 + $0x1c] sm:$0xf]
      %v343 = vld [vmem:[%s334 + $0x20] sm:$0xf]
      %v344 = vld [vmem:[%s334 + $0x24] sm:$0xf]
      %v345 = vld [vmem:[%s334 + $0x28] sm:$0xf]
      %v346 = vld [vmem:[%s334 + $0x2c] sm:$0xf]
      %v347 = vld [vmem:[%s334 + $0x30] sm:$0xf]
      %v348 = vld [vmem:[%s334 + $0x34] sm:$0xf]
      %v349 = vld [vmem:[%s334 + $0x38] sm:$0xf]
      %v350 = vld [vmem:[%s334 + $0x3c] sm:$0xf]
      %v367 = vunpack.c.l.b16 %v335
      %v368 = vunpack.c.l.b16 %v336
      %v369 = vunpack.c.l.b16 %v337
      %v370 = vunpack.c.l.b16 %v338
      %v371 = vunpack.c.l.b16 %v339
      %v372 = vunpack.c.l.b16 %v340
      %v373 = vunpack.c.l.b16 %v341
      %v374 = vunpack.c.l.b16 %v342
      %v375 = vunpack.c.l.b16 %v343
      %v376 = vunpack.c.l.b16 %v344
      %v377 = vunpack.c.l.b16 %v345
      %v378 = vunpack.c.l.b16 %v346
      %v379 = vunpack.c.l.b16 %v347
      %v380 = vunpack.c.l.b16 %v348
      %v381 = vunpack.c.l.b16 %v349
      %v382 = vunpack.c.l.b16 %v350
      %v383 = vpack.c.b16 %v368, %v367
      %v384 = vpack.c.b16 %v370, %v369
      %v385 = vpack.c.b16 %v372, %v371
      %v386 = vpack.c.b16 %v374, %v373
      %v387 = vpack.c.b16 %v376, %v375
      %v388 = vpack.c.b16 %v378, %v377
      %v389 = vpack.c.b16 %v380, %v379
      %v390 = vpack.c.b16 %v382, %v381
      %399 = vmatprep.subr.bf16.mxu0 0
      %400 = vmatpush1.bf16.msra.mxu0 %v383
      %401 = vmatprep.subr.bf16.mxu0 0
      %402 = vmatpush1.bf16.msra.mxu0 %v384
      %403 = vmatprep.subr.bf16.mxu0 0
      %404 = vmatpush1.bf16.msra.mxu0 %v385
      %405 = vmatprep.subr.bf16.mxu0 0
      %406 = vmatpush1.bf16.msra.mxu0 %v386
      %407 = vmatprep.subr.bf16.mxu0 0
      %408 = vmatpush1.bf16.msra.mxu0 %v387
      %409 = vmatprep.subr.bf16.mxu0 0
      %410 = vmatpush1.bf16.msra.mxu0 %v388
      %411 = vmatprep.subr.bf16.mxu0 0
      %412 = vmatpush1.bf16.msra.mxu0 %v389
      %413 = vmatprep.subr.bf16.mxu0 0
      %414 = vmatpush1.bf16.msra.mxu0 %v390
      %415 = vmatprep.subr.bf16.mxu0 0
      %416 = vmatpush1.bf16.msra.mxu0 0
      %417 = vmatprep.subr.bf16.mxu0 0
      %418 = vmatpush1.bf16.msra.mxu0 0
      %419 = vmatprep.subr.bf16.mxu0 0
      %420 = vmatpush1.bf16.msra.mxu0 0
      %421 = vmatprep.subr.bf16.mxu0 0
      %422 = vmatpush1.bf16.msra.mxu0 0
      %423 = vmatprep.subr.bf16.mxu0 0
      %424 = vmatpush1.bf16.msra.mxu0 0
      %425 = vmatprep.subr.bf16.mxu0 0
      %426 = vmatpush1.bf16.msra.mxu0 0
      %427 = vmatprep.subr.bf16.mxu0 0
      %428 = vmatpush1.bf16.msra.mxu0 0
      %429 = vmatprep.subr.bf16.mxu0 0
      %430 = vmatpush1.bf16.msra.mxu0 0
      %431 = vmatprep.mubr.bf16.mxu0 0
      %432 = vmatmul.mubr.bf16.gmra.mrb[0].mxu0 %v333
      %v433 = vpop.f32.mrb[0].mxu0
      %v434 = vadd.f32 0.0, %v433
      %v435 = vpop.f32.mrb[0].mxu0
      %v436 = vpop.f32.mrb[0].mxu0
      %v437 = vadd.f32 0.0, %v436
      %v438 = vpop.f32.mrb[0].mxu0
      %439 = vdwg.mxu0
      %v456 = vunpack.c.l.b16 %v317
      %v457 = vunpack.c.l.b16 %v318
      %v458 = vunpack.c.l.b16 %v319
      %v459 = vunpack.c.l.b16 %v320
      %v460 = vunpack.c.l.b16 %v321
      %v461 = vunpack.c.l.b16 %v322
      %v462 = vunpack.c.l.b16 %v323
      %v463 = vunpack.c.l.b16 %v324
      %v464 = vunpack.c.l.b16 %v325
      %v465 = vunpack.c.l.b16 %v326
      %v466 = vunpack.c.l.b16 %v327
      %v467 = vunpack.c.l.b16 %v328
      %v468 = vunpack.c.l.b16 %v329
      %v469 = vunpack.c.l.b16 %v330
      %v470 = vunpack.c.l.b16 %v331
      %v471 = vunpack.c.l.b16 %v332
      %v472 = vpack.c.b16 %v457, %v456
      %v473 = vpack.c.b16 %v459, %v458
      %v474 = vpack.c.b16 %v461, %v460
      %v475 = vpack.c.b16 %v463, %v462
      %v476 = vpack.c.b16 %v465, %v464
      %v477 = vpack.c.b16 %v467, %v466
      %v478 = vpack.c.b16 %v469, %v468
      %v479 = vpack.c.b16 %v471, %v470
      %488 = vmatprep.subr.bf16.mxu0 0
      %489 = vmatpush1.bf16.msra.mxu0 %v472
      %490 = vmatprep.subr.bf16.mxu0 0
      %491 = vmatpush1.bf16.msra.mxu0 %v473
      %492 = vmatprep.subr.bf16.mxu0 0
      %493 = vmatpush1.bf16.msra.mxu0 %v474
      %494 = vmatprep.subr.bf16.mxu0 0
      %495 = vmatpush1.bf16.msra.mxu0 %v475
      %496 = vmatprep.subr.bf16.mxu0 0
      %497 = vmatpush1.bf16.msra.mxu0 %v476
      %498 = vmatprep.subr.bf16.mxu0 0
      %499 = vmatpush1.bf16.msra.mxu0 %v477
      %500 = vmatprep.subr.bf16.mxu0 0
      %501 = vmatpush1.bf16.msra.mxu0 %v478
      %502 = vmatprep.subr.bf16.mxu0 0
      %503 = vmatpush1.bf16.msra.mxu0 %v479
      %504 = vmatprep.subr.bf16.mxu0 0
      %505 = vmatpush1.bf16.msra.mxu0 0
      %506 = vmatprep.subr.bf16.mxu0 0
      %507 = vmatpush1.bf16.msra.mxu0 0
      %508 = vmatprep.subr.bf16.mxu0 0
      %509 = vmatpush1.bf16.msra.mxu0 0
      %510 = vmatprep.subr.bf16.mxu0 0
      %511 = vmatpush1.bf16.msra.mxu0 0
      %512 = vmatprep.subr.bf16.mxu0 0
      %513 = vmatpush1.bf16.msra.mxu0 0
      %514 = vmatprep.subr.bf16.mxu0 0
      %515 = vmatpush1.bf16.msra.mxu0 0
      %516 = vmatprep.subr.bf16.mxu0 0
      %517 = vmatpush1.bf16.msra.mxu0 0
      %518 = vmatprep.subr.bf16.mxu0 0
      %519 = vmatpush1.bf16.msra.mxu0 0
      %520 = vmatprep.mubr.bf16.mxu0 0
      %521 = vmatmul.mubr.bf16.gmra.mrb[0].mxu0 %v316
      %v522 = vpop.f32.mrb[0].mxu0
      %v523 = vadd.f32 %v434, %v522
      %v524 = vpop.f32.mrb[0].mxu0
      %v525 = vpop.f32.mrb[0].mxu0
      %v526 = vadd.f32 %v437, %v525
      %v527 = vpop.f32.mrb[0].mxu0
      %528 = vdwg.mxu0
      %vm529 = vcmask 1046528
      %v530 = vrot.slane %v305, 1
      %v531 = vrot.slane %v306, 1
      %v532 = vsel %vm529, %v530, %v531
      %v535 = vsel %vm529, %v531, 0.0
      %v536 = vpack.c.bf16 %v535, %v532
      %s537 = scalar_lea.vmem %s1, 128
      %v538 = vld [vmem:[%s537] sm:$0xf]
      %v539 = vld [vmem:[%s537 + $0x4] sm:$0xf]
      %v540 = vld [vmem:[%s537 + $0x8] sm:$0xf]
      %v541 = vld [vmem:[%s537 + $0xc] sm:$0xf]
      %v542 = vld [vmem:[%s537 + $0x10] sm:$0xf]
      %v543 = vld [vmem:[%s537 + $0x14] sm:$0xf]
      %v544 = vld [vmem:[%s537 + $0x18] sm:$0xf]
      %v545 = vld [vmem:[%s537 + $0x1c] sm:$0xf]
      %v546 = vld [vmem:[%s537 + $0x20] sm:$0xf]
      %v547 = vld [vmem:[%s537 + $0x24] sm:$0xf]
      %v548 = vld [vmem:[%s537 + $0x28] sm:$0xf]
      %v549 = vld [vmem:[%s537 + $0x2c] sm:$0xf]
      %v550 = vld [vmem:[%s537 + $0x30] sm:$0xf]
      %v551 = vld [vmem:[%s537 + $0x34] sm:$0xf]
      %v552 = vld [vmem:[%s537 + $0x38] sm:$0xf]
      %v553 = vld [vmem:[%s537 + $0x3c] sm:$0xf]
      %v570 = vunpack.c.l.b16 %v538
      %v571 = vunpack.c.l.b16 %v539
      %v572 = vunpack.c.l.b16 %v540
      %v573 = vunpack.c.l.b16 %v541
      %v574 = vunpack.c.l.b16 %v542
      %v575 = vunpack.c.l.b16 %v543
      %v576 = vunpack.c.l.b16 %v544
      %v577 = vunpack.c.l.b16 %v545
      %v578 = vunpack.c.l.b16 %v546
      %v579 = vunpack.c.l.b16 %v547
      %v580 = vunpack.c.l.b16 %v548
      %v581 = vunpack.c.l.b16 %v549
      %v582 = vunpack.c.l.b16 %v550
      %v583 = vunpack.c.l.b16 %v551
      %v584 = vunpack.c.l.b16 %v552
      %v585 = vunpack.c.l.b16 %v553
      %v586 = vpack.c.b16 %v571, %v570
      %v587 = vpack.c.b16 %v573, %v572
      %v588 = vpack.c.b16 %v575, %v574
      %v589 = vpack.c.b16 %v577, %v576
      %v590 = vpack.c.b16 %v579, %v578
      %v591 = vpack.c.b16 %v581, %v580
      %v592 = vpack.c.b16 %v583, %v582
      %v593 = vpack.c.b16 %v585, %v584
      %602 = vmatprep.subr.bf16.mxu0 0
      %603 = vmatpush1.bf16.msra.mxu0 %v586
      %604 = vmatprep.subr.bf16.mxu0 0
      %605 = vmatpush1.bf16.msra.mxu0 %v587
      %606 = vmatprep.subr.bf16.mxu0 0
      %607 = vmatpush1.bf16.msra.mxu0 %v588
      %608 = vmatprep.subr.bf16.mxu0 0
      %609 = vmatpush1.bf16.msra.mxu0 %v589
      %610 = vmatprep.subr.bf16.mxu0 0
      %611 = vmatpush1.bf16.msra.mxu0 %v590
      %612 = vmatprep.subr.bf16.mxu0 0
      %613 = vmatpush1.bf16.msra.mxu0 %v591
      %614 = vmatprep.subr.bf16.mxu0 0
      %615 = vmatpush1.bf16.msra.mxu0 %v592
      %616 = vmatprep.subr.bf16.mxu0 0
      %617 = vmatpush1.bf16.msra.mxu0 %v593
      %618 = vmatprep.subr.bf16.mxu0 0
      %619 = vmatpush1.bf16.msra.mxu0 0
      %620 = vmatprep.subr.bf16.mxu0 0
      %621 = vmatpush1.bf16.msra.mxu0 0
      %622 = vmatprep.subr.bf16.mxu0 0
      %623 = vmatpush1.bf16.msra.mxu0 0
      %624 = vmatprep.subr.bf16.mxu0 0
      %625 = vmatpush1.bf16.msra.mxu0 0
      %626 = vmatprep.subr.bf16.mxu0 0
      %627 = vmatpush1.bf16.msra.mxu0 0
      %628 = vmatprep.subr.bf16.mxu0 0
      %629 = vmatpush1.bf16.msra.mxu0 0
      %630 = vmatprep.subr.bf16.mxu0 0
      %631 = vmatpush1.bf16.msra.mxu0 0
      %632 = vmatprep.subr.bf16.mxu0 0
      %633 = vmatpush1.bf16.msra.mxu0 0
      %634 = vmatprep.mubr.bf16.mxu0 0
      %635 = vmatmul.mubr.bf16.gmra.mrb[0].mxu0 %v536
      %v636 = vpop.f32.mrb[0].mxu0
      %v637 = vadd.f32 0.0, %v636
      %v638 = vpop.f32.mrb[0].mxu0
      %v639 = vpop.f32.mrb[0].mxu0
      %v640 = vadd.f32 0.0, %v639
      %v641 = vpop.f32.mrb[0].mxu0
      %642 = vdwg.mxu0
      %v643 = vadd.f32 %v523, %v637
      %v644 = vadd.f32 %v526, %v640
      %p645 = scmp.gt.s32.totalorder %s22, 0
      %s646 = scalar_select %p645, %s22, 0
      %p647 = scmp.lt.s32.totalorder %s646, 3
      %s648 = scalar_select %p647, %s646, 3
      %s649 = smul.u32 %s648, 16
      %s650 = scalar_lea.vmem %s250, %s649
      %v651 = vld [vmem:[%s650] sm:$0xff]
      %v652 = vld [vmem:[%s650 + $0x8] sm:$0xff]
      %v653 = vmul.f32 %v651, %v284
      %v654 = vmul.f32 %v652, %v284
      %v655 = vadd.f32 %v653, %v292
      %v656 = vadd.f32 %v654, %v292
      %v657 = vmax.f32 %v655, 0.0
      %v658 = vmax.f32 %v656, 0.0
      %p659 = scmp.ge.s32.totalorder %s22, 0
      %p660 = scmp.lt.s32.totalorder %s22, 4
      %p661 = pnand %p659, %p660
      %p662 = pneg %p661
      %s663 = scalar_select %p662, 1, 0
      %v664 = vstv %s663
      %vm665 = vcmp.eq.s32.totalorder %v664, 1
      %v666 = vsel %vm665, %v657, 0.0
      %v667 = vsel %vm665, %v658, 0.0
      %v670 = vrot.slane %v666, 7
      %v671 = vrot.slane %v667, 7
      %v672 = vsel %vm309, %v670, %v671
      %v675 = vsel %vm309, 0.0, %v670
      %v676 = vpack.c.bf16 %v672, %v675
      %s677 = scalar_lea.vmem %s1, 192
      %v678 = vld [vmem:[%s677] sm:$0xf]
      %v679 = vld [vmem:[%s677 + $0x4] sm:$0xf]
      %v680 = vld [vmem:[%s677 + $0x8] sm:$0xf]
      %v681 = vld [vmem:[%s677 + $0xc] sm:$0xf]
      %v682 = vld [vmem:[%s677 + $0x10] sm:$0xf]
      %v683 = vld [vmem:[%s677 + $0x14] sm:$0xf]
      %v684 = vld [vmem:[%s677 + $0x18] sm:$0xf]
      %v685 = vld [vmem:[%s677 + $0x1c] sm:$0xf]
      %v686 = vld [vmem:[%s677 + $0x20] sm:$0xf]
      %v687 = vld [vmem:[%s677 + $0x24] sm:$0xf]
      %v688 = vld [vmem:[%s677 + $0x28] sm:$0xf]
      %v689 = vld [vmem:[%s677 + $0x2c] sm:$0xf]
      %v690 = vld [vmem:[%s677 + $0x30] sm:$0xf]
      %v691 = vld [vmem:[%s677 + $0x34] sm:$0xf]
      %v692 = vld [vmem:[%s677 + $0x38] sm:$0xf]
      %v693 = vld [vmem:[%s677 + $0x3c] sm:$0xf]
      %v710 = vunpack.c.l.b16 %v678
      %v711 = vunpack.c.l.b16 %v679
      %v712 = vunpack.c.l.b16 %v680
      %v713 = vunpack.c.l.b16 %v681
      %v714 = vunpack.c.l.b16 %v682
      %v715 = vunpack.c.l.b16 %v683
      %v716 = vunpack.c.l.b16 %v684
      %v717 = vunpack.c.l.b16 %v685
      %v718 = vunpack.c.l.b16 %v686
      %v719 = vunpack.c.l.b16 %v687
      %v720 = vunpack.c.l.b16 %v688
      %v721 = vunpack.c.l.b16 %v689
      %v722 = vunpack.c.l.b16 %v690
      %v723 = vunpack.c.l.b16 %v691
      %v724 = vunpack.c.l.b16 %v692
      %v725 = vunpack.c.l.b16 %v693
      %v726 = vpack.c.b16 %v711, %v710
      %v727 = vpack.c.b16 %v713, %v712
      %v728 = vpack.c.b16 %v715, %v714
      %v729 = vpack.c.b16 %v717, %v716
      %v730 = vpack.c.b16 %v719, %v718
      %v731 = vpack.c.b16 %v721, %v720
      %v732 = vpack.c.b16 %v723, %v722
      %v733 = vpack.c.b16 %v725, %v724
      %742 = vmatprep.subr.bf16.mxu0 0
      %743 = vmatpush1.bf16.msra.mxu0 %v726
      %744 = vmatprep.subr.bf16.mxu0 0
      %745 = vmatpush1.bf16.msra.mxu0 %v727
      %746 = vmatprep.subr.bf16.mxu0 0
      %747 = vmatpush1.bf16.msra.mxu0 %v728
      %748 = vmatprep.subr.bf16.mxu0 0
      %749 = vmatpush1.bf16.msra.mxu0 %v729
      %750 = vmatprep.subr.bf16.mxu0 0
      %751 = vmatpush1.bf16.msra.mxu0 %v730
      %752 = vmatprep.subr.bf16.mxu0 0
      %753 = vmatpush1.bf16.msra.mxu0 %v731
      %754 = vmatprep.subr.bf16.mxu0 0
      %755 = vmatpush1.bf16.msra.mxu0 %v732
      %756 = vmatprep.subr.bf16.mxu0 0
      %757 = vmatpush1.bf16.msra.mxu0 %v733
      %758 = vmatprep.subr.bf16.mxu0 0
      %759 = vmatpush1.bf16.msra.mxu0 0
      %760 = vmatprep.subr.bf16.mxu0 0
      %761 = vmatpush1.bf16.msra.mxu0 0
      %762 = vmatprep.subr.bf16.mxu0 0
      %763 = vmatpush1.bf16.msra.mxu0 0
      %764 = vmatprep.subr.bf16.mxu0 0
      %765 = vmatpush1.bf16.msra.mxu0 0
      %766 = vmatprep.subr.bf16.mxu0 0
      %767 = vmatpush1.bf16.msra.mxu0 0
      %768 = vmatprep.subr.bf16.mxu0 0
      %769 = vmatpush1.bf16.msra.mxu0 0
      %770 = vmatprep.subr.bf16.mxu0 0
      %771 = vmatpush1.bf16.msra.mxu0 0
      %772 = vmatprep.subr.bf16.mxu0 0
      %773 = vmatpush1.bf16.msra.mxu0 0
      %774 = vmatprep.mubr.bf16.mxu0 0
      %775 = vmatmul.mubr.bf16.gmra.mrb[0].mxu0 %v676
      %v776 = vpop.f32.mrb[0].mxu0
      %v777 = vadd.f32 0.0, %v776
      %v778 = vpop.f32.mrb[0].mxu0
      %v779 = vpop.f32.mrb[0].mxu0
      %v780 = vadd.f32 0.0, %v779
      %v781 = vpop.f32.mrb[0].mxu0
      %782 = vdwg.mxu0
      %v783 = vadd.f32 %v643, %v777
      %v784 = vadd.f32 %v644, %v780
      %v785 = vpack.c.bf16 %v667, %v666
      %s786 = scalar_lea.vmem %s1, 256
      %v787 = vld [vmem:[%s786] sm:$0xf]
      %v788 = vld [vmem:[%s786 + $0x4] sm:$0xf]
      %v789 = vld [vmem:[%s786 + $0x8] sm:$0xf]
      %v790 = vld [vmem:[%s786 + $0xc] sm:$0xf]
      %v791 = vld [vmem:[%s786 + $0x10] sm:$0xf]
      %v792 = vld [vmem:[%s786 + $0x14] sm:$0xf]
      %v793 = vld [vmem:[%s786 + $0x18] sm:$0xf]
      %v794 = vld [vmem:[%s786 + $0x1c] sm:$0xf]
      %v795 = vld [vmem:[%s786 + $0x20] sm:$0xf]
      %v796 = vld [vmem:[%s786 + $0x24] sm:$0xf]
      %v797 = vld [vmem:[%s786 + $0x28] sm:$0xf]
      %v798 = vld [vmem:[%s786 + $0x2c] sm:$0xf]
      %v799 = vld [vmem:[%s786 + $0x30] sm:$0xf]
      %v800 = vld [vmem:[%s786 + $0x34] sm:$0xf]
      %v801 = vld [vmem:[%s786 + $0x38] sm:$0xf]
      %v802 = vld [vmem:[%s786 + $0x3c] sm:$0xf]
      %v819 = vunpack.c.l.b16 %v787
      %v820 = vunpack.c.l.b16 %v788
      %v821 = vunpack.c.l.b16 %v789
      %v822 = vunpack.c.l.b16 %v790
      %v823 = vunpack.c.l.b16 %v791
      %v824 = vunpack.c.l.b16 %v792
      %v825 = vunpack.c.l.b16 %v793
      %v826 = vunpack.c.l.b16 %v794
      %v827 = vunpack.c.l.b16 %v795
      %v828 = vunpack.c.l.b16 %v796
      %v829 = vunpack.c.l.b16 %v797
      %v830 = vunpack.c.l.b16 %v798
      %v831 = vunpack.c.l.b16 %v799
      %v832 = vunpack.c.l.b16 %v800
      %v833 = vunpack.c.l.b16 %v801
      %v834 = vunpack.c.l.b16 %v802
      %v835 = vpack.c.b16 %v820, %v819
      %v836 = vpack.c.b16 %v822, %v821
      %v837 = vpack.c.b16 %v824, %v823
      %v838 = vpack.c.b16 %v826, %v825
      %v839 = vpack.c.b16 %v828, %v827
      %v840 = vpack.c.b16 %v830, %v829
      %v841 = vpack.c.b16 %v832, %v831
      %v842 = vpack.c.b16 %v834, %v833
      %851 = vmatprep.subr.bf16.mxu0 0
      %852 = vmatpush1.bf16.msra.mxu0 %v835
      %853 = vmatprep.subr.bf16.mxu0 0
      %854 = vmatpush1.bf16.msra.mxu0 %v836
      %855 = vmatprep.subr.bf16.mxu0 0
      %856 = vmatpush1.bf16.msra.mxu0 %v837
      %857 = vmatprep.subr.bf16.mxu0 0
      %858 = vmatpush1.bf16.msra.mxu0 %v838
      %859 = vmatprep.subr.bf16.mxu0 0
      %860 = vmatpush1.bf16.msra.mxu0 %v839
      %861 = vmatprep.subr.bf16.mxu0 0
      %862 = vmatpush1.bf16.msra.mxu0 %v840
      %863 = vmatprep.subr.bf16.mxu0 0
      %864 = vmatpush1.bf16.msra.mxu0 %v841
      %865 = vmatprep.subr.bf16.mxu0 0
      %866 = vmatpush1.bf16.msra.mxu0 %v842
      %867 = vmatprep.subr.bf16.mxu0 0
      %868 = vmatpush1.bf16.msra.mxu0 0
      %869 = vmatprep.subr.bf16.mxu0 0
      %870 = vmatpush1.bf16.msra.mxu0 0
      %871 = vmatprep.subr.bf16.mxu0 0
      %872 = vmatpush1.bf16.msra.mxu0 0
      %873 = vmatprep.subr.bf16.mxu0 0
      %874 = vmatpush1.bf16.msra.mxu0 0
      %875 = vmatprep.subr.bf16.mxu0 0
      %876 = vmatpush1.bf16.msra.mxu0 0
      %877 = vmatprep.subr.bf16.mxu0 0
      %878 = vmatpush1.bf16.msra.mxu0 0
      %879 = vmatprep.subr.bf16.mxu0 0
      %880 = vmatpush1.bf16.msra.mxu0 0
      %881 = vmatprep.subr.bf16.mxu0 0
      %882 = vmatpush1.bf16.msra.mxu0 0
      %883 = vmatprep.mubr.bf16.mxu0 0
      %884 = vmatmul.mubr.bf16.gmra.mrb[0].mxu0 %v785
      %v885 = vpop.f32.mrb[0].mxu0
      %v886 = vadd.f32 0.0, %v885
      %v887 = vpop.f32.mrb[0].mxu0
      %v888 = vpop.f32.mrb[0].mxu0
      %v889 = vadd.f32 0.0, %v888
      %v890 = vpop.f32.mrb[0].mxu0
      %891 = vdwg.mxu0
      %v892 = vadd.f32 %v783, %v886
      %v893 = vadd.f32 %v784, %v889
      %v894 = vrot.slane %v666, 1
      %v895 = vrot.slane %v667, 1
      %v896 = vsel %vm529, %v894, %v895
      %v899 = vsel %vm529, %v895, 0.0
      %v900 = vpack.c.bf16 %v899, %v896
      %s901 = scalar_lea.vmem %s1, 320
      %v902 = vld [vmem:[%s901] sm:$0xf]
      %v903 = vld [vmem:[%s901 + $0x4] sm:$0xf]
      %v904 = vld [vmem:[%s901 + $0x8] sm:$0xf]
      %v905 = vld [vmem:[%s901 + $0xc] sm:$0xf]
      %v906 = vld [vmem:[%s901 + $0x10] sm:$0xf]
      %v907 = vld [vmem:[%s901 + $0x14] sm:$0xf]
      %v908 = vld [vmem:[%s901 + $0x18] sm:$0xf]
      %v909 = vld [vmem:[%s901 + $0x1c] sm:$0xf]
      %v910 = vld [vmem:[%s901 + $0x20] sm:$0xf]
      %v911 = vld [vmem:[%s901 + $0x24] sm:$0xf]
      %v912 = vld [vmem:[%s901 + $0x28] sm:$0xf]
      %v913 = vld [vmem:[%s901 + $0x2c] sm:$0xf]
      %v914 = vld [vmem:[%s901 + $0x30] sm:$0xf]
      %v915 = vld [vmem:[%s901 + $0x34] sm:$0xf]
      %v916 = vld [vmem:[%s901 + $0x38] sm:$0xf]
      %v917 = vld [vmem:[%s901 + $0x3c] sm:$0xf]
      %v934 = vunpack.c.l.b16 %v902
      %v935 = vunpack.c.l.b16 %v903
      %v936 = vunpack.c.l.b16 %v904
      %v937 = vunpack.c.l.b16 %v905
      %v938 = vunpack.c.l.b16 %v906
      %v939 = vunpack.c.l.b16 %v907
      %v940 = vunpack.c.l.b16 %v908
      %v941 = vunpack.c.l.b16 %v909
      %v942 = vunpack.c.l.b16 %v910
      %v943 = vunpack.c.l.b16 %v911
      %v944 = vunpack.c.l.b16 %v912
      %v945 = vunpack.c.l.b16 %v913
      %v946 = vunpack.c.l.b16 %v914
      %v947 = vunpack.c.l.b16 %v915
      %v948 = vunpack.c.l.b16 %v916
      %v949 = vunpack.c.l.b16 %v917
      %v950 = vpack.c.b16 %v935, %v934
      %v951 = vpack.c.b16 %v937, %v936
      %v952 = vpack.c.b16 %v939, %v938
      %v953 = vpack.c.b16 %v941, %v940
      %v954 = vpack.c.b16 %v943, %v942
      %v955 = vpack.c.b16 %v945, %v944
      %v956 = vpack.c.b16 %v947, %v946
      %v957 = vpack.c.b16 %v949, %v948
      %966 = vmatprep.subr.bf16.mxu0 0
      %967 = vmatpush1.bf16.msra.mxu0 %v950
      %968 = vmatprep.subr.bf16.mxu0 0
      %969 = vmatpush1.bf16.msra.mxu0 %v951
      %970 = vmatprep.subr.bf16.mxu0 0
      %971 = vmatpush1.bf16.msra.mxu0 %v952
      %972 = vmatprep.subr.bf16.mxu0 0
      %973 = vmatpush1.bf16.msra.mxu0 %v953
      %974 = vmatprep.subr.bf16.mxu0 0
      %975 = vmatpush1.bf16.msra.mxu0 %v954
      %976 = vmatprep.subr.bf16.mxu0 0
      %977 = vmatpush1.bf16.msra.mxu0 %v955
      %978 = vmatprep.subr.bf16.mxu0 0
      %979 = vmatpush1.bf16.msra.mxu0 %v956
      %980 = vmatprep.subr.bf16.mxu0 0
      %981 = vmatpush1.bf16.msra.mxu0 %v957
      %982 = vmatprep.subr.bf16.mxu0 0
      %983 = vmatpush1.bf16.msra.mxu0 0
      %984 = vmatprep.subr.bf16.mxu0 0
      %985 = vmatpush1.bf16.msra.mxu0 0
      %986 = vmatprep.subr.bf16.mxu0 0
      %987 = vmatpush1.bf16.msra.mxu0 0
      %988 = vmatprep.subr.bf16.mxu0 0
      %989 = vmatpush1.bf16.msra.mxu0 0
      %990 = vmatprep.subr.bf16.mxu0 0
      %991 = vmatpush1.bf16.msra.mxu0 0
      %992 = vmatprep.subr.bf16.mxu0 0
      %993 = vmatpush1.bf16.msra.mxu0 0
      %994 = vmatprep.subr.bf16.mxu0 0
      %995 = vmatpush1.bf16.msra.mxu0 0
      %996 = vmatprep.subr.bf16.mxu0 0
      %997 = vmatpush1.bf16.msra.mxu0 0
      %998 = vmatprep.mubr.bf16.mxu0 0
      %999 = vmatmul.mubr.bf16.gmra.mrb[0].mxu0 %v900
      %v1000 = vpop.f32.mrb[0].mxu0
      %v1001 = vadd.f32 0.0, %v1000
      %v1002 = vpop.f32.mrb[0].mxu0
      %v1003 = vpop.f32.mrb[0].mxu0
      %v1004 = vadd.f32 0.0, %v1003
      %v1005 = vpop.f32.mrb[0].mxu0
      %1006 = vdwg.mxu0
      %v1007 = vadd.f32 %v892, %v1001
      %v1008 = vadd.f32 %v893, %v1004
      %s1009 = sadd.s32 %s22, 1
      %p1010 = scmp.gt.s32.totalorder %s1009, 0
      %s1011 = scalar_select %p1010, %s1009, 0
      %p1012 = scmp.lt.s32.totalorder %s1011, 3
      %s1013 = scalar_select %p1012, %s1011, 3
      %s1014 = smul.u32 %s1013, 16
      %s1015 = scalar_lea.vmem %s250, %s1014
      %v1016 = vld [vmem:[%s1015] sm:$0xff]
      %v1017 = vld [vmem:[%s1015 + $0x8] sm:$0xff]
      %v1018 = vmul.f32 %v1016, %v284
      %v1019 = vmul.f32 %v1017, %v284
      %v1020 = vadd.f32 %v1018, %v292
      %v1021 = vadd.f32 %v1019, %v292
      %v1022 = vmax.f32 %v1020, 0.0
      %v1023 = vmax.f32 %v1021, 0.0
      %p1024 = scmp.ge.s32.totalorder %s1009, 0
      %p1025 = scmp.lt.s32.totalorder %s1009, 4
      %p1026 = pnand %p1024, %p1025
      %p1027 = pneg %p1026
      %s1028 = scalar_select %p1027, 1, 0
      %v1029 = vstv %s1028
      %vm1030 = vcmp.eq.s32.totalorder %v1029, 1
      %v1031 = vsel %vm1030, %v1022, 0.0
      %v1032 = vsel %vm1030, %v1023, 0.0
      %v1035 = vrot.slane %v1031, 7
      %v1036 = vrot.slane %v1032, 7
      %v1037 = vsel %vm309, %v1035, %v1036
      %v1040 = vsel %vm309, 0.0, %v1035
      %v1041 = vpack.c.bf16 %v1037, %v1040
      %s1042 = scalar_lea.vmem %s1, 384
      %v1043 = vld [vmem:[%s1042] sm:$0xf]
      %v1044 = vld [vmem:[%s1042 + $0x4] sm:$0xf]
      %v1045 = vld [vmem:[%s1042 + $0x8] sm:$0xf]
      %v1046 = vld [vmem:[%s1042 + $0xc] sm:$0xf]
      %v1047 = vld [vmem:[%s1042 + $0x10] sm:$0xf]
      %v1048 = vld [vmem:[%s1042 + $0x14] sm:$0xf]
      %v1049 = vld [vmem:[%s1042 + $0x18] sm:$0xf]
      %v1050 = vld [vmem:[%s1042 + $0x1c] sm:$0xf]
      %v1051 = vld [vmem:[%s1042 + $0x20] sm:$0xf]
      %v1052 = vld [vmem:[%s1042 + $0x24] sm:$0xf]
      %v1053 = vld [vmem:[%s1042 + $0x28] sm:$0xf]
      %v1054 = vld [vmem:[%s1042 + $0x2c] sm:$0xf]
      %v1055 = vld [vmem:[%s1042 + $0x30] sm:$0xf]
      %v1056 = vld [vmem:[%s1042 + $0x34] sm:$0xf]
      %v1057 = vld [vmem:[%s1042 + $0x38] sm:$0xf]
      %v1058 = vld [vmem:[%s1042 + $0x3c] sm:$0xf]
      %v1075 = vunpack.c.l.b16 %v1043
      %v1076 = vunpack.c.l.b16 %v1044
      %v1077 = vunpack.c.l.b16 %v1045
      %v1078 = vunpack.c.l.b16 %v1046
      %v1079 = vunpack.c.l.b16 %v1047
      %v1080 = vunpack.c.l.b16 %v1048
      %v1081 = vunpack.c.l.b16 %v1049
      %v1082 = vunpack.c.l.b16 %v1050
      %v1083 = vunpack.c.l.b16 %v1051
      %v1084 = vunpack.c.l.b16 %v1052
      %v1085 = vunpack.c.l.b16 %v1053
      %v1086 = vunpack.c.l.b16 %v1054
      %v1087 = vunpack.c.l.b16 %v1055
      %v1088 = vunpack.c.l.b16 %v1056
      %v1089 = vunpack.c.l.b16 %v1057
      %v1090 = vunpack.c.l.b16 %v1058
      %v1091 = vpack.c.b16 %v1076, %v1075
      %v1092 = vpack.c.b16 %v1078, %v1077
      %v1093 = vpack.c.b16 %v1080, %v1079
      %v1094 = vpack.c.b16 %v1082, %v1081
      %v1095 = vpack.c.b16 %v1084, %v1083
      %v1096 = vpack.c.b16 %v1086, %v1085
      %v1097 = vpack.c.b16 %v1088, %v1087
      %v1098 = vpack.c.b16 %v1090, %v1089
      %1107 = vmatprep.subr.bf16.mxu0 0
      %1108 = vmatpush1.bf16.msra.mxu0 %v1091
      %1109 = vmatprep.subr.bf16.mxu0 0
      %1110 = vmatpush1.bf16.msra.mxu0 %v1092
      %1111 = vmatprep.subr.bf16.mxu0 0
      %1112 = vmatpush1.bf16.msra.mxu0 %v1093
      %1113 = vmatprep.subr.bf16.mxu0 0
      %1114 = vmatpush1.bf16.msra.mxu0 %v1094
      %1115 = vmatprep.subr.bf16.mxu0 0
      %1116 = vmatpush1.bf16.msra.mxu0 %v1095
      %1117 = vmatprep.subr.bf16.mxu0 0
      %1118 = vmatpush1.bf16.msra.mxu0 %v1096
      %1119 = vmatprep.subr.bf16.mxu0 0
      %1120 = vmatpush1.bf16.msra.mxu0 %v1097
      %1121 = vmatprep.subr.bf16.mxu0 0
      %1122 = vmatpush1.bf16.msra.mxu0 %v1098
      %1123 = vmatprep.subr.bf16.mxu0 0
      %1124 = vmatpush1.bf16.msra.mxu0 0
      %1125 = vmatprep.subr.bf16.mxu0 0
      %1126 = vmatpush1.bf16.msra.mxu0 0
      %1127 = vmatprep.subr.bf16.mxu0 0
      %1128 = vmatpush1.bf16.msra.mxu0 0
      %1129 = vmatprep.subr.bf16.mxu0 0
      %1130 = vmatpush1.bf16.msra.mxu0 0
      %1131 = vmatprep.subr.bf16.mxu0 0
      %1132 = vmatpush1.bf16.msra.mxu0 0
      %1133 = vmatprep.subr.bf16.mxu0 0
      %1134 = vmatpush1.bf16.msra.mxu0 0
      %1135 = vmatprep.subr.bf16.mxu0 0
      %1136 = vmatpush1.bf16.msra.mxu0 0
      %1137 = vmatprep.subr.bf16.mxu0 0
      %1138 = vmatpush1.bf16.msra.mxu0 0
      %1139 = vmatprep.mubr.bf16.mxu0 0
      %1140 = vmatmul.mubr.bf16.gmra.mrb[0].mxu0 %v1041
      %v1141 = vpop.f32.mrb[0].mxu0
      %v1142 = vadd.f32 0.0, %v1141
      %v1143 = vpop.f32.mrb[0].mxu0
      %v1144 = vpop.f32.mrb[0].mxu0
      %v1145 = vadd.f32 0.0, %v1144
      %v1146 = vpop.f32.mrb[0].mxu0
      %1147 = vdwg.mxu0
      %v1148 = vadd.f32 %v1007, %v1142
      %v1149 = vadd.f32 %v1008, %v1145
      %v1150 = vpack.c.bf16 %v1032, %v1031
      %s1151 = scalar_lea.vmem %s1, 448
      %v1152 = vld [vmem:[%s1151] sm:$0xf]
      %v1153 = vld [vmem:[%s1151 + $0x4] sm:$0xf]
      %v1154 = vld [vmem:[%s1151 + $0x8] sm:$0xf]
      %v1155 = vld [vmem:[%s1151 + $0xc] sm:$0xf]
      %v1156 = vld [vmem:[%s1151 + $0x10] sm:$0xf]
      %v1157 = vld [vmem:[%s1151 + $0x14] sm:$0xf]
      %v1158 = vld [vmem:[%s1151 + $0x18] sm:$0xf]
      %v1159 = vld [vmem:[%s1151 + $0x1c] sm:$0xf]
      %v1160 = vld [vmem:[%s1151 + $0x20] sm:$0xf]
      %v1161 = vld [vmem:[%s1151 + $0x24] sm:$0xf]
      %v1162 = vld [vmem:[%s1151 + $0x28] sm:$0xf]
      %v1163 = vld [vmem:[%s1151 + $0x2c] sm:$0xf]
      %v1164 = vld [vmem:[%s1151 + $0x30] sm:$0xf]
      %v1165 = vld [vmem:[%s1151 + $0x34] sm:$0xf]
      %v1166 = vld [vmem:[%s1151 + $0x38] sm:$0xf]
      %v1167 = vld [vmem:[%s1151 + $0x3c] sm:$0xf]
      %v1184 = vunpack.c.l.b16 %v1152
      %v1185 = vunpack.c.l.b16 %v1153
      %v1186 = vunpack.c.l.b16 %v1154
      %v1187 = vunpack.c.l.b16 %v1155
      %v1188 = vunpack.c.l.b16 %v1156
      %v1189 = vunpack.c.l.b16 %v1157
      %v1190 = vunpack.c.l.b16 %v1158
      %v1191 = vunpack.c.l.b16 %v1159
      %v1192 = vunpack.c.l.b16 %v1160
      %v1193 = vunpack.c.l.b16 %v1161
      %v1194 = vunpack.c.l.b16 %v1162
      %v1195 = vunpack.c.l.b16 %v1163
      %v1196 = vunpack.c.l.b16 %v1164
      %v1197 = vunpack.c.l.b16 %v1165
      %v1198 = vunpack.c.l.b16 %v1166
      %v1199 = vunpack.c.l.b16 %v1167
      %v1200 = vpack.c.b16 %v1185, %v1184
      %v1201 = vpack.c.b16 %v1187, %v1186
      %v1202 = vpack.c.b16 %v1189, %v1188
      %v1203 = vpack.c.b16 %v1191, %v1190
      %v1204 = vpack.c.b16 %v1193, %v1192
      %v1205 = vpack.c.b16 %v1195, %v1194
      %v1206 = vpack.c.b16 %v1197, %v1196
      %v1207 = vpack.c.b16 %v1199, %v1198
      %1216 = vmatprep.subr.bf16.mxu0 0
      %1217 = vmatpush1.bf16.msra.mxu0 %v1200
      %1218 = vmatprep.subr.bf16.mxu0 0
      %1219 = vmatpush1.bf16.msra.mxu0 %v1201
      %1220 = vmatprep.subr.bf16.mxu0 0
      %1221 = vmatpush1.bf16.msra.mxu0 %v1202
      %1222 = vmatprep.subr.bf16.mxu0 0
      %1223 = vmatpush1.bf16.msra.mxu0 %v1203
      %1224 = vmatprep.subr.bf16.mxu0 0
      %1225 = vmatpush1.bf16.msra.mxu0 %v1204
      %1226 = vmatprep.subr.bf16.mxu0 0
      %1227 = vmatpush1.bf16.msra.mxu0 %v1205
      %1228 = vmatprep.subr.bf16.mxu0 0
      %1229 = vmatpush1.bf16.msra.mxu0 %v1206
      %1230 = vmatprep.subr.bf16.mxu0 0
      %1231 = vmatpush1.bf16.msra.mxu0 %v1207
      %1232 = vmatprep.subr.bf16.mxu0 0
      %1233 = vmatpush1.bf16.msra.mxu0 0
      %1234 = vmatprep.subr.bf16.mxu0 0
      %1235 = vmatpush1.bf16.msra.mxu0 0
      %1236 = vmatprep.subr.bf16.mxu0 0
      %1237 = vmatpush1.bf16.msra.mxu0 0
      %1238 = vmatprep.subr.bf16.mxu0 0
      %1239 = vmatpush1.bf16.msra.mxu0 0
      %1240 = vmatprep.subr.bf16.mxu0 0
      %1241 = vmatpush1.bf16.msra.mxu0 0
      %1242 = vmatprep.subr.bf16.mxu0 0
      %1243 = vmatpush1.bf16.msra.mxu0 0
      %1244 = vmatprep.subr.bf16.mxu0 0
      %1245 = vmatpush1.bf16.msra.mxu0 0
      %1246 = vmatprep.subr.bf16.mxu0 0
      %1247 = vmatpush1.bf16.msra.mxu0 0
      %1248 = vmatprep.mubr.bf16.mxu0 0
      %1249 = vmatmul.mubr.bf16.gmra.mrb[0].mxu0 %v1150
      %v1250 = vpop.f32.mrb[0].mxu0
      %v1251 = vadd.f32 0.0, %v1250
      %v1252 = vpop.f32.mrb[0].mxu0
      %v1253 = vpop.f32.mrb[0].mxu0
      %v1254 = vadd.f32 0.0, %v1253
      %v1255 = vpop.f32.mrb[0].mxu0
      %1256 = vdwg.mxu0
      %v1257 = vadd.f32 %v1148, %v1251
      %v1258 = vadd.f32 %v1149, %v1254
      %v1259 = vrot.slane %v1031, 1
      %v1260 = vrot.slane %v1032, 1
      %v1261 = vsel %vm529, %v1259, %v1260
      %v1264 = vsel %vm529, %v1260, 0.0
      %v1265 = vpack.c.bf16 %v1264, %v1261
      %s1266 = scalar_lea.vmem %s1, 512
      %v1267 = vld [vmem:[%s1266] sm:$0xf]
      %v1268 = vld [vmem:[%s1266 + $0x4] sm:$0xf]
      %v1269 = vld [vmem:[%s1266 + $0x8] sm:$0xf]
      %v1270 = vld [vmem:[%s1266 + $0xc] sm:$0xf]
      %v1271 = vld [vmem:[%s1266 + $0x10] sm:$0xf]
      %v1272 = vld [vmem:[%s1266 + $0x14] sm:$0xf]
      %v1273 = vld [vmem:[%s1266 + $0x18] sm:$0xf]
      %v1274 = vld [vmem:[%s1266 + $0x1c] sm:$0xf]
      %v1275 = vld [vmem:[%s1266 + $0x20] sm:$0xf]
      %v1276 = vld [vmem:[%s1266 + $0x24] sm:$0xf]
      %v1277 = vld [vmem:[%s1266 + $0x28] sm:$0xf]
      %v1278 = vld [vmem:[%s1266 + $0x2c] sm:$0xf]
      %v1279 = vld [vmem:[%s1266 + $0x30] sm:$0xf]
      %v1280 = vld [vmem:[%s1266 + $0x34] sm:$0xf]
      %v1281 = vld [vmem:[%s1266 + $0x38] sm:$0xf]
      %v1282 = vld [vmem:[%s1266 + $0x3c] sm:$0xf]
      %v1299 = vunpack.c.l.b16 %v1267
      %v1300 = vunpack.c.l.b16 %v1268
      %v1301 = vunpack.c.l.b16 %v1269
      %v1302 = vunpack.c.l.b16 %v1270
      %v1303 = vunpack.c.l.b16 %v1271
      %v1304 = vunpack.c.l.b16 %v1272
      %v1305 = vunpack.c.l.b16 %v1273
      %v1306 = vunpack.c.l.b16 %v1274
      %v1307 = vunpack.c.l.b16 %v1275
      %v1308 = vunpack.c.l.b16 %v1276
      %v1309 = vunpack.c.l.b16 %v1277
      %v1310 = vunpack.c.l.b16 %v1278
      %v1311 = vunpack.c.l.b16 %v1279
      %v1312 = vunpack.c.l.b16 %v1280
      %v1313 = vunpack.c.l.b16 %v1281
      %v1314 = vunpack.c.l.b16 %v1282
      %v1315 = vpack.c.b16 %v1300, %v1299
      %v1316 = vpack.c.b16 %v1302, %v1301
      %v1317 = vpack.c.b16 %v1304, %v1303
      %v1318 = vpack.c.b16 %v1306, %v1305
      %v1319 = vpack.c.b16 %v1308, %v1307
      %v1320 = vpack.c.b16 %v1310, %v1309
      %v1321 = vpack.c.b16 %v1312, %v1311
      %v1322 = vpack.c.b16 %v1314, %v1313
      %1331 = vmatprep.subr.bf16.mxu0 0
      %1332 = vmatpush1.bf16.msra.mxu0 %v1315
      %1333 = vmatprep.subr.bf16.mxu0 0
      %1334 = vmatpush1.bf16.msra.mxu0 %v1316
      %1335 = vmatprep.subr.bf16.mxu0 0
      %1336 = vmatpush1.bf16.msra.mxu0 %v1317
      %1337 = vmatprep.subr.bf16.mxu0 0
      %1338 = vmatpush1.bf16.msra.mxu0 %v1318
      %1339 = vmatprep.subr.bf16.mxu0 0
      %1340 = vmatpush1.bf16.msra.mxu0 %v1319
      %1341 = vmatprep.subr.bf16.mxu0 0
      %1342 = vmatpush1.bf16.msra.mxu0 %v1320
      %1343 = vmatprep.subr.bf16.mxu0 0
      %1344 = vmatpush1.bf16.msra.mxu0 %v1321
      %1345 = vmatprep.subr.bf16.mxu0 0
      %1346 = vmatpush1.bf16.msra.mxu0 %v1322
      %1347 = vmatprep.subr.bf16.mxu0 0
      %1348 = vmatpush1.bf16.msra.mxu0 0
      %1349 = vmatprep.subr.bf16.mxu0 0
      %1350 = vmatpush1.bf16.msra.mxu0 0
      %1351 = vmatprep.subr.bf16.mxu0 0
      %1352 = vmatpush1.bf16.msra.mxu0 0
      %1353 = vmatprep.subr.bf16.mxu0 0
      %1354 = vmatpush1.bf16.msra.mxu0 0
      %1355 = vmatprep.subr.bf16.mxu0 0
      %1356 = vmatpush1.bf16.msra.mxu0 0
      %1357 = vmatprep.subr.bf16.mxu0 0
      %1358 = vmatpush1.bf16.msra.mxu0 0
      %1359 = vmatprep.subr.bf16.mxu0 0
      %1360 = vmatpush1.bf16.msra.mxu0 0
      %1361 = vmatprep.subr.bf16.mxu0 0
      %1362 = vmatpush1.bf16.msra.mxu0 0
      %1363 = vmatprep.mubr.bf16.mxu0 0
      %1364 = vmatmul.mubr.bf16.gmra.mrb[0].mxu0 %v1265
      %v1365 = vpop.f32.mrb[0].mxu0
      %v1366 = vadd.f32 0.0, %v1365
      %v1367 = vpop.f32.mrb[0].mxu0
      %v1368 = vpop.f32.mrb[0].mxu0
      %v1369 = vadd.f32 0.0, %v1368
      %v1370 = vpop.f32.mrb[0].mxu0
      %1371 = vdwg.mxu0
      %v1372 = vadd.f32 %v1257, %v1366
      %v1373 = vadd.f32 %v1258, %v1369
      %1374 = vst [vmem:[%s259] sm:$0xff] %v1372
      %1375 = vst [vmem:[%s259 + $0x8] sm:$0xff] %v1373
      %v1376 = vadd.f32 %v1372, %v1373
      %v1377 = vrot.slane %v1376, 4
      %v1378 = vadd.f32 %v1376, %v1377
      %v1379 = vrot.slane %v1378, 2
      %v1380 = vadd.f32 %v1378, %v1379
      %v1381 = vrot.slane %v1380, 1
      %v1382 = vadd.f32 %v1380, %v1381
      %v1383 = vmul.f32 %v1372, %v1372
      %v1384 = vmul.f32 %v1373, %v1373
      %v1385 = vadd.f32 %v1383, %v1384
      %v1386 = vrot.slane %v1385, 4
      %v1387 = vadd.f32 %v1385, %v1386
      %v1388 = vrot.slane %v1387, 2
      %v1389 = vadd.f32 %v1387, %v1388
      %v1390 = vrot.slane %v1389, 1
      %v1391 = vadd.f32 %v1389, %v1390
      %v1392 = vsel %vm309, %v1382, %v1391
      %vm1393 = vcmask 1041408
      %v1394 = vsel %vm1393, %v1392, 0.0
      %1395 = vst [vmem:[%s267] sm:$0xff] %v1394
      %p1396 = scmp.lt.s32.totalorder %s21, 1
      %s1397 = scalar_select %p1396, %s21, 1
      %p1398 = scmp.lt.s32.totalorder %s22, 3
      %s1399 = scalar_select %p1398, %s22, 3
      %s1400 = smul.addr %s1399, 2
      %s1401 = smul.addr %s1397, 8
      %s1402 = sadd.s32 %s1400, %s1401
      %s1403 = smul.addr %s1402, 8
      %s1404 = scalar_lea.vmem %s4, %s1403
      %p1405 = scmp.lt.s32.totalorder %s21, 1
      %s1406 = scalar_select %p1405, %s21, 1
      %p1407 = scmp.lt.s32.totalorder %s22, 3
      %s1408 = scalar_select %p1407, %s22, 3
      %s1409 = smul.addr %s1406, 4
      %s1410 = sadd.s32 %s1408, %s1409
      %s1411 = smul.addr %s1410, 8
      %s1412 = scalar_lea.vmem %s5, %s1411
      // Predicated region
      $region37: #{decoder_block_forward.4} parent=35 // pred_check
        %p1413 = pneg %p138
      $region38: #{decoder_block_forward.4} parent=35 // pred_check_branch
        %1415 = sbr.rel (%p1413) target = $region40
      $region39: #{decoder_block_forward.4} parent=35 // pred_region
        _
      $region40: #{decoder_block_forward.4} parent=35 // pred_fallthru
        _
      // Predicated region
      $region41: #{decoder_block_forward.4} parent=35 // pred_check
        %p1416 = pneg %p166
      $region42: #{decoder_block_forward.4} parent=35 // pred_check_branch
        %1418 = sbr.rel (%p1416) target = $region44
      $region43: #{decoder_block_forward.4} parent=35 // pred_region
        _
      $region44: #{decoder_block_forward.4} parent=35 // pred_fallthru
        _
    $region36: #{decoder_block_forward.4} parent=5 // pred_fallthru
      _
    %p1419 = scmp.le.s32.totalorder 2, %s12
    // Predicated region
    $region45: #{decoder_block_forward.4} parent=5 // pred_check
      %p1420 = pneg %p1419
    $region46: #{decoder_block_forward.4} parent=5 // pred_check_branch
      %1422 = sbr.rel (%p1420) target = $region48
    $region47: #{decoder_block_forward.4} parent=5 // pred_region
      %s1423 = ssub.s32 %s12, 2
      // Predicated region
      $region49: #{decoder_block_forward.4} parent=47 // pred_check
        %p1424 = pneg %p144
      $region50: #{decoder_block_forward.4} parent=47 // pred_check_branch
        %1426 = sbr.rel (%p1424) target = $region52
      $region51: #{decoder_block_forward.4} parent=47 // pred_region
        %p1427 = scmp.lt.s32.totalorder %s23, 1
        %s1428 = scalar_select %p1427, %s23, 1
        %p1429 = scmp.lt.s32.totalorder %s24, 3
        %s1430 = scalar_select %p1429, %s24, 3
        %s1431 = smul.addr %s1430, 2
        %s1432 = smul.addr %s1428, 8
        %s1433 = sadd.s32 %s1431, %s1432
        %s1434 = smul.addr %s1433, 8
        %s1435 = scalar_lea.vmem %s4, %s1434
      $region52: #{decoder_block_forward.4} parent=47 // pred_fallthru
        _
      // Predicated region
      $region53: #{decoder_block_forward.4} parent=47 // pred_check
        %p1436 = pneg %p172
      $region54: #{decoder_block_forward.4} parent=47 // pred_check_branch
        %1438 = sbr.rel (%p1436) target = $region56
      $region55: #{decoder_block_forward.4} parent=47 // pred_region
        %p1439 = scmp.lt.s32.totalorder %s23, 1
        %s1440 = scalar_select %p1439, %s23, 1
        %p1441 = scmp.lt.s32.totalorder %s24, 3
        %s1442 = scalar_select %p1441, %s24, 3
        %s1443 = smul.addr %s1440, 4
        %s1444 = sadd.s32 %s1442, %s1443
        %s1445 = smul.addr %s1444, 8
        %s1446 = scalar_lea.vmem %s5, %s1445
      $region56: #{decoder_block_forward.4} parent=47 // pred_fallthru
        _
    $region48: #{decoder_block_forward.4} parent=5 // pred_fallthru
      _
  $region6: #{decoder_block_forward.4} parent=0 // loop_footer
    %s16 = sadd.s32 1, %s12
  $region7: #{decoder_block_forward.4} parent=0 // loop_footer_branch
    %11 = sbr.rel target = $region3
  $region8: #{decoder_block_forward.4} parent=0 // loop_exit
    _

// kernel: decoder_block_forward.5
$region0: #{decoder_block_forward.5}
  #allocation0 [shape = 'u32[]', space=smem, size = 0x4, offset = 0x4, fixed_abs, tag = 'smem constant byte address 0x4 - core index']
  #allocation1 [shape = 'u32[144,128]{1,0:T(1,128)}', space=vmem, size = 0x12000, scoped, tag = 'internal scratch']
  %s0 = inlined_call_operand.vmem [shape: f32[2,64,128], index: 0, kind: input, shape index: {}]
  %s1 = inlined_call_operand.vmem [shape: f32[1,128], index: 1, kind: input, shape index: {}]
  %s2 = inlined_call_operand.vmem [shape: f32[1,128], index: 2, kind: input, shape index: {}]
  %s3 = inlined_call_operand.vmem [shape: f32[2,64,128], index: 3, kind: output, shape index: {}]
  %s4 = sld [smem:[#allocation0]]
  $region45: #{decoder_block_forward.5} parent=0
    _
  %s6 = ssub.s32 1, %s4
  %s7 = scalar_select 0, %s6, %s4
  loop: start=0, step=1, limit=4
  $region2: #{decoder_block_forward.5} parent=0 // loop_pre_header
    _
  $region3: #{decoder_block_forward.5} parent=0 // loop_header
    %s9 = sphi 0, %s13
    %p10 = scmp.ge.s32.totalorder %s9, 4
    %s19 = sphi 0, %s21
    %s22 = sphi 0, %s19
    %s23 = sphi 0, %s22
    %s39 = sphi 0, %s23
    %s43 = sphi 0, %s43
    %s45 = sphi 0, %s43
    %s46 = sphi 0, %s45
    %s60 = sphi 0, %s46
    %s64 = sphi 0, %s64
    %s66 = sphi 0, %s64
    %s67 = sphi 0, %s66
    %s81 = sphi 0, %s67
    %s87 = sphi 0, %s89
    %s90 = sphi 0, %s87
    %s91 = sphi 0, %s90
    %s107 = sphi 0, %s91
  $region4: #{decoder_block_forward.5} parent=0 // loop_header_branch
    %12 = sbr.rel (%p10) target = $region8
  $region5: #{decoder_block_forward.5} parent=0 // loop_body
    %s14 = ssub.s32 %s9, 1
    %s15 = ssub.s32 %s9, 2
    %s16 = sadd.s32 %s9, 1
    %s17 = ssub.s32 %s9, %s16
    %p18 = scmp.eq.s32.totalorder %s17, 0
    %s20 = sadd.s32 %s19, 1
    %s21 = scalar_select %p18, %s19, %s20
    %p24 = pneg %p18
    %p25 = scmp.eq.s32.totalorder %s9, 1
    %p26 = por %p24, %p25
    %p27 = scmp.ne.s32.totalorder %s19, %s22
    %p28 = scmp.eq.s32.totalorder %s9, 0
    %p29 = por %p27, %p28
    %p30 = scmp.ne.s32.totalorder %s19, %s22
    %p31 = scmp.eq.s32.totalorder %s14, 1
    %p32 = por %p30, %p31
    %p33 = scmp.ne.s32.totalorder %s22, %s23
    %p34 = scmp.eq.s32.totalorder %s14, 0
    %p35 = por %p33, %p34
    %p36 = scmp.ne.s32.totalorder %s22, %s23
    %p37 = scmp.eq.s32.totalorder %s15, 1
    %p38 = por %p36, %p37
    %p40 = scmp.ne.s32.totalorder %s23, %s39
    %p41 = scmp.eq.s32.totalorder %s15, 0
    %p42 = por %p40, %p41
    %s44 = sadd.s32 %s43, 1
    %p47 = scmp.eq.s32.totalorder %s9, 1
    %p48 = scmp.ne.s32.totalorder %s43, %s45
    %p49 = scmp.eq.s32.totalorder %s9, 0
    %p50 = por %p48, %p49
    %p51 = scmp.ne.s32.totalorder %s43, %s45
    %p52 = scmp.eq.s32.totalorder %s14, 1
    %p53 = por %p51, %p52
    %p54 = scmp.ne.s32.totalorder %s45, %s46
    %p55 = scmp.eq.s32.totalorder %s14, 0
    %p56 = por %p54, %p55
    %p57 = scmp.ne.s32.totalorder %s45, %s46
    %p58 = scmp.eq.s32.totalorder %s15, 1
    %p59 = por %p57, %p58
    %p61 = scmp.ne.s32.totalorder %s46, %s60
    %p62 = scmp.eq.s32.totalorder %s15, 0
    %p63 = por %p61, %p62
    %s65 = sadd.s32 %s64, 1
    %p68 = scmp.eq.s32.totalorder %s9, 1
    %p69 = scmp.ne.s32.totalorder %s64, %s66
    %p70 = scmp.eq.s32.totalorder %s9, 0
    %p71 = por %p69, %p70
    %p72 = scmp.ne.s32.totalorder %s64, %s66
    %p73 = scmp.eq.s32.totalorder %s14, 1
    %p74 = por %p72, %p73
    %p75 = scmp.ne.s32.totalorder %s66, %s67
    %p76 = scmp.eq.s32.totalorder %s14, 0
    %p77 = por %p75, %p76
    %p78 = scmp.ne.s32.totalorder %s66, %s67
    %p79 = scmp.eq.s32.totalorder %s15, 1
    %p80 = por %p78, %p79
    %p82 = scmp.ne.s32.totalorder %s67, %s81
    %p83 = scmp.eq.s32.totalorder %s15, 0
    %p84 = por %p82, %p83
    %s85 = ssub.s32 %s9, %s16
    %p86 = scmp.eq.s32.totalorder %s85, 0
    %s88 = sadd.s32 %s87, 1
    %s89 = scalar_select %p86, %s87, %s88
    %p92 = pneg %p86
    %p93 = scmp.eq.s32.totalorder %s9, 1
    %p94 = por %p92, %p93
    %p95 = scmp.ne.s32.totalorder %s87, %s90
    %p96 = scmp.eq.s32.totalorder %s9, 0
    %p97 = por %p95, %p96
    %p98 = scmp.ne.s32.totalorder %s87, %s90
    %p99 = scmp.eq.s32.totalorder %s14, 1
    %p100 = por %p98, %p99
    %p101 = scmp.ne.s32.totalorder %s90, %s91
    %p102 = scmp.eq.s32.totalorder %s14, 0
    %p103 = por %p101, %p102
    %p104 = scmp.ne.s32.totalorder %s90, %s91
    %p105 = scmp.eq.s32.totalorder %s15, 1
    %p106 = por %p104, %p105
    %p108 = scmp.ne.s32.totalorder %s91, %s107
    %p109 = scmp.eq.s32.totalorder %s15, 0
    %p110 = por %p108, %p109
    %p111 = scmp.le.s32.totalorder 1, %s9
    %p112 = scmp.lt.s32.totalorder %s9, 3
    %p113 = pnand %p111, %p112
    %p114 = pneg %p113
    // Predicated region
    $region9: #{decoder_block_forward.5} parent=5 // pred_check
      _
    $region10: #{decoder_block_forward.5} parent=5 // pred_check_branch
      %116 = sbr.rel (%p113) target = $region12
    $region11: #{decoder_block_forward.5} parent=5 // pred_region
      %s117 = ssub.s32 %s9, 1
      // Predicated region
      $region13: #{decoder_block_forward.5} parent=11 // pred_check
        %p118 = pneg %p56
      $region14: #{decoder_block_forward.5} parent=11 // pred_check_branch
        %120 = sbr.rel (%p118) target = $region16
      $region15: #{decoder_block_forward.5} parent=11 // pred_region
        _
      $region16: #{decoder_block_forward.5} parent=11 // pred_fallthru
        _
      // Predicated region
      $region17: #{decoder_block_forward.5} parent=11 // pred_check
        %p121 = pneg %p77
      $region18: #{decoder_block_forward.5} parent=11 // pred_check_branch
        %123 = sbr.rel (%p121) target = $region20
      $region19: #{decoder_block_forward.5} parent=11 // pred_region
        _
      $region20: #{decoder_block_forward.5} parent=11 // pred_fallthru
        _
    $region12: #{decoder_block_forward.5} parent=5 // pred_fallthru
      _
    %p124 = scmp.lt.s32.totalorder %s9, 2
    // Predicated region
    $region21: #{decoder_block_forward.5} parent=5 // pred_check
      %p125 = pneg %p124
    $region22: #{decoder_block_forward.5} parent=5 // pred_check_branch
      %127 = sbr.rel (%p125) target = $region24
    $region23: #{decoder_block_forward.5} parent=5 // pred_region
      // Predicated region
      $region25: #{decoder_block_forward.5} parent=23 // pred_check
        %p128 = pneg %p29
      $region26: #{decoder_block_forward.5} parent=23 // pred_check_branch
        %130 = sbr.rel (%p128) target = $region28
      $region27: #{decoder_block_forward.5} parent=23 // pred_region
        %p131 = scmp.lt.s32.totalorder %s9, 1
        %s132 = scalar_select %p131, %s9, 1
        %s133 = smul.addr %s132, 8
        %s134 = smul.addr %s133, 8
        %s135 = scalar_lea.vmem %s0, %s134
      $region28: #{decoder_block_forward.5} parent=23 // pred_fallthru
        _
    $region24: #{decoder_block_forward.5} parent=5 // pred_fallthru
      _
    %p136 = scmp.le.s32.totalorder 1, %s9
    %p137 = scmp.lt.s32.totalorder %s9, 3
    %p138 = pnand %p136, %p137
    %p139 = pneg %p138
    // Predicated region
    $region29: #{decoder_block_forward.5} parent=5 // pred_check
      _
    $region30: #{decoder_block_forward.5} parent=5 // pred_check_branch
      %141 = sbr.rel (%p138) target = $region32
    $region31: #{decoder_block_forward.5} parent=5 // pred_region
      %s142 = ssub.s32 %s9, 1
      %p143 = scmp.lt.s32.totalorder %s14, 1
      %s144 = scalar_select %p143, %s14, 1
      %s145 = smul.addr %s144, 8
      %s146 = smul.addr %s145, 8
      %s147 = scalar_lea.vmem %s0, %s146
      %p148 = pneg %p35
      %p149 = pneg %p32
      %p150 = pneg %p56
      %p151 = pneg %p53
      %p152 = pneg %p77
      %p153 = pneg %p74
      %p154 = pneg %p103
      %p155 = pneg %p100
      %p156 = scmp.lt.s32.totalorder %s14, 1
      %s157 = scalar_select %p156, %s14, 1
      %s158 = smul.addr %s157, 8
      %s159 = smul.addr %s158, 8
      %s160 = scalar_lea.vmem %s3, %s159
      %p161 = scmp.lt.s32.totalorder %s14, 1
      %s162 = scalar_select %p161, %s14, 1
      %s163 = smul.addr %s162, 8
      %s164 = smul.addr %s163, 8
      %s165 = scalar_lea.vmem %s0, %s164
      %p166 = scmp.lt.s32.totalorder %s14, 1
      %s167 = scalar_select %p166, %s14, 1
      %s168 = smul.addr %s167, 8
      %s169 = smul.addr %s168, 8
      %s170 = scalar_lea.vmem %s3, %s169
      %v171 = vld [vmem:[%s1] sm:$0x1]
      %v172 = vld [vmem:[%s2] sm:$0x1]
      %v173 = vld [vmem:[%s165] sm:$0xff]
      %v174 = vld [vmem:[%s165 + $0x8] sm:$0xff]
      %v175 = vld [vmem:[%s165 + $0x10] sm:$0xff]
      %v176 = vld [vmem:[%s165 + $0x18] sm:$0xff]
      %v177 = vld [vmem:[%s165 + $0x20] sm:$0xff]
      %v178 = vld [vmem:[%s165 + $0x28] sm:$0xff]
      %v179 = vld [vmem:[%s165 + $0x30] sm:$0xff]
      %v180 = vld [vmem:[%s165 + $0x38] sm:$0xff]
      %v182 = vlaneseq
      %v183 = vshrl.u32 %v182, 7
      %v184 = vsub.s32 0, %v183
      %v185 = vrot.slane %v171, %v184
      %v187 = vmul.f32 %v173, %v185
      %v188 = vmul.f32 %v174, %v185
      %v189 = vmul.f32 %v175, %v185
      %v190 = vmul.f32 %v176, %v185
      %v191 = vmul.f32 %v177, %v185
      %v192 = vmul.f32 %v178, %v185
      %v193 = vmul.f32 %v179, %v185
      %v194 = vmul.f32 %v180, %v185
      %v196 = vlaneseq
      %v197 = vshrl.u32 %v196, 7
      %v198 = vsub.s32 0, %v197
      %v199 = vrot.slane %v172, %v198
      %v201 = vadd.f32 %v187, %v199
      %v202 = vadd.f32 %v188, %v199
      %v203 = vadd.f32 %v189, %v199
      %v204 = vadd.f32 %v190, %v199
      %v205 = vadd.f32 %v191, %v199
      %v206 = vadd.f32 %v192, %v199
      %v207 = vadd.f32 %v193, %v199
      %v208 = vadd.f32 %v194, %v199
      %v209 = vmax.f32 %v201, 0.0
      %v210 = vmax.f32 %v202, 0.0
      %v211 = vmax.f32 %v203, 0.0
      %v212 = vmax.f32 %v204, 0.0
      %v213 = vmax.f32 %v205, 0.0
      %v214 = vmax.f32 %v206, 0.0
      %v215 = vmax.f32 %v207, 0.0
      %v216 = vmax.f32 %v208, 0.0
      %217 = vst [vmem:[%s170] sm:$0xff] %v209
      %218 = vst [vmem:[%s170 + $0x8] sm:$0xff] %v210
      %219 = vst [vmem:[%s170 + $0x10] sm:$0xff] %v211
      %220 = vst [vmem:[%s170 + $0x18] sm:$0xff] %v212
      %221 = vst [vmem:[%s170 + $0x20] sm:$0xff] %v213
      %222 = vst [vmem:[%s170 + $0x28] sm:$0xff] %v214
      %223 = vst [vmem:[%s170 + $0x30] sm:$0xff] %v215
      %224 = vst [vmem:[%s170 + $0x38] sm:$0xff] %v216
      %p225 = scmp.lt.s32.totalorder %s14, 1
      %s226 = scalar_select %p225, %s14, 1
      %s227 = smul.addr %s226, 8
      %s228 = smul.addr %s227, 8
      %s229 = scalar_lea.vmem %s3, %s228
      // Predicated region
      $region33: #{decoder_block_forward.5} parent=31 // pred_check
        %p230 = pneg %p100
      $region34: #{decoder_block_forward.5} parent=31 // pred_check_branch
        %232 = sbr.rel (%p230) target = $region36
      $region35: #{decoder_block_forward.5} parent=31 // pred_region
        _
      $region36: #{decoder_block_forward.5} parent=31 // pred_fallthru
        _
    $region32: #{decoder_block_forward.5} parent=5 // pred_fallthru
      _
    %p233 = scmp.le.s32.totalorder 2, %s9
    // Predicated region
    $region37: #{decoder_block_forward.5} parent=5 // pred_check
      %p234 = pneg %p233
    $region38: #{decoder_block_forward.5} parent=5 // pred_check_branch
      %236 = sbr.rel (%p234) target = $region40
    $region39: #{decoder_block_forward.5} parent=5 // pred_region
      %s237 = ssub.s32 %s9, 2
      // Predicated region
      $region41: #{decoder_block_forward.5} parent=39 // pred_check
        %p238 = pneg %p106
      $region42: #{decoder_block_forward.5} parent=39 // pred_check_branch
        %240 = sbr.rel (%p238) target = $region44
      $region43: #{decoder_block_forward.5} parent=39 // pred_region
        %p241 = scmp.lt.s32.totalorder %s15, 1
        %s242 = scalar_select %p241, %s15, 1
        %s243 = smul.addr %s242, 8
        %s244 = smul.addr %s243, 8
        %s245 = scalar_lea.vmem %s3, %s244
      $region44: #{decoder_block_forward.5} parent=39 // pred_fallthru
        _
    $region40: #{decoder_block_forward.5} parent=5 // pred_fallthru
      _
  $region6: #{decoder_block_forward.5} parent=0 // loop_footer
    %s13 = sadd.s32 1, %s9
  $region7: #{decoder_block_forward.5} parent=0 // loop_footer_branch
    %8 = sbr.rel target = $region3
  $region8: #{decoder_block_forward.5} parent=0 // loop_exit
    _

</llo_original>
